<compile_context>
chip_gen: v7x
topology: tpu7x:2x2x1
jax: 0.10.0
libtpu: 0.0.40
codegen_flags: <defaults>
</compile_context>

<pallas_src>
import jax
import jax.numpy as jnp
from jax import lax
from jax.experimental import pallas as pl
from jax.experimental.pallas import tpu as pltpu

LANE = 128


def _round_up(x, m):
    return (x + m - 1) // m * m


# ----------------------------- Pallas kernel ------------------------------ #

def _fused_double_conv_kernel(x_ref, w1_ref, s1_ref, b1_ref,
                              w2_ref, s2_ref, b2_ref, o_ref, mid_ref):
    # x_ref:   (1, H+2, W+2, Cin_p)   bf16 zero-padded input (one batch item)
    # w1_ref:  (9*Cin_p, Cmid_p)      bf16 im2col-ordered conv1 weight
    # s1/b1:   (1, Cmid_p)            f32 folded BN1 scale / bias
    # w2_ref:  (9*Cmid_p, Cout_p)     bf16 im2col-ordered conv2 weight
    # s2/b2:   (1, Cout_p)            f32 folded BN2 scale / bias
    # o_ref:   (1, H, W, Cout_p)      f32 output
    # mid_ref: (H+2, W+2, Cmid_p)     bf16 VMEM scratch (padded intermediate)
    H = o_ref.shape[1]
    W = o_ref.shape[2]
    Cmid = mid_ref.shape[2]
    Cout = o_ref.shape[3]

    def im2col(xpad, c):
        # xpad: (H+2, W+2, c) -> (H*W, 9*c); column order (dy, dx, channel)
        cols = []
        for dy in range(3):
            for dx in range(3):
                cols.append(xpad[dy:dy + H, dx:dx + W, :].reshape(H * W, c))
        return jnp.concatenate(cols, axis=-1)

    # ---- layer 1: conv3x3 -> BN -> ReLU (single MXU matmul) ----
    x = x_ref[0]                                             # (H+2, W+2, Cin_p)
    p1 = im2col(x, x.shape[-1])                              # (H*W, 9*Cin_p)
    a1 = jnp.dot(p1, w1_ref[...], preferred_element_type=jnp.float32)
    y1 = jnp.maximum(a1 * s1_ref[...] + b1_ref[...], 0.0)    # (H*W, Cmid_p) f32

    # zero-padded intermediate kept in VMEM (border = conv2's padding=1)
    mid_ref[...] = jnp.zeros_like(mid_ref)
    mid_ref[1:H + 1, 1:W + 1, :] = y1.reshape(H, W, Cmid).astype(mid_ref.dtype)

    # ---- layer 2: conv3x3 -> BN -> ReLU (single MXU matmul) ----
    p2 = im2col(mid_ref[...], Cmid)                          # (H*W, 9*Cmid_p)
    a2 = jnp.dot(p2, w2_ref[...], preferred_element_type=jnp.float32)
    y2 = jnp.maximum(a2 * s2_ref[...] + b2_ref[...], 0.0)
    o_ref[...] = y2.reshape(1, H, W, Cout).astype(o_ref.dtype)


# ------------------------------ wrapper ------------------------------------ #

def _prep_conv_weight(w, cin_p, cout_p):
    """(Cout, Cin, 3, 3) torch layout -> (9*cin_p, cout_p) bf16, im2col order."""
    cout, cin = w.shape[0], w.shape[1]
    w = jnp.transpose(w, (2, 3, 1, 0))                       # (3, 3, Cin, Cout)
    w = jnp.pad(w, ((0, 0), (0, 0), (0, cin_p - cin), (0, cout_p - cout)))
    return w.reshape(9 * cin_p, cout_p).astype(jnp.bfloat16)


def _pad_vec(v, c_p):
    return jnp.pad(v, (0, c_p - v.shape[0])).reshape(1, c_p).astype(jnp.float32)


def _fold_bn(gamma, beta, mean, var, eps=1e-5):
    scale = gamma / jnp.sqrt(var + eps)
    bias = beta - mean * scale
    return scale, bias


def fused_double_conv3x3_bn_relu(x_nhwc, w1, s1, b1, w2, s2, b2):
    """Fused [conv3x3(no bias)+BN(eval)+ReLU] x2 on NHWC input."""
    N, H, W, Cin = x_nhwc.shape
    Cmid, Cout = w1.shape[0], w2.shape[0]
    cin_p = _round_up(Cin, LANE)
    cmid_p = _round_up(Cmid, LANE)
    cout_p = _round_up(Cout, LANE)

    # spatial pad=1 + lane-dense channel pad, cast to bf16 at the boundary
    xp = jnp.pad(x_nhwc, ((0, 0), (1, 1), (1, 1), (0, cin_p - Cin)))
    xp = xp.astype(jnp.bfloat16)

    w1p = _prep_conv_weight(w1, cin_p, cmid_p)
    w2p = _prep_conv_weight(w2, cmid_p, cout_p)
    s1p, b1p = _pad_vec(s1, cmid_p), _pad_vec(b1, cmid_p)
    s2p, b2p = _pad_vec(s2, cout_p), _pad_vec(b2, cout_p)

    flops = 2 * N * H * W * 9 * (cin_p * cmid_p + cmid_p * cout_p)
    bytes_accessed = (xp.size * 2 + w1p.size * 2 + w2p.size * 2
                      + (s1p.size + b1p.size + s2p.size + b2p.size) * 4
                      + N * H * W * cout_p * 4)

    out = pl.pallas_call(
        _fused_double_conv_kernel,
        out_shape=jax.ShapeDtypeStruct((N, H, W, cout_p), jnp.float32),
        grid=(N,),
        in_specs=[
            pl.BlockSpec((1, H + 2, W + 2, cin_p), lambda n: (n, 0, 0, 0)),
            pl.BlockSpec((9 * cin_p, cmid_p), lambda n: (0, 0)),
            pl.BlockSpec((1, cmid_p), lambda n: (0, 0)),
            pl.BlockSpec((1, cmid_p), lambda n: (0, 0)),
            pl.BlockSpec((9 * cmid_p, cout_p), lambda n: (0, 0)),
            pl.BlockSpec((1, cout_p), lambda n: (0, 0)),
            pl.BlockSpec((1, cout_p), lambda n: (0, 0)),
        ],
        out_specs=pl.BlockSpec((1, H, W, cout_p), lambda n: (n, 0, 0, 0)),
        scratch_shapes=[pltpu.VMEM((H + 2, W + 2, cmid_p), jnp.bfloat16)],
        compiler_params=pltpu.CompilerParams(
            dimension_semantics=("parallel",),
            vmem_limit_bytes=48 * 1024 * 1024),
        cost_estimate=pl.CostEstimate(flops=flops, transcendentals=0,
                                      bytes_accessed=bytes_accessed),
    )(xp, w1p, s1p, b1p, w2p, s2p, b2p)

    return out[..., :Cout]                                   # drop channel pad


# ------------------------------- JAX glue ---------------------------------- #

def _interp_matrix(out_size, in_size):
    """Row-interpolation matrix for bilinear resize with align_corners=True."""
    if out_size == 1 or in_size == 1:
        src = jnp.zeros((out_size,), jnp.float32)
    else:
        src = jnp.arange(out_size, dtype=jnp.float32) * (
            (in_size - 1) / (out_size - 1))
    i0 = jnp.clip(jnp.floor(src).astype(jnp.int32), 0, in_size - 1)
    i1 = jnp.clip(i0 + 1, 0, in_size - 1)
    w1 = src - i0.astype(jnp.float32)
    w0 = 1.0 - w1
    rows = jnp.arange(out_size)
    M = jnp.zeros((out_size, in_size), jnp.float32)
    M = M.at[rows, i0].add(w0)
    M = M.at[rows, i1].add(w1)
    return M


def up_forward(x1, x2, params):
    """Equivalent of Up.forward. x1, x2 are NCHW; output is NCHW float32."""
    _, _, H1, W1 = x1.shape
    _, _, H2, W2 = x2.shape

    Mh = _interp_matrix(H2, H1)
    Mw = _interp_matrix(W2, W1)
    # bilinear resize (align_corners=True) fused with NCHW->NHWC transpose
    x1_up = jnp.einsum('oh,pw,nchw->nopc', Mh, Mw, x1.astype(jnp.float32))
    x2_nhwc = jnp.transpose(x2, (0, 2, 3, 1)).astype(jnp.float32)

    # channel-last concat: [x2, x1]
    x = jnp.concatenate([x2_nhwc, x1_up], axis=-1)            # (N,H2,W2,C2+C1)

    s1, b1 = _fold_bn(params['gamma1'], params['beta1'],
                      params['mean1'], params['var1'])
    s2, b2 = _fold_bn(params['gamma2'], params['beta2'],
                      params['mean2'], params['var2'])

    y = fused_double_conv3x3_bn_relu(x, params['w1'], s1, b1,
                                     params['w2'], s2, b2)
    return jnp.transpose(y, (0, 3, 1, 2))                     # back to NCHW


up_forward = jax.jit(up_forward)


# pure-JAX fp32 reference (for numerical validation of the bf16 kernel path)
def up_forward_ref(x1, x2, params):
    _, _, H1, W1 = x1.shape
    _, _, H2, W2 = x2.shape
    Mh = _interp_matrix(H2, H1)
    Mw = _interp_matrix(W2, W1)
    x1_up = jnp.einsum('oh,pw,nchw->ncop', Mh, Mw, x1)
    x = jnp.concatenate([x2, x1_up], axis=1)

    def conv_bn_relu(z, w, gamma, beta, mean, var, eps=1e-5):
        y = lax.conv_general_dilated(z, w, window_strides=(1, 1),
                                     padding=((1, 1), (1, 1)),
                                     dimension_numbers=('NCHW', 'OIHW', 'NCHW'))
        s = gamma / jnp.sqrt(var + eps)
        b = beta - mean * s
        y = y * s.reshape(1, -1, 1, 1) + b.reshape(1, -1, 1, 1)
        return jnp.maximum(y, 0.0)

    y = conv_bn_relu(x, params['w1'], params['gamma1'], params['beta1'],
                     params['mean1'], params['var1'])
    y = conv_bn_relu(y, params['w2'], params['gamma2'], params['beta2'],
                     params['mean2'], params['var2'])
    return y


# --------------------------------- main ------------------------------------ #

if __name__ == "__main__":
    key = jax.random.PRNGKey(0)
    ks = jax.random.split(key, 12)

    N = 2
    C1, H1, W1 = 4, 8, 8       # x1: low-res feature
    C2, H2, W2 = 4, 16, 16     # x2: high-res feature
    in_channels = C1 + C2      # 8 (after concat)
    out_channels = 8

    x1 = jax.random.normal(ks[0], (N, C1, H1, W1), jnp.float32)
    x2 = jax.random.normal(ks[1], (N, C2, H2, W2), jnp.float32)

    params = dict(
        w1=0.1 * jax.random.normal(ks[2], (out_channels, in_channels, 3, 3),
                                   jnp.float32),
        gamma1=jax.random.uniform(ks[3], (out_channels,), jnp.float32, 0.5, 1.5),
        beta1=0.1 * jax.random.normal(ks[4], (out_channels,), jnp.float32),
        mean1=0.1 * jax.random.normal(ks[5], (out_channels,), jnp.float32),
        var1=jax.random.uniform(ks[6], (out_channels,), jnp.float32, 0.5, 1.5),
        w2=0.1 * jax.random.normal(ks[7], (out_channels, out_channels, 3, 3),
                                   jnp.float32),
        gamma2=jax.random.uniform(ks[8], (out_channels,), jnp.float32, 0.5, 1.5),
        beta2=0.1 * jax.random.normal(ks[9], (out_channels,), jnp.float32),
        mean2=0.1 * jax.random.normal(ks[10], (out_channels,), jnp.float32),
        var2=jax.random.uniform(ks[11], (out_channels,), jnp.float32, 0.5, 1.5),
    )

    out = up_forward(x1, x2, params)
    out = jax.block_until_ready(out)

    assert out.shape == (N, out_channels, H2, W2), out.shape
    assert out.dtype == jnp.float32
    assert bool(jnp.all(out >= 0.0))   # ReLU output

    # numerical check vs fp32 reference (bf16 matmuls -> loose tolerance)
    ref = up_forward_ref(x1, x2, params)
    err = float(jnp.max(jnp.abs(out - ref)))
    scale = float(jnp.max(jnp.abs(ref)))
    assert err <= 0.08 * scale + 0.02, (err, scale)

    print("KERNEL_OK")
</pallas_src>

<mosaic_0001>
module attributes {stable_mosaic.version = 11 : i64} {
  func.func private @main(%arg0: i32) attributes {dimension_semantics = [#tpu.dimension_semantics<core_parallel>], iteration_bounds = array<i64: 2>, tpu.core_type = #tpu.core_type<sc_scalar_subcore>, window_params = []} {
    return
  }
}

module attributes {stable_mosaic.version = 11 : i64} {
  func.func private @main(%arg0: i32) attributes {dimension_semantics = [#tpu.dimension_semantics<core_parallel>], iteration_bounds = array<i64: 2>, tpu.core_type = #tpu.core_type<sc_scalar_subcore>, window_params = []} {
    return
  }
}

module attributes {stable_mosaic.version = 11 : i64} {
  func.func @_fused_double_conv_kernel(%arg0: i32, %arg1: memref<1x18x18x128xbf16, #tpu.memory_space<vmem>>, %arg2: memref<1152x128xbf16, #tpu.memory_space<vmem>>, %arg3: memref<1x128xf32, #tpu.memory_space<vmem>>, %arg4: memref<1x128xf32, #tpu.memory_space<vmem>>, %arg5: memref<1152x128xbf16, #tpu.memory_space<vmem>>, %arg6: memref<1x128xf32, #tpu.memory_space<vmem>>, %arg7: memref<1x128xf32, #tpu.memory_space<vmem>>, %arg8: memref<1x16x16x128xf32, #tpu.memory_space<vmem>>, %arg9: memref<18x18x128xbf16, #tpu.memory_space<vmem>>) attributes {dimension_semantics = [#tpu.dimension_semantics<parallel>], iteration_bounds = array<i64: 2>, scalar_prefetch = 0 : i64, scratch_operands = 1 : i64, tpu.core_type = #tpu.core_type<tc>, window_params = [{transform_indices = @transform_0, window_bounds = array<i64: 1, 18, 18, 128>}, {pipeline_mode = #tpu.pipeline_mode<synchronous>, transform_indices = @transform_1, window_bounds = array<i64: 1152, 128>}, {pipeline_mode = #tpu.pipeline_mode<synchronous>, transform_indices = @transform_2, window_bounds = array<i64: 1, 128>}, {pipeline_mode = #tpu.pipeline_mode<synchronous>, transform_indices = @transform_3, window_bounds = array<i64: 1, 128>}, {pipeline_mode = #tpu.pipeline_mode<synchronous>, transform_indices = @transform_4, window_bounds = array<i64: 1152, 128>}, {pipeline_mode = #tpu.pipeline_mode<synchronous>, transform_indices = @transform_5, window_bounds = array<i64: 1, 128>}, {pipeline_mode = #tpu.pipeline_mode<synchronous>, transform_indices = @transform_6, window_bounds = array<i64: 1, 128>}, {transform_indices = @transform_7, window_bounds = array<i64: 1, 16, 16, 128>}]} {
    %c0 = arith.constant 0 : index
    %c0_0 = arith.constant 0 : index
    %c0_1 = arith.constant 0 : index
    %c0_2 = arith.constant 0 : index
    %0 = vector.load %arg1[%c0, %c0_0, %c0_1, %c0_2] : memref<1x18x18x128xbf16, #tpu.memory_space<vmem>>, vector<1x18x18x128xbf16>
    %1 = vector.shape_cast %0 : vector<1x18x18x128xbf16> to vector<18x18x128xbf16>
    %2 = vector.extract_strided_slice %1 {offsets = [0, 0, 0], sizes = [16, 16, 128], strides = [1, 1, 1]} : vector<18x18x128xbf16> to vector<16x16x128xbf16>
    %3 = vector.shape_cast %2 : vector<16x16x128xbf16> to vector<256x128xbf16>
    %4 = vector.extract_strided_slice %1 {offsets = [0, 1, 0], sizes = [16, 16, 128], strides = [1, 1, 1]} : vector<18x18x128xbf16> to vector<16x16x128xbf16>
    %5 = vector.shape_cast %4 : vector<16x16x128xbf16> to vector<256x128xbf16>
    %6 = vector.extract_strided_slice %1 {offsets = [0, 2, 0], sizes = [16, 16, 128], strides = [1, 1, 1]} : vector<18x18x128xbf16> to vector<16x16x128xbf16>
    %7 = vector.shape_cast %6 : vector<16x16x128xbf16> to vector<256x128xbf16>
    %8 = vector.extract_strided_slice %1 {offsets = [1, 0, 0], sizes = [16, 16, 128], strides = [1, 1, 1]} : vector<18x18x128xbf16> to vector<16x16x128xbf16>
    %9 = vector.shape_cast %8 : vector<16x16x128xbf16> to vector<256x128xbf16>
    %10 = vector.extract_strided_slice %1 {offsets = [1, 1, 0], sizes = [16, 16, 128], strides = [1, 1, 1]} : vector<18x18x128xbf16> to vector<16x16x128xbf16>
    %11 = vector.shape_cast %10 : vector<16x16x128xbf16> to vector<256x128xbf16>
    %12 = vector.extract_strided_slice %1 {offsets = [1, 2, 0], sizes = [16, 16, 128], strides = [1, 1, 1]} : vector<18x18x128xbf16> to vector<16x16x128xbf16>
    %13 = vector.shape_cast %12 : vector<16x16x128xbf16> to vector<256x128xbf16>
    %14 = vector.extract_strided_slice %1 {offsets = [2, 0, 0], sizes = [16, 16, 128], strides = [1, 1, 1]} : vector<18x18x128xbf16> to vector<16x16x128xbf16>
    %15 = vector.shape_cast %14 : vector<16x16x128xbf16> to vector<256x128xbf16>
    %16 = vector.extract_strided_slice %1 {offsets = [2, 1, 0], sizes = [16, 16, 128], strides = [1, 1, 1]} : vector<18x18x128xbf16> to vector<16x16x128xbf16>
    %17 = vector.shape_cast %16 : vector<16x16x128xbf16> to vector<256x128xbf16>
    %18 = vector.extract_strided_slice %1 {offsets = [2, 2, 0], sizes = [16, 16, 128], strides = [1, 1, 1]} : vector<18x18x128xbf16> to vector<16x16x128xbf16>
    %19 = vector.shape_cast %18 : vector<16x16x128xbf16> to vector<256x128xbf16>
    %20 = tpu.concatenate %3, %5, %7, %9, %11, %13, %15, %17, %19 in 1 : vector<256x128xbf16>, vector<256x128xbf16>, vector<256x128xbf16>, vector<256x128xbf16>, vector<256x128xbf16>, vector<256x128xbf16>, vector<256x128xbf16>, vector<256x128xbf16>, vector<256x128xbf16> -> vector<256x1152xbf16>
    %c0_3 = arith.constant 0 : index
    %c0_4 = arith.constant 0 : index
    %21 = vector.load %arg2[%c0_3, %c0_4] : memref<1152x128xbf16, #tpu.memory_space<vmem>>, vector<1152x128xbf16>
    %cst = arith.constant dense<0.000000e+00> : vector<256x128xf32>
    %22 = tpu.matmul %20, %21, %cst {dimension_numbers = #tpu.dot_dimension_numbers<[1], [0], [0], [1], [0, 0, 1, 1], [], []>} : vector<256x1152xbf16>, vector<1152x128xbf16>, vector<256x128xf32> -> vector<256x128xf32>
    %c0_5 = arith.constant 0 : index
    %c0_6 = arith.constant 0 : index
    %23 = vector.load %arg3[%c0_5, %c0_6] : memref<1x128xf32, #tpu.memory_space<vmem>>, vector<1x128xf32>
    %24 = vector.broadcast %23 : vector<1x128xf32> to vector<256x128xf32>
    %25 = arith.mulf %22, %24 : vector<256x128xf32>
    %c0_7 = arith.constant 0 : index
    %c0_8 = arith.constant 0 : index
    %26 = vector.load %arg4[%c0_7, %c0_8] : memref<1x128xf32, #tpu.memory_space<vmem>>, vector<1x128xf32>
    %27 = vector.broadcast %26 : vector<1x128xf32> to vector<256x128xf32>
    %28 = arith.addf %25, %27 : vector<256x128xf32>
    %cst_9 = arith.constant 0.000000e+00 : f32
    %29 = vector.broadcast %cst_9 : f32 to vector<256x128xf32>
    %30 = arith.maximumf %28, %29 : vector<256x128xf32>
    %cst_10 = arith.constant 0.000000e+00 : bf16
    %31 = vector.broadcast %cst_10 : bf16 to vector<18x18x128xbf16>
    %c0_11 = arith.constant 0 : index
    %c0_12 = arith.constant 0 : index
    %c0_13 = arith.constant 0 : index
    %32 = vector.load %arg9[%c0_11, %c0_12, %c0_13] : memref<18x18x128xbf16, #tpu.memory_space<vmem>>, vector<18x18x128xbf16>
    tpu.vector_store %arg9[%c0_11, %c0_12, %c0_13], %31 {strides = array<i32>} : memref<18x18x128xbf16, #tpu.memory_space<vmem>>, vector<18x18x128xbf16>,
    %33 = vector.shape_cast %30 : vector<256x128xf32> to vector<16x16x128xf32>
    %34 = arith.truncf %33 : vector<16x16x128xf32> to vector<16x16x128xbf16>
    %c1 = arith.constant 1 : index
    %c1_14 = arith.constant 1 : index
    %c0_15 = arith.constant 0 : index
    %35 = vector.load %arg9[%c1, %c1_14, %c0_15] : memref<18x18x128xbf16, #tpu.memory_space<vmem>>, vector<16x16x128xbf16>
    tpu.vector_store %arg9[%c1, %c1_14, %c0_15], %34 {strides = array<i32>} : memref<18x18x128xbf16, #tpu.memory_space<vmem>>, vector<16x16x128xbf16>,
    %c0_16 = arith.constant 0 : index
    %c0_17 = arith.constant 0 : index
    %c0_18 = arith.constant 0 : index
    %36 = vector.load %arg9[%c0_16, %c0_17, %c0_18] : memref<18x18x128xbf16, #tpu.memory_space<vmem>>, vector<18x18x128xbf16>
    %37 = vector.extract_strided_slice %36 {offsets = [0, 0, 0], sizes = [16, 16, 128], strides = [1, 1, 1]} : vector<18x18x128xbf16> to vector<16x16x128xbf16>
    %38 = vector.shape_cast %37 : vector<16x16x128xbf16> to vector<256x128xbf16>
    %39 = vector.extract_strided_slice %36 {offsets = [0, 1, 0], sizes = [16, 16, 128], strides = [1, 1, 1]} : vector<18x18x128xbf16> to vector<16x16x128xbf16>
    %40 = vector.shape_cast %39 : vector<16x16x128xbf16> to vector<256x128xbf16>
    %41 = vector.extract_strided_slice %36 {offsets = [0, 2, 0], sizes = [16, 16, 128], strides = [1, 1, 1]} : vector<18x18x128xbf16> to vector<16x16x128xbf16>
    %42 = vector.shape_cast %41 : vector<16x16x128xbf16> to vector<256x128xbf16>
    %43 = vector.extract_strided_slice %36 {offsets = [1, 0, 0], sizes = [16, 16, 128], strides = [1, 1, 1]} : vector<18x18x128xbf16> to vector<16x16x128xbf16>
    %44 = vector.shape_cast %43 : vector<16x16x128xbf16> to vector<256x128xbf16>
    %45 = vector.extract_strided_slice %36 {offsets = [1, 1, 0], sizes = [16, 16, 128], strides = [1, 1, 1]} : vector<18x18x128xbf16> to vector<16x16x128xbf16>
    %46 = vector.shape_cast %45 : vector<16x16x128xbf16> to vector<256x128xbf16>
    %47 = vector.extract_strided_slice %36 {offsets = [1, 2, 0], sizes = [16, 16, 128], strides = [1, 1, 1]} : vector<18x18x128xbf16> to vector<16x16x128xbf16>
    %48 = vector.shape_cast %47 : vector<16x16x128xbf16> to vector<256x128xbf16>
    %49 = vector.extract_strided_slice %36 {offsets = [2, 0, 0], sizes = [16, 16, 128], strides = [1, 1, 1]} : vector<18x18x128xbf16> to vector<16x16x128xbf16>
    %50 = vector.shape_cast %49 : vector<16x16x128xbf16> to vector<256x128xbf16>
    %51 = vector.extract_strided_slice %36 {offsets = [2, 1, 0], sizes = [16, 16, 128], strides = [1, 1, 1]} : vector<18x18x128xbf16> to vector<16x16x128xbf16>
    %52 = vector.shape_cast %51 : vector<16x16x128xbf16> to vector<256x128xbf16>
    %53 = vector.extract_strided_slice %36 {offsets = [2, 2, 0], sizes = [16, 16, 128], strides = [1, 1, 1]} : vector<18x18x128xbf16> to vector<16x16x128xbf16>
    %54 = vector.shape_cast %53 : vector<16x16x128xbf16> to vector<256x128xbf16>
    %55 = tpu.concatenate %38, %40, %42, %44, %46, %48, %50, %52, %54 in 1 : vector<256x128xbf16>, vector<256x128xbf16>, vector<256x128xbf16>, vector<256x128xbf16>, vector<256x128xbf16>, vector<256x128xbf16>, vector<256x128xbf16>, vector<256x128xbf16>, vector<256x128xbf16> -> vector<256x1152xbf16>
    %c0_19 = arith.constant 0 : index
    %c0_20 = arith.constant 0 : index
    %56 = vector.load %arg5[%c0_19, %c0_20] : memref<1152x128xbf16, #tpu.memory_space<vmem>>, vector<1152x128xbf16>
    %cst_21 = arith.constant dense<0.000000e+00> : vector<256x128xf32>
    %57 = tpu.matmul %55, %56, %cst_21 {dimension_numbers = #tpu.dot_dimension_numbers<[1], [0], [0], [1], [0, 0, 1, 1], [], []>} : vector<256x1152xbf16>, vector<1152x128xbf16>, vector<256x128xf32> -> vector<256x128xf32>
    %c0_22 = arith.constant 0 : index
    %c0_23 = arith.constant 0 : index
    %58 = vector.load %arg6[%c0_22, %c0_23] : memref<1x128xf32, #tpu.memory_space<vmem>>, vector<1x128xf32>
    %59 = vector.broadcast %58 : vector<1x128xf32> to vector<256x128xf32>
    %60 = arith.mulf %57, %59 : vector<256x128xf32>
    %c0_24 = arith.constant 0 : index
    %c0_25 = arith.constant 0 : index
    %61 = vector.load %arg7[%c0_24, %c0_25] : memref<1x128xf32, #tpu.memory_space<vmem>>, vector<1x128xf32>
    %62 = vector.broadcast %61 : vector<1x128xf32> to vector<256x128xf32>
    %63 = arith.addf %60, %62 : vector<256x128xf32>
    %cst_26 = arith.constant 0.000000e+00 : f32
    %64 = vector.broadcast %cst_26 : f32 to vector<256x128xf32>
    %65 = arith.maximumf %63, %64 : vector<256x128xf32>
    %66 = vector.shape_cast %65 : vector<256x128xf32> to vector<1x16x16x128xf32>
    %c0_27 = arith.constant 0 : index
    %c0_28 = arith.constant 0 : index
    %c0_29 = arith.constant 0 : index
    %c0_30 = arith.constant 0 : index
    %67 = vector.load %arg8[%c0_27, %c0_28, %c0_29, %c0_30] : memref<1x16x16x128xf32, #tpu.memory_space<vmem>>, vector<1x16x16x128xf32>
    tpu.vector_store %arg8[%c0_27, %c0_28, %c0_29, %c0_30], %66 {strides = array<i32>} : memref<1x16x16x128xf32, #tpu.memory_space<vmem>>, vector<1x16x16x128xf32>,
    return
  }
  func.func @transform_0(%arg0: i32) -> (i32, i32, i32, i32) {
    %c0_i32 = arith.constant 0 : i32
    %c0_i32_0 = arith.constant 0 : i32
    %c0_i32_1 = arith.constant 0 : i32
    %c0_i32_2 = arith.constant 0 : i32
    return %arg0, %c0_i32, %c0_i32_0, %c0_i32_1 : i32, i32, i32, i32
  }
  func.func @transform_1(%arg0: i32) -> (i32, i32) {
    %c0_i32 = arith.constant 0 : i32
    %c0_i32_0 = arith.constant 0 : i32
    %c0_i32_1 = arith.constant 0 : i32
    return %c0_i32, %c0_i32_0 : i32, i32
  }
  func.func @transform_2(%arg0: i32) -> (i32, i32) {
    %c0_i32 = arith.constant 0 : i32
    %c0_i32_0 = arith.constant 0 : i32
    %c0_i32_1 = arith.constant 0 : i32
    return %c0_i32, %c0_i32_0 : i32, i32
  }
  func.func @transform_3(%arg0: i32) -> (i32, i32) {
    %c0_i32 = arith.constant 0 : i32
    %c0_i32_0 = arith.constant 0 : i32
    %c0_i32_1 = arith.constant 0 : i32
    return %c0_i32, %c0_i32_0 : i32, i32
  }
  func.func @transform_4(%arg0: i32) -> (i32, i32) {
    %c0_i32 = arith.constant 0 : i32
    %c0_i32_0 = arith.constant 0 : i32
    %c0_i32_1 = arith.constant 0 : i32
    return %c0_i32, %c0_i32_0 : i32, i32
  }
  func.func @transform_5(%arg0: i32) -> (i32, i32) {
    %c0_i32 = arith.constant 0 : i32
    %c0_i32_0 = arith.constant 0 : i32
    %c0_i32_1 = arith.constant 0 : i32
    return %c0_i32, %c0_i32_0 : i32, i32
  }
  func.func @transform_6(%arg0: i32) -> (i32, i32) {
    %c0_i32 = arith.constant 0 : i32
    %c0_i32_0 = arith.constant 0 : i32
    %c0_i32_1 = arith.constant 0 : i32
    return %c0_i32, %c0_i32_0 : i32, i32
  }
  func.func @transform_7(%arg0: i32) -> (i32, i32, i32, i32) {
    %c0_i32 = arith.constant 0 : i32
    %c0_i32_0 = arith.constant 0 : i32
    %c0_i32_1 = arith.constant 0 : i32
    %c0_i32_2 = arith.constant 0 : i32
    return %arg0, %c0_i32, %c0_i32_0, %c0_i32_1 : i32, i32, i32, i32
  }
}

</mosaic_0001>

<llo_original>
// kernel: up_forward.1
$region0: #{up_forward.1}
  #allocation0 [shape = 'u32[]', space=smem, size = 0x4, offset = 0x4, fixed_abs, tag = 'smem constant byte address 0x4 - core index']
  #allocation1 [shape = 'u32[144,128]{1,0:T(1,128)}', space=vmem, size = 0x12000, scoped, tag = 'internal scratch']
  #allocation2 [shape = 'bf16[18,18,128]{2,1,0:T(8,128)(2,1)}', space=vmem, size = 0x1b000, scoped, tag = 'scratch operand']
  %s0 = inlined_call_operand.vmem [shape: bf16[2,18,18,128], index: 0, kind: input, shape index: {}]
  %s1 = inlined_call_operand.vmem [shape: bf16[1152,128], index: 1, kind: input, shape index: {}]
  %s2 = inlined_call_operand.vmem [shape: f32[1,128], index: 2, kind: input, shape index: {}]
  %s3 = inlined_call_operand.vmem [shape: f32[1,128], index: 3, kind: input, shape index: {}]
  %s4 = inlined_call_operand.vmem [shape: bf16[1152,128], index: 4, kind: input, shape index: {}]
  %s5 = inlined_call_operand.vmem [shape: f32[1,128], index: 5, kind: input, shape index: {}]
  %s6 = inlined_call_operand.vmem [shape: f32[1,128], index: 6, kind: input, shape index: {}]
  %s7 = inlined_call_operand.vmem [shape: f32[2,16,16,128], index: 7, kind: output, shape index: {}]
  %s8 = sld [smem:[#allocation0]]
  $region61: #{up_forward.1} parent=0
    _
  %s10 = ssub.s32 1, %s8
  %s11 = scalar_select 0, %s10, %s8
  loop: start=0, step=1, limit=4
  $region2: #{up_forward.1} parent=0 // loop_pre_header
    _
  $region3: #{up_forward.1} parent=0 // loop_header
    %s13 = sphi 0, %s17
    %p14 = scmp.ge.s32.totalorder %s13, 4
    %s23 = sphi 0, %s25
    %s26 = sphi 0, %s23
    %s27 = sphi 0, %s26
    %s43 = sphi 0, %s27
    %s47 = sphi 0, %s47
    %s49 = sphi 0, %s47
    %s50 = sphi 0, %s49
    %s64 = sphi 0, %s50
    %s68 = sphi 0, %s68
    %s70 = sphi 0, %s68
    %s71 = sphi 0, %s70
    %s85 = sphi 0, %s71
    %s89 = sphi 0, %s89
    %s91 = sphi 0, %s89
    %s92 = sphi 0, %s91
    %s106 = sphi 0, %s92
    %s110 = sphi 0, %s110
    %s112 = sphi 0, %s110
    %s113 = sphi 0, %s112
    %s127 = sphi 0, %s113
    %s131 = sphi 0, %s131
    %s133 = sphi 0, %s131
    %s134 = sphi 0, %s133
    %s148 = sphi 0, %s134
    %s152 = sphi 0, %s152
    %s154 = sphi 0, %s152
    %s155 = sphi 0, %s154
    %s169 = sphi 0, %s155
    %s175 = sphi 0, %s177
    %s178 = sphi 0, %s175
    %s179 = sphi 0, %s178
    %s195 = sphi 0, %s179
  $region4: #{up_forward.1} parent=0 // loop_header_branch
    %16 = sbr.rel (%p14) target = $region8
  $region5: #{up_forward.1} parent=0 // loop_body
    %s18 = ssub.s32 %s13, 1
    %s19 = ssub.s32 %s13, 2
    %s20 = sadd.s32 %s13, 1
    %s21 = ssub.s32 %s13, %s20
    %p22 = scmp.eq.s32.totalorder %s21, 0
    %s24 = sadd.s32 %s23, 1
    %s25 = scalar_select %p22, %s23, %s24
    %p28 = pneg %p22
    %p29 = scmp.eq.s32.totalorder %s13, 1
    %p30 = por %p28, %p29
    %p31 = scmp.ne.s32.totalorder %s23, %s26
    %p32 = scmp.eq.s32.totalorder %s13, 0
    %p33 = por %p31, %p32
    %p34 = scmp.ne.s32.totalorder %s23, %s26
    %p35 = scmp.eq.s32.totalorder %s18, 1
    %p36 = por %p34, %p35
    %p37 = scmp.ne.s32.totalorder %s26, %s27
    %p38 = scmp.eq.s32.totalorder %s18, 0
    %p39 = por %p37, %p38
    %p40 = scmp.ne.s32.totalorder %s26, %s27
    %p41 = scmp.eq.s32.totalorder %s19, 1
    %p42 = por %p40, %p41
    %p44 = scmp.ne.s32.totalorder %s27, %s43
    %p45 = scmp.eq.s32.totalorder %s19, 0
    %p46 = por %p44, %p45
    %s48 = sadd.s32 %s47, 1
    %p51 = scmp.eq.s32.totalorder %s13, 1
    %p52 = scmp.ne.s32.totalorder %s47, %s49
    %p53 = scmp.eq.s32.totalorder %s13, 0
    %p54 = por %p52, %p53
    %p55 = scmp.ne.s32.totalorder %s47, %s49
    %p56 = scmp.eq.s32.totalorder %s18, 1
    %p57 = por %p55, %p56
    %p58 = scmp.ne.s32.totalorder %s49, %s50
    %p59 = scmp.eq.s32.totalorder %s18, 0
    %p60 = por %p58, %p59
    %p61 = scmp.ne.s32.totalorder %s49, %s50
    %p62 = scmp.eq.s32.totalorder %s19, 1
    %p63 = por %p61, %p62
    %p65 = scmp.ne.s32.totalorder %s50, %s64
    %p66 = scmp.eq.s32.totalorder %s19, 0
    %p67 = por %p65, %p66
    %s69 = sadd.s32 %s68, 1
    %p72 = scmp.eq.s32.totalorder %s13, 1
    %p73 = scmp.ne.s32.totalorder %s68, %s70
    %p74 = scmp.eq.s32.totalorder %s13, 0
    %p75 = por %p73, %p74
    %p76 = scmp.ne.s32.totalorder %s68, %s70
    %p77 = scmp.eq.s32.totalorder %s18, 1
    %p78 = por %p76, %p77
    %p79 = scmp.ne.s32.totalorder %s70, %s71
    %p80 = scmp.eq.s32.totalorder %s18, 0
    %p81 = por %p79, %p80
    %p82 = scmp.ne.s32.totalorder %s70, %s71
    %p83 = scmp.eq.s32.totalorder %s19, 1
    %p84 = por %p82, %p83
    %p86 = scmp.ne.s32.totalorder %s71, %s85
    %p87 = scmp.eq.s32.totalorder %s19, 0
    %p88 = por %p86, %p87
    %s90 = sadd.s32 %s89, 1
    %p93 = scmp.eq.s32.totalorder %s13, 1
    %p94 = scmp.ne.s32.totalorder %s89, %s91
    %p95 = scmp.eq.s32.totalorder %s13, 0
    %p96 = por %p94, %p95
    %p97 = scmp.ne.s32.totalorder %s89, %s91
    %p98 = scmp.eq.s32.totalorder %s18, 1
    %p99 = por %p97, %p98
    %p100 = scmp.ne.s32.totalorder %s91, %s92
    %p101 = scmp.eq.s32.totalorder %s18, 0
    %p102 = por %p100, %p101
    %p103 = scmp.ne.s32.totalorder %s91, %s92
    %p104 = scmp.eq.s32.totalorder %s19, 1
    %p105 = por %p103, %p104
    %p107 = scmp.ne.s32.totalorder %s92, %s106
    %p108 = scmp.eq.s32.totalorder %s19, 0
    %p109 = por %p107, %p108
    %s111 = sadd.s32 %s110, 1
    %p114 = scmp.eq.s32.totalorder %s13, 1
    %p115 = scmp.ne.s32.totalorder %s110, %s112
    %p116 = scmp.eq.s32.totalorder %s13, 0
    %p117 = por %p115, %p116
    %p118 = scmp.ne.s32.totalorder %s110, %s112
    %p119 = scmp.eq.s32.totalorder %s18, 1
    %p120 = por %p118, %p119
    %p121 = scmp.ne.s32.totalorder %s112, %s113
    %p122 = scmp.eq.s32.totalorder %s18, 0
    %p123 = por %p121, %p122
    %p124 = scmp.ne.s32.totalorder %s112, %s113
    %p125 = scmp.eq.s32.totalorder %s19, 1
    %p126 = por %p124, %p125
    %p128 = scmp.ne.s32.totalorder %s113, %s127
    %p129 = scmp.eq.s32.totalorder %s19, 0
    %p130 = por %p128, %p129
    %s132 = sadd.s32 %s131, 1
    %p135 = scmp.eq.s32.totalorder %s13, 1
    %p136 = scmp.ne.s32.totalorder %s131, %s133
    %p137 = scmp.eq.s32.totalorder %s13, 0
    %p138 = por %p136, %p137
    %p139 = scmp.ne.s32.totalorder %s131, %s133
    %p140 = scmp.eq.s32.totalorder %s18, 1
    %p141 = por %p139, %p140
    %p142 = scmp.ne.s32.totalorder %s133, %s134
    %p143 = scmp.eq.s32.totalorder %s18, 0
    %p144 = por %p142, %p143
    %p145 = scmp.ne.s32.totalorder %s133, %s134
    %p146 = scmp.eq.s32.totalorder %s19, 1
    %p147 = por %p145, %p146
    %p149 = scmp.ne.s32.totalorder %s134, %s148
    %p150 = scmp.eq.s32.totalorder %s19, 0
    %p151 = por %p149, %p150
    %s153 = sadd.s32 %s152, 1
    %p156 = scmp.eq.s32.totalorder %s13, 1
    %p157 = scmp.ne.s32.totalorder %s152, %s154
    %p158 = scmp.eq.s32.totalorder %s13, 0
    %p159 = por %p157, %p158
    %p160 = scmp.ne.s32.totalorder %s152, %s154
    %p161 = scmp.eq.s32.totalorder %s18, 1
    %p162 = por %p160, %p161
    %p163 = scmp.ne.s32.totalorder %s154, %s155
    %p164 = scmp.eq.s32.totalorder %s18, 0
    %p165 = por %p163, %p164
    %p166 = scmp.ne.s32.totalorder %s154, %s155
    %p167 = scmp.eq.s32.totalorder %s19, 1
    %p168 = por %p166, %p167
    %p170 = scmp.ne.s32.totalorder %s155, %s169
    %p171 = scmp.eq.s32.totalorder %s19, 0
    %p172 = por %p170, %p171
    %s173 = ssub.s32 %s13, %s20
    %p174 = scmp.eq.s32.totalorder %s173, 0
    %s176 = sadd.s32 %s175, 1
    %s177 = scalar_select %p174, %s175, %s176
    %p180 = pneg %p174
    %p181 = scmp.eq.s32.totalorder %s13, 1
    %p182 = por %p180, %p181
    %p183 = scmp.ne.s32.totalorder %s175, %s178
    %p184 = scmp.eq.s32.totalorder %s13, 0
    %p185 = por %p183, %p184
    %p186 = scmp.ne.s32.totalorder %s175, %s178
    %p187 = scmp.eq.s32.totalorder %s18, 1
    %p188 = por %p186, %p187
    %p189 = scmp.ne.s32.totalorder %s178, %s179
    %p190 = scmp.eq.s32.totalorder %s18, 0
    %p191 = por %p189, %p190
    %p192 = scmp.ne.s32.totalorder %s178, %s179
    %p193 = scmp.eq.s32.totalorder %s19, 1
    %p194 = por %p192, %p193
    %p196 = scmp.ne.s32.totalorder %s179, %s195
    %p197 = scmp.eq.s32.totalorder %s19, 0
    %p198 = por %p196, %p197
    %p199 = scmp.le.s32.totalorder 1, %s13
    %p200 = scmp.lt.s32.totalorder %s13, 3
    %p201 = pnand %p199, %p200
    %p202 = pneg %p201
    // Predicated region
    $region9: #{up_forward.1} parent=5 // pred_check
      _
    $region10: #{up_forward.1} parent=5 // pred_check_branch
      %204 = sbr.rel (%p201) target = $region12
    $region11: #{up_forward.1} parent=5 // pred_region
      %s205 = ssub.s32 %s13, 1
      // Predicated region
      $region13: #{up_forward.1} parent=11 // pred_check
        %p206 = pneg %p60
      $region14: #{up_forward.1} parent=11 // pred_check_branch
        %208 = sbr.rel (%p206) target = $region16
      $region15: #{up_forward.1} parent=11 // pred_region
        _
      $region16: #{up_forward.1} parent=11 // pred_fallthru
        _
      // Predicated region
      $region17: #{up_forward.1} parent=11 // pred_check
        %p209 = pneg %p81
      $region18: #{up_forward.1} parent=11 // pred_check_branch
        %211 = sbr.rel (%p209) target = $region20
      $region19: #{up_forward.1} parent=11 // pred_region
        _
      $region20: #{up_forward.1} parent=11 // pred_fallthru
        _
      // Predicated region
      $region21: #{up_forward.1} parent=11 // pred_check
        %p212 = pneg %p102
      $region22: #{up_forward.1} parent=11 // pred_check_branch
        %214 = sbr.rel (%p212) target = $region24
      $region23: #{up_forward.1} parent=11 // pred_region
        _
      $region24: #{up_forward.1} parent=11 // pred_fallthru
        _
      // Predicated region
      $region25: #{up_forward.1} parent=11 // pred_check
        %p215 = pneg %p123
      $region26: #{up_forward.1} parent=11 // pred_check_branch
        %217 = sbr.rel (%p215) target = $region28
      $region27: #{up_forward.1} parent=11 // pred_region
        _
      $region28: #{up_forward.1} parent=11 // pred_fallthru
        _
      // Predicated region
      $region29: #{up_forward.1} parent=11 // pred_check
        %p218 = pneg %p144
      $region30: #{up_forward.1} parent=11 // pred_check_branch
        %220 = sbr.rel (%p218) target = $region32
      $region31: #{up_forward.1} parent=11 // pred_region
        _
      $region32: #{up_forward.1} parent=11 // pred_fallthru
        _
      // Predicated region
      $region33: #{up_forward.1} parent=11 // pred_check
        %p221 = pneg %p165
      $region34: #{up_forward.1} parent=11 // pred_check_branch
        %223 = sbr.rel (%p221) target = $region36
      $region35: #{up_forward.1} parent=11 // pred_region
        _
      $region36: #{up_forward.1} parent=11 // pred_fallthru
        _
    $region12: #{up_forward.1} parent=5 // pred_fallthru
      _
    %p224 = scmp.lt.s32.totalorder %s13, 2
    // Predicated region
    $region37: #{up_forward.1} parent=5 // pred_check
      %p225 = pneg %p224
    $region38: #{up_forward.1} parent=5 // pred_check_branch
      %227 = sbr.rel (%p225) target = $region40
    $region39: #{up_forward.1} parent=5 // pred_region
      // Predicated region
      $region41: #{up_forward.1} parent=39 // pred_check
        %p228 = pneg %p33
      $region42: #{up_forward.1} parent=39 // pred_check_branch
        %230 = sbr.rel (%p228) target = $region44
      $region43: #{up_forward.1} parent=39 // pred_region
        %p231 = scmp.lt.s32.totalorder %s13, 1
        %s232 = scalar_select %p231, %s13, 1
        %s233 = smul.addr %s232, 54
        %s234 = smul.addr %s233, 4
        %s235 = scalar_lea.vmem %s0, %s234
      $region44: #{up_forward.1} parent=39 // pred_fallthru
        _
    $region40: #{up_forward.1} parent=5 // pred_fallthru
      _
    %p236 = scmp.le.s32.totalorder 1, %s13
    %p237 = scmp.lt.s32.totalorder %s13, 3
    %p238 = pnand %p236, %p237
    %p239 = pneg %p238
    // Predicated region
    $region45: #{up_forward.1} parent=5 // pred_check
      _
    $region46: #{up_forward.1} parent=5 // pred_check_branch
      %241 = sbr.rel (%p238) target = $region48
    $region47: #{up_forward.1} parent=5 // pred_region
      %s242 = ssub.s32 %s13, 1
      %p243 = scmp.lt.s32.totalorder %s18, 1
      %s244 = scalar_select %p243, %s18, 1
      %s245 = smul.addr %s244, 54
      %s246 = smul.addr %s245, 4
      %s247 = scalar_lea.vmem %s0, %s246
      %p248 = pneg %p39
      %p249 = pneg %p36
      %p250 = pneg %p60
      %p251 = pneg %p57
      %p252 = pneg %p81
      %p253 = pneg %p78
      %p254 = pneg %p102
      %p255 = pneg %p99
      %p256 = pneg %p123
      %p257 = pneg %p120
      %p258 = pneg %p144
      %p259 = pneg %p141
      %p260 = pneg %p165
      %p261 = pneg %p162
      %p262 = pneg %p191
      %p263 = pneg %p188
      %p264 = scmp.lt.s32.totalorder %s18, 1
      %s265 = scalar_select %p264, %s18, 1
      %s266 = smul.addr %s265, 32
      %s267 = smul.addr %s266, 8
      %s268 = scalar_lea.vmem %s7, %s267
      %p269 = scmp.lt.s32.totalorder %s18, 1
      %s270 = scalar_select %p269, %s18, 1
      %s271 = smul.addr %s270, 54
      %s272 = smul.addr %s271, 4
      %s273 = scalar_lea.vmem %s0, %s272
      %p274 = scmp.lt.s32.totalorder %s18, 1
      %s275 = scalar_select %p274, %s18, 1
      %s276 = smul.addr %s275, 32
      %s277 = smul.addr %s276, 8
      %s278 = scalar_lea.vmem %s7, %s277
      %v280 = vld [vmem:[%s273] sm:$0xf]
      %v281 = vld [vmem:[%s273 + $0x4] sm:$0xf]
      %v282 = vld [vmem:[%s273 + $0x8] sm:$0x1]
      %v283 = vld [vmem:[%s273 + $0xc] sm:$0xf]
      %v284 = vld [vmem:[%s273 + $0x10] sm:$0xf]
      %v285 = vld [vmem:[%s273 + $0x14] sm:$0x1]
      %v286 = vld [vmem:[%s273 + $0x18] sm:$0xf]
      %v287 = vld [vmem:[%s273 + $0x1c] sm:$0xf]
      %v288 = vld [vmem:[%s273 + $0x20] sm:$0x1]
      %v289 = vld [vmem:[%s273 + $0x24] sm:$0xf]
      %v290 = vld [vmem:[%s273 + $0x28] sm:$0xf]
      %v291 = vld [vmem:[%s273 + $0x2c] sm:$0x1]
      %v292 = vld [vmem:[%s273 + $0x30] sm:$0xf]
      %v293 = vld [vmem:[%s273 + $0x34] sm:$0xf]
      %v294 = vld [vmem:[%s273 + $0x38] sm:$0x1]
      %v295 = vld [vmem:[%s273 + $0x3c] sm:$0xf]
      %v296 = vld [vmem:[%s273 + $0x40] sm:$0xf]
      %v297 = vld [vmem:[%s273 + $0x44] sm:$0x1]
      %v298 = vld [vmem:[%s273 + $0x48] sm:$0xf]
      %v299 = vld [vmem:[%s273 + $0x4c] sm:$0xf]
      %v300 = vld [vmem:[%s273 + $0x50] sm:$0x1]
      %v301 = vld [vmem:[%s273 + $0x54] sm:$0xf]
      %v302 = vld [vmem:[%s273 + $0x58] sm:$0xf]
      %v303 = vld [vmem:[%s273 + $0x5c] sm:$0x1]
      %v304 = vld [vmem:[%s273 + $0x60] sm:$0xf]
      %v305 = vld [vmem:[%s273 + $0x64] sm:$0xf]
      %v306 = vld [vmem:[%s273 + $0x68] sm:$0x1]
      %v307 = vld [vmem:[%s273 + $0x6c] sm:$0xf]
      %v308 = vld [vmem:[%s273 + $0x70] sm:$0xf]
      %v309 = vld [vmem:[%s273 + $0x74] sm:$0x1]
      %v310 = vld [vmem:[%s273 + $0x78] sm:$0xf]
      %v311 = vld [vmem:[%s273 + $0x7c] sm:$0xf]
      %v312 = vld [vmem:[%s273 + $0x80] sm:$0x1]
      %v313 = vld [vmem:[%s273 + $0x84] sm:$0xf]
      %v314 = vld [vmem:[%s273 + $0x88] sm:$0xf]
      %v315 = vld [vmem:[%s273 + $0x8c] sm:$0x1]
      %v316 = vld [vmem:[%s273 + $0x90] sm:$0xf]
      %v317 = vld [vmem:[%s273 + $0x94] sm:$0xf]
      %v318 = vld [vmem:[%s273 + $0x98] sm:$0x1]
      %v319 = vld [vmem:[%s273 + $0x9c] sm:$0xf]
      %v320 = vld [vmem:[%s273 + $0xa0] sm:$0xf]
      %v321 = vld [vmem:[%s273 + $0xa4] sm:$0x1]
      %v322 = vld [vmem:[%s273 + $0xa8] sm:$0xf]
      %v323 = vld [vmem:[%s273 + $0xac] sm:$0xf]
      %v324 = vld [vmem:[%s273 + $0xb0] sm:$0x1]
      %v325 = vld [vmem:[%s273 + $0xb4] sm:$0xf]
      %v326 = vld [vmem:[%s273 + $0xb8] sm:$0xf]
      %v327 = vld [vmem:[%s273 + $0xbc] sm:$0x1]
      %v328 = vld [vmem:[%s273 + $0xc0] sm:$0xf]
      %v329 = vld [vmem:[%s273 + $0xc4] sm:$0xf]
      %v330 = vld [vmem:[%s273 + $0xc8] sm:$0x1]
      %v331 = vld [vmem:[%s273 + $0xcc] sm:$0xf]
      %v332 = vld [vmem:[%s273 + $0xd0] sm:$0xf]
      %v333 = vld [vmem:[%s273 + $0xd4] sm:$0x1]
      %vm334 = vsmask.f32 3328
      %vm335 = vsmask.f32 7440
      %vm336 = vmor %vm334, %vm335
      %v338 = vshrl.u32 %v280, 16
      %v340 = vrot.slane %v338, 4
      %v341 = vshll.u32 %v280, 16
      %v343 = vrot.slane %v341, 5
      %v344 = vor.u32 %v340, %v343
      %v345 = vrot.slane %v344, 4
      %v347 = vshll.u32 %v281, 16
      %v349 = vrot.slane %v347, 5
      %v350 = vsel %vm336, %v345, %v349
      %v351 = vshrl.u32 %v281, 16
      %v353 = vrot.slane %v351, 4
      %v354 = vor.u32 %v353, %v349
      %v355 = vrot.slane %v354, 4
      %v357 = vshll.u32 %v282, 16
      %v359 = vrot.slane %v357, 5
      %v360 = vsel %vm336, %v355, %v359
      %v362 = vshrl.u32 %v283, 16
      %v364 = vrot.slane %v362, 4
      %v365 = vshll.u32 %v283, 16
      %v367 = vrot.slane %v365, 5
      %v368 = vor.u32 %v364, %v367
      %v369 = vrot.slane %v368, 4
      %v371 = vshll.u32 %v284, 16
      %v373 = vrot.slane %v371, 5
      %v374 = vsel %vm336, %v369, %v373
      %v375 = vshrl.u32 %v284, 16
      %v377 = vrot.slane %v375, 4
      %v378 = vor.u32 %v377, %v373
      %v379 = vrot.slane %v378, 4
      %v381 = vshll.u32 %v285, 16
      %v383 = vrot.slane %v381, 5
      %v384 = vsel %vm336, %v379, %v383
      %v386 = vshrl.u32 %v286, 16
      %v388 = vrot.slane %v386, 4
      %v389 = vshll.u32 %v286, 16
      %v391 = vrot.slane %v389, 5
      %v392 = vor.u32 %v388, %v391
      %v393 = vrot.slane %v392, 4
      %v395 = vshll.u32 %v287, 16
      %v397 = vrot.slane %v395, 5
      %v398 = vsel %vm336, %v393, %v397
      %v399 = vshrl.u32 %v287, 16
      %v401 = vrot.slane %v399, 4
      %v402 = vor.u32 %v401, %v397
      %v403 = vrot.slane %v402, 4
      %v405 = vshll.u32 %v288, 16
      %v407 = vrot.slane %v405, 5
      %v408 = vsel %vm336, %v403, %v407
      %v410 = vshrl.u32 %v289, 16
      %v412 = vrot.slane %v410, 4
      %v413 = vshll.u32 %v289, 16
      %v415 = vrot.slane %v413, 5
      %v416 = vor.u32 %v412, %v415
      %v417 = vrot.slane %v416, 4
      %v419 = vshll.u32 %v290, 16
      %v421 = vrot.slane %v419, 5
      %v422 = vsel %vm336, %v417, %v421
      %v423 = vshrl.u32 %v290, 16
      %v425 = vrot.slane %v423, 4
      %v426 = vor.u32 %v425, %v421
      %v427 = vrot.slane %v426, 4
      %v429 = vshll.u32 %v291, 16
      %v431 = vrot.slane %v429, 5
      %v432 = vsel %vm336, %v427, %v431
      %v434 = vshrl.u32 %v292, 16
      %v436 = vrot.slane %v434, 4
      %v437 = vshll.u32 %v292, 16
      %v439 = vrot.slane %v437, 5
      %v440 = vor.u32 %v436, %v439
      %v441 = vrot.slane %v440, 4
      %v443 = vshll.u32 %v293, 16
      %v445 = vrot.slane %v443, 5
      %v446 = vsel %vm336, %v441, %v445
      %v447 = vshrl.u32 %v293, 16
      %v449 = vrot.slane %v447, 4
      %v450 = vor.u32 %v449, %v445
      %v451 = vrot.slane %v450, 4
      %v453 = vshll.u32 %v294, 16
      %v455 = vrot.slane %v453, 5
      %v456 = vsel %vm336, %v451, %v455
      %v458 = vshrl.u32 %v295, 16
      %v460 = vrot.slane %v458, 4
      %v461 = vshll.u32 %v295, 16
      %v463 = vrot.slane %v461, 5
      %v464 = vor.u32 %v460, %v463
      %v465 = vrot.slane %v464, 4
      %v467 = vshll.u32 %v296, 16
      %v469 = vrot.slane %v467, 5
      %v470 = vsel %vm336, %v465, %v469
      %v471 = vshrl.u32 %v296, 16
      %v473 = vrot.slane %v471, 4
      %v474 = vor.u32 %v473, %v469
      %v475 = vrot.slane %v474, 4
      %v477 = vshll.u32 %v297, 16
      %v479 = vrot.slane %v477, 5
      %v480 = vsel %vm336, %v475, %v479
      %v482 = vshrl.u32 %v298, 16
      %v484 = vrot.slane %v482, 4
      %v485 = vshll.u32 %v298, 16
      %v487 = vrot.slane %v485, 5
      %v488 = vor.u32 %v484, %v487
      %v489 = vrot.slane %v488, 4
      %v491 = vshll.u32 %v299, 16
      %v493 = vrot.slane %v491, 5
      %v494 = vsel %vm336, %v489, %v493
      %v495 = vshrl.u32 %v299, 16
      %v497 = vrot.slane %v495, 4
      %v498 = vor.u32 %v497, %v493
      %v499 = vrot.slane %v498, 4
      %v501 = vshll.u32 %v300, 16
      %v503 = vrot.slane %v501, 5
      %v504 = vsel %vm336, %v499, %v503
      %v506 = vshrl.u32 %v301, 16
      %v508 = vrot.slane %v506, 4
      %v509 = vshll.u32 %v301, 16
      %v511 = vrot.slane %v509, 5
      %v512 = vor.u32 %v508, %v511
      %v513 = vrot.slane %v512, 4
      %v515 = vshll.u32 %v302, 16
      %v517 = vrot.slane %v515, 5
      %v518 = vsel %vm336, %v513, %v517
      %v519 = vshrl.u32 %v302, 16
      %v521 = vrot.slane %v519, 4
      %v522 = vor.u32 %v521, %v517
      %v523 = vrot.slane %v522, 4
      %v525 = vshll.u32 %v303, 16
      %v527 = vrot.slane %v525, 5
      %v528 = vsel %vm336, %v523, %v527
      %v530 = vshrl.u32 %v304, 16
      %v532 = vrot.slane %v530, 4
      %v533 = vshll.u32 %v304, 16
      %v535 = vrot.slane %v533, 5
      %v536 = vor.u32 %v532, %v535
      %v537 = vrot.slane %v536, 4
      %v539 = vshll.u32 %v305, 16
      %v541 = vrot.slane %v539, 5
      %v542 = vsel %vm336, %v537, %v541
      %v543 = vshrl.u32 %v305, 16
      %v545 = vrot.slane %v543, 4
      %v546 = vor.u32 %v545, %v541
      %v547 = vrot.slane %v546, 4
      %v549 = vshll.u32 %v306, 16
      %v551 = vrot.slane %v549, 5
      %v552 = vsel %vm336, %v547, %v551
      %v554 = vshrl.u32 %v307, 16
      %v556 = vrot.slane %v554, 4
      %v557 = vshll.u32 %v307, 16
      %v559 = vrot.slane %v557, 5
      %v560 = vor.u32 %v556, %v559
      %v561 = vrot.slane %v560, 4
      %v563 = vshll.u32 %v308, 16
      %v565 = vrot.slane %v563, 5
      %v566 = vsel %vm336, %v561, %v565
      %v567 = vshrl.u32 %v308, 16
      %v569 = vrot.slane %v567, 4
      %v570 = vor.u32 %v569, %v565
      %v571 = vrot.slane %v570, 4
      %v573 = vshll.u32 %v309, 16
      %v575 = vrot.slane %v573, 5
      %v576 = vsel %vm336, %v571, %v575
      %v578 = vshrl.u32 %v310, 16
      %v580 = vrot.slane %v578, 4
      %v581 = vshll.u32 %v310, 16
      %v583 = vrot.slane %v581, 5
      %v584 = vor.u32 %v580, %v583
      %v585 = vrot.slane %v584, 4
      %v587 = vshll.u32 %v311, 16
      %v589 = vrot.slane %v587, 5
      %v590 = vsel %vm336, %v585, %v589
      %v591 = vshrl.u32 %v311, 16
      %v593 = vrot.slane %v591, 4
      %v594 = vor.u32 %v593, %v589
      %v595 = vrot.slane %v594, 4
      %v597 = vshll.u32 %v312, 16
      %v599 = vrot.slane %v597, 5
      %v600 = vsel %vm336, %v595, %v599
      %v602 = vshrl.u32 %v313, 16
      %v604 = vrot.slane %v602, 4
      %v605 = vshll.u32 %v313, 16
      %v607 = vrot.slane %v605, 5
      %v608 = vor.u32 %v604, %v607
      %v609 = vrot.slane %v608, 4
      %v611 = vshll.u32 %v314, 16
      %v613 = vrot.slane %v611, 5
      %v614 = vsel %vm336, %v609, %v613
      %v615 = vshrl.u32 %v314, 16
      %v617 = vrot.slane %v615, 4
      %v618 = vor.u32 %v617, %v613
      %v619 = vrot.slane %v618, 4
      %v621 = vshll.u32 %v315, 16
      %v623 = vrot.slane %v621, 5
      %v624 = vsel %vm336, %v619, %v623
      %v626 = vshrl.u32 %v316, 16
      %v628 = vrot.slane %v626, 4
      %v629 = vshll.u32 %v316, 16
      %v631 = vrot.slane %v629, 5
      %v632 = vor.u32 %v628, %v631
      %v633 = vrot.slane %v632, 4
      %v635 = vshll.u32 %v317, 16
      %v637 = vrot.slane %v635, 5
      %v638 = vsel %vm336, %v633, %v637
      %v639 = vshrl.u32 %v317, 16
      %v641 = vrot.slane %v639, 4
      %v642 = vor.u32 %v641, %v637
      %v643 = vrot.slane %v642, 4
      %v645 = vshll.u32 %v318, 16
      %v647 = vrot.slane %v645, 5
      %v648 = vsel %vm336, %v643, %v647
      %v650 = vshrl.u32 %v319, 16
      %v652 = vrot.slane %v650, 4
      %v653 = vshll.u32 %v319, 16
      %v655 = vrot.slane %v653, 5
      %v656 = vor.u32 %v652, %v655
      %v657 = vrot.slane %v656, 4
      %v659 = vshll.u32 %v320, 16
      %v661 = vrot.slane %v659, 5
      %v662 = vsel %vm336, %v657, %v661
      %v663 = vshrl.u32 %v320, 16
      %v665 = vrot.slane %v663, 4
      %v666 = vor.u32 %v665, %v661
      %v667 = vrot.slane %v666, 4
      %v669 = vshll.u32 %v321, 16
      %v671 = vrot.slane %v669, 5
      %v672 = vsel %vm336, %v667, %v671
      %v674 = vshrl.u32 %v322, 16
      %v676 = vrot.slane %v674, 4
      %v677 = vshll.u32 %v322, 16
      %v679 = vrot.slane %v677, 5
      %v680 = vor.u32 %v676, %v679
      %v681 = vrot.slane %v680, 4
      %v683 = vshll.u32 %v323, 16
      %v685 = vrot.slane %v683, 5
      %v686 = vsel %vm336, %v681, %v685
      %v687 = vshrl.u32 %v323, 16
      %v689 = vrot.slane %v687, 4
      %v690 = vor.u32 %v689, %v685
      %v691 = vrot.slane %v690, 4
      %v693 = vshll.u32 %v324, 16
      %v695 = vrot.slane %v693, 5
      %v696 = vsel %vm336, %v691, %v695
      %v698 = vshrl.u32 %v325, 16
      %v700 = vrot.slane %v698, 4
      %v701 = vshll.u32 %v325, 16
      %v703 = vrot.slane %v701, 5
      %v704 = vor.u32 %v700, %v703
      %v705 = vrot.slane %v704, 4
      %v707 = vshll.u32 %v326, 16
      %v709 = vrot.slane %v707, 5
      %v710 = vsel %vm336, %v705, %v709
      %v711 = vshrl.u32 %v326, 16
      %v713 = vrot.slane %v711, 4
      %v714 = vor.u32 %v713, %v709
      %v715 = vrot.slane %v714, 4
      %v717 = vshll.u32 %v327, 16
      %v719 = vrot.slane %v717, 5
      %v720 = vsel %vm336, %v715, %v719
      %vm769 = vcmask 1042432
      %vm770 = vcmask 1046532
      %vm771 = vmor %vm769, %vm770
      %v772 = vrot.slane %v280, 5
      %v773 = vrot.slane %v772, 4
      %v774 = vrot.slane %v281, 5
      %v775 = vsel %vm771, %v773, %v774
      %v776 = vrot.slane %v774, 4
      %v777 = vrot.slane %v282, 5
      %v778 = vsel %vm771, %v776, %v777
      %v779 = vrot.slane %v283, 5
      %v780 = vrot.slane %v779, 4
      %v781 = vrot.slane %v284, 5
      %v782 = vsel %vm771, %v780, %v781
      %v783 = vrot.slane %v781, 4
      %v784 = vrot.slane %v285, 5
      %v785 = vsel %vm771, %v783, %v784
      %v786 = vrot.slane %v286, 5
      %v787 = vrot.slane %v786, 4
      %v788 = vrot.slane %v287, 5
      %v789 = vsel %vm771, %v787, %v788
      %v790 = vrot.slane %v788, 4
      %v791 = vrot.slane %v288, 5
      %v792 = vsel %vm771, %v790, %v791
      %v793 = vrot.slane %v289, 5
      %v794 = vrot.slane %v793, 4
      %v795 = vrot.slane %v290, 5
      %v796 = vsel %vm771, %v794, %v795
      %v797 = vrot.slane %v795, 4
      %v798 = vrot.slane %v291, 5
      %v799 = vsel %vm771, %v797, %v798
      %v800 = vrot.slane %v292, 5
      %v801 = vrot.slane %v800, 4
      %v802 = vrot.slane %v293, 5
      %v803 = vsel %vm771, %v801, %v802
      %v804 = vrot.slane %v802, 4
      %v805 = vrot.slane %v294, 5
      %v806 = vsel %vm771, %v804, %v805
      %v807 = vrot.slane %v295, 5
      %v808 = vrot.slane %v807, 4
      %v809 = vrot.slane %v296, 5
      %v810 = vsel %vm771, %v808, %v809
      %v811 = vrot.slane %v809, 4
      %v812 = vrot.slane %v297, 5
      %v813 = vsel %vm771, %v811, %v812
      %v814 = vrot.slane %v298, 5
      %v815 = vrot.slane %v814, 4
      %v816 = vrot.slane %v299, 5
      %v817 = vsel %vm771, %v815, %v816
      %v818 = vrot.slane %v816, 4
      %v819 = vrot.slane %v300, 5
      %v820 = vsel %vm771, %v818, %v819
      %v821 = vrot.slane %v301, 5
      %v822 = vrot.slane %v821, 4
      %v823 = vrot.slane %v302, 5
      %v824 = vsel %vm771, %v822, %v823
      %v825 = vrot.slane %v823, 4
      %v826 = vrot.slane %v303, 5
      %v827 = vsel %vm771, %v825, %v826
      %v828 = vrot.slane %v304, 5
      %v829 = vrot.slane %v828, 4
      %v830 = vrot.slane %v305, 5
      %v831 = vsel %vm771, %v829, %v830
      %v832 = vrot.slane %v830, 4
      %v833 = vrot.slane %v306, 5
      %v834 = vsel %vm771, %v832, %v833
      %v835 = vrot.slane %v307, 5
      %v836 = vrot.slane %v835, 4
      %v837 = vrot.slane %v308, 5
      %v838 = vsel %vm771, %v836, %v837
      %v839 = vrot.slane %v837, 4
      %v840 = vrot.slane %v309, 5
      %v841 = vsel %vm771, %v839, %v840
      %v842 = vrot.slane %v310, 5
      %v843 = vrot.slane %v842, 4
      %v844 = vrot.slane %v311, 5
      %v845 = vsel %vm771, %v843, %v844
      %v846 = vrot.slane %v844, 4
      %v847 = vrot.slane %v312, 5
      %v848 = vsel %vm771, %v846, %v847
      %v849 = vrot.slane %v313, 5
      %v850 = vrot.slane %v849, 4
      %v851 = vrot.slane %v314, 5
      %v852 = vsel %vm771, %v850, %v851
      %v853 = vrot.slane %v851, 4
      %v854 = vrot.slane %v315, 5
      %v855 = vsel %vm771, %v853, %v854
      %v856 = vrot.slane %v316, 5
      %v857 = vrot.slane %v856, 4
      %v858 = vrot.slane %v317, 5
      %v859 = vsel %vm771, %v857, %v858
      %v860 = vrot.slane %v858, 4
      %v861 = vrot.slane %v318, 5
      %v862 = vsel %vm771, %v860, %v861
      %v863 = vrot.slane %v319, 5
      %v864 = vrot.slane %v863, 4
      %v865 = vrot.slane %v320, 5
      %v866 = vsel %vm771, %v864, %v865
      %v867 = vrot.slane %v865, 4
      %v868 = vrot.slane %v321, 5
      %v869 = vsel %vm771, %v867, %v868
      %v870 = vrot.slane %v322, 5
      %v871 = vrot.slane %v870, 4
      %v872 = vrot.slane %v323, 5
      %v873 = vsel %vm771, %v871, %v872
      %v874 = vrot.slane %v872, 4
      %v875 = vrot.slane %v324, 5
      %v876 = vsel %vm771, %v874, %v875
      %v877 = vrot.slane %v325, 5
      %v878 = vrot.slane %v877, 4
      %v879 = vrot.slane %v326, 5
      %v880 = vsel %vm771, %v878, %v879
      %v881 = vrot.slane %v879, 4
      %v882 = vrot.slane %v327, 5
      %v883 = vsel %vm771, %v881, %v882
      %v885 = vshrl.u32 %v328, 16
      %v887 = vrot.slane %v885, 4
      %v888 = vshll.u32 %v328, 16
      %v890 = vrot.slane %v888, 5
      %v891 = vor.u32 %v887, %v890
      %v892 = vrot.slane %v891, 4
      %v894 = vshll.u32 %v329, 16
      %v896 = vrot.slane %v894, 5
      %v897 = vsel %vm336, %v892, %v896
      %v898 = vshrl.u32 %v329, 16
      %v900 = vrot.slane %v898, 4
      %v901 = vor.u32 %v900, %v896
      %v902 = vrot.slane %v901, 4
      %v904 = vshll.u32 %v330, 16
      %v906 = vrot.slane %v904, 5
      %v907 = vsel %vm336, %v902, %v906
      %v911 = vrot.slane %v328, 5
      %v912 = vrot.slane %v911, 4
      %v913 = vrot.slane %v329, 5
      %v914 = vsel %vm771, %v912, %v913
      %v915 = vrot.slane %v913, 4
      %v916 = vrot.slane %v330, 5
      %v917 = vsel %vm771, %v915, %v916
      %v919 = vshrl.u32 %v331, 16
      %v921 = vrot.slane %v919, 4
      %v922 = vshll.u32 %v331, 16
      %v924 = vrot.slane %v922, 5
      %v925 = vor.u32 %v921, %v924
      %v926 = vrot.slane %v925, 4
      %v928 = vshll.u32 %v332, 16
      %v930 = vrot.slane %v928, 5
      %v931 = vsel %vm336, %v926, %v930
      %v932 = vshrl.u32 %v332, 16
      %v934 = vrot.slane %v932, 4
      %v935 = vor.u32 %v934, %v930
      %v936 = vrot.slane %v935, 4
      %v938 = vshll.u32 %v333, 16
      %v940 = vrot.slane %v938, 5
      %v941 = vsel %vm336, %v936, %v940
      %v945 = vrot.slane %v331, 5
      %v946 = vrot.slane %v945, 4
      %v947 = vrot.slane %v332, 5
      %v948 = vsel %vm771, %v946, %v947
      %v949 = vrot.slane %v947, 4
      %v950 = vrot.slane %v333, 5
      %v951 = vsel %vm771, %v949, %v950
      %v952 = vunpack.c.l.b16 %v280
      %v953 = vunpack.c.l.b16 %v281
      %v954 = vunpack.c.l.b16 %v283
      %v955 = vunpack.c.l.b16 %v284
      %v956 = vunpack.c.l.b16 %v286
      %v957 = vunpack.c.l.b16 %v287
      %v958 = vunpack.c.l.b16 %v289
      %v959 = vunpack.c.l.b16 %v290
      %v960 = vunpack.c.l.b16 %v292
      %v961 = vunpack.c.l.b16 %v293
      %v962 = vunpack.c.l.b16 %v295
      %v963 = vunpack.c.l.b16 %v296
      %v964 = vunpack.c.l.b16 %v298
      %v965 = vunpack.c.l.b16 %v299
      %v966 = vunpack.c.l.b16 %v301
      %v967 = vunpack.c.l.b16 %v302
      %v968 = vunpack.c.l.b16 %v304
      %v969 = vunpack.c.l.b16 %v305
      %v970 = vunpack.c.l.b16 %v307
      %v971 = vunpack.c.l.b16 %v308
      %v972 = vunpack.c.l.b16 %v310
      %v973 = vunpack.c.l.b16 %v311
      %v974 = vunpack.c.l.b16 %v313
      %v975 = vunpack.c.l.b16 %v314
      %v976 = vunpack.c.l.b16 %v316
      %v977 = vunpack.c.l.b16 %v317
      %v978 = vunpack.c.l.b16 %v319
      %v979 = vunpack.c.l.b16 %v320
      %v980 = vunpack.c.l.b16 %v322
      %v981 = vunpack.c.l.b16 %v323
      %v982 = vunpack.c.l.b16 %v325
      %v983 = vunpack.c.l.b16 %v326
      %v984 = vpack.c.b16 %v953, %v952
      %v985 = vpack.c.b16 %v955, %v954
      %v986 = vpack.c.b16 %v957, %v956
      %v987 = vpack.c.b16 %v959, %v958
      %v988 = vpack.c.b16 %v961, %v960
      %v989 = vpack.c.b16 %v963, %v962
      %v990 = vpack.c.b16 %v965, %v964
      %v991 = vpack.c.b16 %v967, %v966
      %v992 = vpack.c.b16 %v969, %v968
      %v993 = vpack.c.b16 %v971, %v970
      %v994 = vpack.c.b16 %v973, %v972
      %v995 = vpack.c.b16 %v975, %v974
      %v996 = vpack.c.b16 %v977, %v976
      %v997 = vpack.c.b16 %v979, %v978
      %v998 = vpack.c.b16 %v981, %v980
      %v999 = vpack.c.b16 %v983, %v982
      %v1016 = vunpack.c.l.b16 %v350
      %v1017 = vunpack.c.l.b16 %v360
      %v1018 = vunpack.c.l.b16 %v374
      %v1019 = vunpack.c.l.b16 %v384
      %v1020 = vunpack.c.l.b16 %v398
      %v1021 = vunpack.c.l.b16 %v408
      %v1022 = vunpack.c.l.b16 %v422
      %v1023 = vunpack.c.l.b16 %v432
      %v1024 = vunpack.c.l.b16 %v446
      %v1025 = vunpack.c.l.b16 %v456
      %v1026 = vunpack.c.l.b16 %v470
      %v1027 = vunpack.c.l.b16 %v480
      %v1028 = vunpack.c.l.b16 %v494
      %v1029 = vunpack.c.l.b16 %v504
      %v1030 = vunpack.c.l.b16 %v518
      %v1031 = vunpack.c.l.b16 %v528
      %v1032 = vunpack.c.l.b16 %v542
      %v1033 = vunpack.c.l.b16 %v552
      %v1034 = vunpack.c.l.b16 %v566
      %v1035 = vunpack.c.l.b16 %v576
      %v1036 = vunpack.c.l.b16 %v590
      %v1037 = vunpack.c.l.b16 %v600
      %v1038 = vunpack.c.l.b16 %v614
      %v1039 = vunpack.c.l.b16 %v624
      %v1040 = vunpack.c.l.b16 %v638
      %v1041 = vunpack.c.l.b16 %v648
      %v1042 = vunpack.c.l.b16 %v662
      %v1043 = vunpack.c.l.b16 %v672
      %v1044 = vunpack.c.l.b16 %v686
      %v1045 = vunpack.c.l.b16 %v696
      %v1046 = vunpack.c.l.b16 %v710
      %v1047 = vunpack.c.l.b16 %v720
      %v1048 = vpack.c.b16 %v1017, %v1016
      %v1049 = vpack.c.b16 %v1019, %v1018
      %v1050 = vpack.c.b16 %v1021, %v1020
      %v1051 = vpack.c.b16 %v1023, %v1022
      %v1052 = vpack.c.b16 %v1025, %v1024
      %v1053 = vpack.c.b16 %v1027, %v1026
      %v1054 = vpack.c.b16 %v1029, %v1028
      %v1055 = vpack.c.b16 %v1031, %v1030
      %v1056 = vpack.c.b16 %v1033, %v1032
      %v1057 = vpack.c.b16 %v1035, %v1034
      %v1058 = vpack.c.b16 %v1037, %v1036
      %v1059 = vpack.c.b16 %v1039, %v1038
      %v1060 = vpack.c.b16 %v1041, %v1040
      %v1061 = vpack.c.b16 %v1043, %v1042
      %v1062 = vpack.c.b16 %v1045, %v1044
      %v1063 = vpack.c.b16 %v1047, %v1046
      %v1080 = vunpack.c.l.b16 %v775
      %v1081 = vunpack.c.l.b16 %v778
      %v1082 = vunpack.c.l.b16 %v782
      %v1083 = vunpack.c.l.b16 %v785
      %v1084 = vunpack.c.l.b16 %v789
      %v1085 = vunpack.c.l.b16 %v792
      %v1086 = vunpack.c.l.b16 %v796
      %v1087 = vunpack.c.l.b16 %v799
      %v1088 = vunpack.c.l.b16 %v803
      %v1089 = vunpack.c.l.b16 %v806
      %v1090 = vunpack.c.l.b16 %v810
      %v1091 = vunpack.c.l.b16 %v813
      %v1092 = vunpack.c.l.b16 %v817
      %v1093 = vunpack.c.l.b16 %v820
      %v1094 = vunpack.c.l.b16 %v824
      %v1095 = vunpack.c.l.b16 %v827
      %v1096 = vunpack.c.l.b16 %v831
      %v1097 = vunpack.c.l.b16 %v834
      %v1098 = vunpack.c.l.b16 %v838
      %v1099 = vunpack.c.l.b16 %v841
      %v1100 = vunpack.c.l.b16 %v845
      %v1101 = vunpack.c.l.b16 %v848
      %v1102 = vunpack.c.l.b16 %v852
      %v1103 = vunpack.c.l.b16 %v855
      %v1104 = vunpack.c.l.b16 %v859
      %v1105 = vunpack.c.l.b16 %v862
      %v1106 = vunpack.c.l.b16 %v866
      %v1107 = vunpack.c.l.b16 %v869
      %v1108 = vunpack.c.l.b16 %v873
      %v1109 = vunpack.c.l.b16 %v876
      %v1110 = vunpack.c.l.b16 %v880
      %v1111 = vunpack.c.l.b16 %v883
      %v1112 = vpack.c.b16 %v1081, %v1080
      %v1113 = vpack.c.b16 %v1083, %v1082
      %v1114 = vpack.c.b16 %v1085, %v1084
      %v1115 = vpack.c.b16 %v1087, %v1086
      %v1116 = vpack.c.b16 %v1089, %v1088
      %v1117 = vpack.c.b16 %v1091, %v1090
      %v1118 = vpack.c.b16 %v1093, %v1092
      %v1119 = vpack.c.b16 %v1095, %v1094
      %v1120 = vpack.c.b16 %v1097, %v1096
      %v1121 = vpack.c.b16 %v1099, %v1098
      %v1122 = vpack.c.b16 %v1101, %v1100
      %v1123 = vpack.c.b16 %v1103, %v1102
      %v1124 = vpack.c.b16 %v1105, %v1104
      %v1125 = vpack.c.b16 %v1107, %v1106
      %v1126 = vpack.c.b16 %v1109, %v1108
      %v1127 = vpack.c.b16 %v1111, %v1110
      %v1144 = vunpack.c.l.b16 %v328
      %v1145 = vunpack.c.l.b16 %v329
      %v1146 = vpack.c.b16 %v1145, %v1144
      %v1148 = vunpack.c.l.b16 %v897
      %v1149 = vunpack.c.l.b16 %v907
      %v1150 = vpack.c.b16 %v1149, %v1148
      %v1152 = vunpack.c.l.b16 %v914
      %v1153 = vunpack.c.l.b16 %v917
      %v1154 = vpack.c.b16 %v1153, %v1152
      %v1156 = vunpack.c.l.b16 %v331
      %v1157 = vunpack.c.l.b16 %v332
      %v1158 = vpack.c.b16 %v1157, %v1156
      %v1160 = vunpack.c.l.b16 %v931
      %v1161 = vunpack.c.l.b16 %v941
      %v1162 = vpack.c.b16 %v1161, %v1160
      %v1164 = vunpack.c.l.b16 %v948
      %v1165 = vunpack.c.l.b16 %v951
      %v1166 = vpack.c.b16 %v1165, %v1164
      %v1168 = vld [vmem:[%s1] sm:$0xf]
      %v1169 = vld [vmem:[%s1 + $0x4] sm:$0xf]
      %v1170 = vld [vmem:[%s1 + $0x8] sm:$0xf]
      %v1171 = vld [vmem:[%s1 + $0xc] sm:$0xf]
      %v1172 = vld [vmem:[%s1 + $0x10] sm:$0xf]
      %v1173 = vld [vmem:[%s1 + $0x14] sm:$0xf]
      %v1174 = vld [vmem:[%s1 + $0x18] sm:$0xf]
      %v1175 = vld [vmem:[%s1 + $0x1c] sm:$0xf]
      %v1176 = vld [vmem:[%s1 + $0x20] sm:$0xf]
      %v1177 = vld [vmem:[%s1 + $0x24] sm:$0xf]
      %v1178 = vld [vmem:[%s1 + $0x28] sm:$0xf]
      %v1179 = vld [vmem:[%s1 + $0x2c] sm:$0xf]
      %v1180 = vld [vmem:[%s1 + $0x30] sm:$0xf]
      %v1181 = vld [vmem:[%s1 + $0x34] sm:$0xf]
      %v1182 = vld [vmem:[%s1 + $0x38] sm:$0xf]
      %v1183 = vld [vmem:[%s1 + $0x3c] sm:$0xf]
      %v1184 = vld [vmem:[%s1 + $0x40] sm:$0xf]
      %v1185 = vld [vmem:[%s1 + $0x44] sm:$0xf]
      %v1186 = vld [vmem:[%s1 + $0x48] sm:$0xf]
      %v1187 = vld [vmem:[%s1 + $0x4c] sm:$0xf]
      %v1188 = vld [vmem:[%s1 + $0x50] sm:$0xf]
      %v1189 = vld [vmem:[%s1 + $0x54] sm:$0xf]
      %v1190 = vld [vmem:[%s1 + $0x58] sm:$0xf]
      %v1191 = vld [vmem:[%s1 + $0x5c] sm:$0xf]
      %v1192 = vld [vmem:[%s1 + $0x60] sm:$0xf]
      %v1193 = vld [vmem:[%s1 + $0x64] sm:$0xf]
      %v1194 = vld [vmem:[%s1 + $0x68] sm:$0xf]
      %v1195 = vld [vmem:[%s1 + $0x6c] sm:$0xf]
      %v1196 = vld [vmem:[%s1 + $0x70] sm:$0xf]
      %v1197 = vld [vmem:[%s1 + $0x74] sm:$0xf]
      %v1198 = vld [vmem:[%s1 + $0x78] sm:$0xf]
      %v1199 = vld [vmem:[%s1 + $0x7c] sm:$0xf]
      %v1200 = vld [vmem:[%s1 + $0x80] sm:$0xf]
      %v1201 = vld [vmem:[%s1 + $0x84] sm:$0xf]
      %v1202 = vld [vmem:[%s1 + $0x88] sm:$0xf]
      %v1203 = vld [vmem:[%s1 + $0x8c] sm:$0xf]
      %v1204 = vld [vmem:[%s1 + $0x90] sm:$0xf]
      %v1205 = vld [vmem:[%s1 + $0x94] sm:$0xf]
      %v1206 = vld [vmem:[%s1 + $0x98] sm:$0xf]
      %v1207 = vld [vmem:[%s1 + $0x9c] sm:$0xf]
      %v1208 = vld [vmem:[%s1 + $0xa0] sm:$0xf]
      %v1209 = vld [vmem:[%s1 + $0xa4] sm:$0xf]
      %v1210 = vld [vmem:[%s1 + $0xa8] sm:$0xf]
      %v1211 = vld [vmem:[%s1 + $0xac] sm:$0xf]
      %v1212 = vld [vmem:[%s1 + $0xb0] sm:$0xf]
      %v1213 = vld [vmem:[%s1 + $0xb4] sm:$0xf]
      %v1214 = vld [vmem:[%s1 + $0xb8] sm:$0xf]
      %v1215 = vld [vmem:[%s1 + $0xbc] sm:$0xf]
      %v1216 = vld [vmem:[%s1 + $0xc0] sm:$0xf]
      %v1217 = vld [vmem:[%s1 + $0xc4] sm:$0xf]
      %v1218 = vld [vmem:[%s1 + $0xc8] sm:$0xf]
      %v1219 = vld [vmem:[%s1 + $0xcc] sm:$0xf]
      %v1220 = vld [vmem:[%s1 + $0xd0] sm:$0xf]
      %v1221 = vld [vmem:[%s1 + $0xd4] sm:$0xf]
      %v1222 = vld [vmem:[%s1 + $0xd8] sm:$0xf]
      %v1223 = vld [vmem:[%s1 + $0xdc] sm:$0xf]
      %v1224 = vld [vmem:[%s1 + $0xe0] sm:$0xf]
      %v1225 = vld [vmem:[%s1 + $0xe4] sm:$0xf]
      %v1226 = vld [vmem:[%s1 + $0xe8] sm:$0xf]
      %v1227 = vld [vmem:[%s1 + $0xec] sm:$0xf]
      %v1228 = vld [vmem:[%s1 + $0xf0] sm:$0xf]
      %v1229 = vld [vmem:[%s1 + $0xf4] sm:$0xf]
      %v1230 = vld [vmem:[%s1 + $0xf8] sm:$0xf]
      %v1231 = vld [vmem:[%s1 + $0xfc] sm:$0xf]
      %v1232 = vld [vmem:[%s1 + $0x100] sm:$0xf]
      %v1233 = vld [vmem:[%s1 + $0x104] sm:$0xf]
      %v1234 = vld [vmem:[%s1 + $0x108] sm:$0xf]
      %v1235 = vld [vmem:[%s1 + $0x10c] sm:$0xf]
      %v1236 = vld [vmem:[%s1 + $0x110] sm:$0xf]
      %v1237 = vld [vmem:[%s1 + $0x114] sm:$0xf]
      %v1238 = vld [vmem:[%s1 + $0x118] sm:$0xf]
      %v1239 = vld [vmem:[%s1 + $0x11c] sm:$0xf]
      %v1240 = vld [vmem:[%s1 + $0x120] sm:$0xf]
      %v1241 = vld [vmem:[%s1 + $0x124] sm:$0xf]
      %v1242 = vld [vmem:[%s1 + $0x128] sm:$0xf]
      %v1243 = vld [vmem:[%s1 + $0x12c] sm:$0xf]
      %v1244 = vld [vmem:[%s1 + $0x130] sm:$0xf]
      %v1245 = vld [vmem:[%s1 + $0x134] sm:$0xf]
      %v1246 = vld [vmem:[%s1 + $0x138] sm:$0xf]
      %v1247 = vld [vmem:[%s1 + $0x13c] sm:$0xf]
      %v1248 = vld [vmem:[%s1 + $0x140] sm:$0xf]
      %v1249 = vld [vmem:[%s1 + $0x144] sm:$0xf]
      %v1250 = vld [vmem:[%s1 + $0x148] sm:$0xf]
      %v1251 = vld [vmem:[%s1 + $0x14c] sm:$0xf]
      %v1252 = vld [vmem:[%s1 + $0x150] sm:$0xf]
      %v1253 = vld [vmem:[%s1 + $0x154] sm:$0xf]
      %v1254 = vld [vmem:[%s1 + $0x158] sm:$0xf]
      %v1255 = vld [vmem:[%s1 + $0x15c] sm:$0xf]
      %v1256 = vld [vmem:[%s1 + $0x160] sm:$0xf]
      %v1257 = vld [vmem:[%s1 + $0x164] sm:$0xf]
      %v1258 = vld [vmem:[%s1 + $0x168] sm:$0xf]
      %v1259 = vld [vmem:[%s1 + $0x16c] sm:$0xf]
      %v1260 = vld [vmem:[%s1 + $0x170] sm:$0xf]
      %v1261 = vld [vmem:[%s1 + $0x174] sm:$0xf]
      %v1262 = vld [vmem:[%s1 + $0x178] sm:$0xf]
      %v1263 = vld [vmem:[%s1 + $0x17c] sm:$0xf]
      %v1264 = vld [vmem:[%s1 + $0x180] sm:$0xf]
      %v1265 = vld [vmem:[%s1 + $0x184] sm:$0xf]
      %v1266 = vld [vmem:[%s1 + $0x188] sm:$0xf]
      %v1267 = vld [vmem:[%s1 + $0x18c] sm:$0xf]
      %v1268 = vld [vmem:[%s1 + $0x190] sm:$0xf]
      %v1269 = vld [vmem:[%s1 + $0x194] sm:$0xf]
      %v1270 = vld [vmem:[%s1 + $0x198] sm:$0xf]
      %v1271 = vld [vmem:[%s1 + $0x19c] sm:$0xf]
      %v1272 = vld [vmem:[%s1 + $0x1a0] sm:$0xf]
      %v1273 = vld [vmem:[%s1 + $0x1a4] sm:$0xf]
      %v1274 = vld [vmem:[%s1 + $0x1a8] sm:$0xf]
      %v1275 = vld [vmem:[%s1 + $0x1ac] sm:$0xf]
      %v1276 = vld [vmem:[%s1 + $0x1b0] sm:$0xf]
      %v1277 = vld [vmem:[%s1 + $0x1b4] sm:$0xf]
      %v1278 = vld [vmem:[%s1 + $0x1b8] sm:$0xf]
      %v1279 = vld [vmem:[%s1 + $0x1bc] sm:$0xf]
      %v1280 = vld [vmem:[%s1 + $0x1c0] sm:$0xf]
      %v1281 = vld [vmem:[%s1 + $0x1c4] sm:$0xf]
      %v1282 = vld [vmem:[%s1 + $0x1c8] sm:$0xf]
      %v1283 = vld [vmem:[%s1 + $0x1cc] sm:$0xf]
      %v1284 = vld [vmem:[%s1 + $0x1d0] sm:$0xf]
      %v1285 = vld [vmem:[%s1 + $0x1d4] sm:$0xf]
      %v1286 = vld [vmem:[%s1 + $0x1d8] sm:$0xf]
      %v1287 = vld [vmem:[%s1 + $0x1dc] sm:$0xf]
      %v1288 = vld [vmem:[%s1 + $0x1e0] sm:$0xf]
      %v1289 = vld [vmem:[%s1 + $0x1e4] sm:$0xf]
      %v1290 = vld [vmem:[%s1 + $0x1e8] sm:$0xf]
      %v1291 = vld [vmem:[%s1 + $0x1ec] sm:$0xf]
      %v1292 = vld [vmem:[%s1 + $0x1f0] sm:$0xf]
      %v1293 = vld [vmem:[%s1 + $0x1f4] sm:$0xf]
      %v1294 = vld [vmem:[%s1 + $0x1f8] sm:$0xf]
      %v1295 = vld [vmem:[%s1 + $0x1fc] sm:$0xf]
      %v1296 = vld [vmem:[%s1 + $0x200] sm:$0xf]
      %v1297 = vld [vmem:[%s1 + $0x204] sm:$0xf]
      %v1298 = vld [vmem:[%s1 + $0x208] sm:$0xf]
      %v1299 = vld [vmem:[%s1 + $0x20c] sm:$0xf]
      %v1300 = vld [vmem:[%s1 + $0x210] sm:$0xf]
      %v1301 = vld [vmem:[%s1 + $0x214] sm:$0xf]
      %v1302 = vld [vmem:[%s1 + $0x218] sm:$0xf]
      %v1303 = vld [vmem:[%s1 + $0x21c] sm:$0xf]
      %v1304 = vld [vmem:[%s1 + $0x220] sm:$0xf]
      %v1305 = vld [vmem:[%s1 + $0x224] sm:$0xf]
      %v1306 = vld [vmem:[%s1 + $0x228] sm:$0xf]
      %v1307 = vld [vmem:[%s1 + $0x22c] sm:$0xf]
      %v1308 = vld [vmem:[%s1 + $0x230] sm:$0xf]
      %v1309 = vld [vmem:[%s1 + $0x234] sm:$0xf]
      %v1310 = vld [vmem:[%s1 + $0x238] sm:$0xf]
      %v1311 = vld [vmem:[%s1 + $0x23c] sm:$0xf]
      %v1456 = vunpack.c.l.b16 %v1168
      %v1457 = vunpack.c.l.b16 %v1169
      %v1458 = vunpack.c.l.b16 %v1170
      %v1459 = vunpack.c.l.b16 %v1171
      %v1460 = vunpack.c.l.b16 %v1172
      %v1461 = vunpack.c.l.b16 %v1173
      %v1462 = vunpack.c.l.b16 %v1174
      %v1463 = vunpack.c.l.b16 %v1175
      %v1464 = vunpack.c.l.b16 %v1176
      %v1465 = vunpack.c.l.b16 %v1177
      %v1466 = vunpack.c.l.b16 %v1178
      %v1467 = vunpack.c.l.b16 %v1179
      %v1468 = vunpack.c.l.b16 %v1180
      %v1469 = vunpack.c.l.b16 %v1181
      %v1470 = vunpack.c.l.b16 %v1182
      %v1471 = vunpack.c.l.b16 %v1183
      %v1472 = vunpack.c.l.b16 %v1184
      %v1473 = vunpack.c.l.b16 %v1185
      %v1474 = vunpack.c.l.b16 %v1186
      %v1475 = vunpack.c.l.b16 %v1187
      %v1476 = vunpack.c.l.b16 %v1188
      %v1477 = vunpack.c.l.b16 %v1189
      %v1478 = vunpack.c.l.b16 %v1190
      %v1479 = vunpack.c.l.b16 %v1191
      %v1480 = vunpack.c.l.b16 %v1192
      %v1481 = vunpack.c.l.b16 %v1193
      %v1482 = vunpack.c.l.b16 %v1194
      %v1483 = vunpack.c.l.b16 %v1195
      %v1484 = vunpack.c.l.b16 %v1196
      %v1485 = vunpack.c.l.b16 %v1197
      %v1486 = vunpack.c.l.b16 %v1198
      %v1487 = vunpack.c.l.b16 %v1199
      %v1488 = vunpack.c.l.b16 %v1200
      %v1489 = vunpack.c.l.b16 %v1201
      %v1490 = vunpack.c.l.b16 %v1202
      %v1491 = vunpack.c.l.b16 %v1203
      %v1492 = vunpack.c.l.b16 %v1204
      %v1493 = vunpack.c.l.b16 %v1205
      %v1494 = vunpack.c.l.b16 %v1206
      %v1495 = vunpack.c.l.b16 %v1207
      %v1496 = vunpack.c.l.b16 %v1208
      %v1497 = vunpack.c.l.b16 %v1209
      %v1498 = vunpack.c.l.b16 %v1210
      %v1499 = vunpack.c.l.b16 %v1211
      %v1500 = vunpack.c.l.b16 %v1212
      %v1501 = vunpack.c.l.b16 %v1213
      %v1502 = vunpack.c.l.b16 %v1214
      %v1503 = vunpack.c.l.b16 %v1215
      %v1504 = vunpack.c.l.b16 %v1216
      %v1505 = vunpack.c.l.b16 %v1217
      %v1506 = vunpack.c.l.b16 %v1218
      %v1507 = vunpack.c.l.b16 %v1219
      %v1508 = vunpack.c.l.b16 %v1220
      %v1509 = vunpack.c.l.b16 %v1221
      %v1510 = vunpack.c.l.b16 %v1222
      %v1511 = vunpack.c.l.b16 %v1223
      %v1512 = vunpack.c.l.b16 %v1224
      %v1513 = vunpack.c.l.b16 %v1225
      %v1514 = vunpack.c.l.b16 %v1226
      %v1515 = vunpack.c.l.b16 %v1227
      %v1516 = vunpack.c.l.b16 %v1228
      %v1517 = vunpack.c.l.b16 %v1229
      %v1518 = vunpack.c.l.b16 %v1230
      %v1519 = vunpack.c.l.b16 %v1231
      %v1520 = vunpack.c.l.b16 %v1232
      %v1521 = vunpack.c.l.b16 %v1233
      %v1522 = vunpack.c.l.b16 %v1234
      %v1523 = vunpack.c.l.b16 %v1235
      %v1524 = vunpack.c.l.b16 %v1236
      %v1525 = vunpack.c.l.b16 %v1237
      %v1526 = vunpack.c.l.b16 %v1238
      %v1527 = vunpack.c.l.b16 %v1239
      %v1528 = vunpack.c.l.b16 %v1240
      %v1529 = vunpack.c.l.b16 %v1241
      %v1530 = vunpack.c.l.b16 %v1242
      %v1531 = vunpack.c.l.b16 %v1243
      %v1532 = vunpack.c.l.b16 %v1244
      %v1533 = vunpack.c.l.b16 %v1245
      %v1534 = vunpack.c.l.b16 %v1246
      %v1535 = vunpack.c.l.b16 %v1247
      %v1536 = vunpack.c.l.b16 %v1248
      %v1537 = vunpack.c.l.b16 %v1249
      %v1538 = vunpack.c.l.b16 %v1250
      %v1539 = vunpack.c.l.b16 %v1251
      %v1540 = vunpack.c.l.b16 %v1252
      %v1541 = vunpack.c.l.b16 %v1253
      %v1542 = vunpack.c.l.b16 %v1254
      %v1543 = vunpack.c.l.b16 %v1255
      %v1544 = vunpack.c.l.b16 %v1256
      %v1545 = vunpack.c.l.b16 %v1257
      %v1546 = vunpack.c.l.b16 %v1258
      %v1547 = vunpack.c.l.b16 %v1259
      %v1548 = vunpack.c.l.b16 %v1260
      %v1549 = vunpack.c.l.b16 %v1261
      %v1550 = vunpack.c.l.b16 %v1262
      %v1551 = vunpack.c.l.b16 %v1263
      %v1552 = vunpack.c.l.b16 %v1264
      %v1553 = vunpack.c.l.b16 %v1265
      %v1554 = vunpack.c.l.b16 %v1266
      %v1555 = vunpack.c.l.b16 %v1267
      %v1556 = vunpack.c.l.b16 %v1268
      %v1557 = vunpack.c.l.b16 %v1269
      %v1558 = vunpack.c.l.b16 %v1270
      %v1559 = vunpack.c.l.b16 %v1271
      %v1560 = vunpack.c.l.b16 %v1272
      %v1561 = vunpack.c.l.b16 %v1273
      %v1562 = vunpack.c.l.b16 %v1274
      %v1563 = vunpack.c.l.b16 %v1275
      %v1564 = vunpack.c.l.b16 %v1276
      %v1565 = vunpack.c.l.b16 %v1277
      %v1566 = vunpack.c.l.b16 %v1278
      %v1567 = vunpack.c.l.b16 %v1279
      %v1568 = vunpack.c.l.b16 %v1280
      %v1569 = vunpack.c.l.b16 %v1281
      %v1570 = vunpack.c.l.b16 %v1282
      %v1571 = vunpack.c.l.b16 %v1283
      %v1572 = vunpack.c.l.b16 %v1284
      %v1573 = vunpack.c.l.b16 %v1285
      %v1574 = vunpack.c.l.b16 %v1286
      %v1575 = vunpack.c.l.b16 %v1287
      %v1576 = vunpack.c.l.b16 %v1288
      %v1577 = vunpack.c.l.b16 %v1289
      %v1578 = vunpack.c.l.b16 %v1290
      %v1579 = vunpack.c.l.b16 %v1291
      %v1580 = vunpack.c.l.b16 %v1292
      %v1581 = vunpack.c.l.b16 %v1293
      %v1582 = vunpack.c.l.b16 %v1294
      %v1583 = vunpack.c.l.b16 %v1295
      %v1584 = vunpack.c.l.b16 %v1296
      %v1585 = vunpack.c.l.b16 %v1297
      %v1586 = vunpack.c.l.b16 %v1298
      %v1587 = vunpack.c.l.b16 %v1299
      %v1588 = vunpack.c.l.b16 %v1300
      %v1589 = vunpack.c.l.b16 %v1301
      %v1590 = vunpack.c.l.b16 %v1302
      %v1591 = vunpack.c.l.b16 %v1303
      %v1592 = vunpack.c.l.b16 %v1304
      %v1593 = vunpack.c.l.b16 %v1305
      %v1594 = vunpack.c.l.b16 %v1306
      %v1595 = vunpack.c.l.b16 %v1307
      %v1596 = vunpack.c.l.b16 %v1308
      %v1597 = vunpack.c.l.b16 %v1309
      %v1598 = vunpack.c.l.b16 %v1310
      %v1599 = vunpack.c.l.b16 %v1311
      %v1600 = vpack.c.b16 %v1457, %v1456
      %v1601 = vpack.c.b16 %v1459, %v1458
      %v1602 = vpack.c.b16 %v1461, %v1460
      %v1603 = vpack.c.b16 %v1463, %v1462
      %v1604 = vpack.c.b16 %v1465, %v1464
      %v1605 = vpack.c.b16 %v1467, %v1466
      %v1606 = vpack.c.b16 %v1469, %v1468
      %v1607 = vpack.c.b16 %v1471, %v1470
      %v1608 = vpack.c.b16 %v1473, %v1472
      %v1609 = vpack.c.b16 %v1475, %v1474
      %v1610 = vpack.c.b16 %v1477, %v1476
      %v1611 = vpack.c.b16 %v1479, %v1478
      %v1612 = vpack.c.b16 %v1481, %v1480
      %v1613 = vpack.c.b16 %v1483, %v1482
      %v1614 = vpack.c.b16 %v1485, %v1484
      %v1615 = vpack.c.b16 %v1487, %v1486
      %v1616 = vpack.c.b16 %v1489, %v1488
      %v1617 = vpack.c.b16 %v1491, %v1490
      %v1618 = vpack.c.b16 %v1493, %v1492
      %v1619 = vpack.c.b16 %v1495, %v1494
      %v1620 = vpack.c.b16 %v1497, %v1496
      %v1621 = vpack.c.b16 %v1499, %v1498
      %v1622 = vpack.c.b16 %v1501, %v1500
      %v1623 = vpack.c.b16 %v1503, %v1502
      %v1624 = vpack.c.b16 %v1505, %v1504
      %v1625 = vpack.c.b16 %v1507, %v1506
      %v1626 = vpack.c.b16 %v1509, %v1508
      %v1627 = vpack.c.b16 %v1511, %v1510
      %v1628 = vpack.c.b16 %v1513, %v1512
      %v1629 = vpack.c.b16 %v1515, %v1514
      %v1630 = vpack.c.b16 %v1517, %v1516
      %v1631 = vpack.c.b16 %v1519, %v1518
      %v1632 = vpack.c.b16 %v1521, %v1520
      %v1633 = vpack.c.b16 %v1523, %v1522
      %v1634 = vpack.c.b16 %v1525, %v1524
      %v1635 = vpack.c.b16 %v1527, %v1526
      %v1636 = vpack.c.b16 %v1529, %v1528
      %v1637 = vpack.c.b16 %v1531, %v1530
      %v1638 = vpack.c.b16 %v1533, %v1532
      %v1639 = vpack.c.b16 %v1535, %v1534
      %v1640 = vpack.c.b16 %v1537, %v1536
      %v1641 = vpack.c.b16 %v1539, %v1538
      %v1642 = vpack.c.b16 %v1541, %v1540
      %v1643 = vpack.c.b16 %v1543, %v1542
      %v1644 = vpack.c.b16 %v1545, %v1544
      %v1645 = vpack.c.b16 %v1547, %v1546
      %v1646 = vpack.c.b16 %v1549, %v1548
      %v1647 = vpack.c.b16 %v1551, %v1550
      %v1648 = vpack.c.b16 %v1553, %v1552
      %v1649 = vpack.c.b16 %v1555, %v1554
      %v1650 = vpack.c.b16 %v1557, %v1556
      %v1651 = vpack.c.b16 %v1559, %v1558
      %v1652 = vpack.c.b16 %v1561, %v1560
      %v1653 = vpack.c.b16 %v1563, %v1562
      %v1654 = vpack.c.b16 %v1565, %v1564
      %v1655 = vpack.c.b16 %v1567, %v1566
      %v1656 = vpack.c.b16 %v1569, %v1568
      %v1657 = vpack.c.b16 %v1571, %v1570
      %v1658 = vpack.c.b16 %v1573, %v1572
      %v1659 = vpack.c.b16 %v1575, %v1574
      %v1660 = vpack.c.b16 %v1577, %v1576
      %v1661 = vpack.c.b16 %v1579, %v1578
      %v1662 = vpack.c.b16 %v1581, %v1580
      %v1663 = vpack.c.b16 %v1583, %v1582
      %v1664 = vpack.c.b16 %v1585, %v1584
      %v1665 = vpack.c.b16 %v1587, %v1586
      %v1666 = vpack.c.b16 %v1589, %v1588
      %v1667 = vpack.c.b16 %v1591, %v1590
      %v1668 = vpack.c.b16 %v1593, %v1592
      %v1669 = vpack.c.b16 %v1595, %v1594
      %v1670 = vpack.c.b16 %v1597, %v1596
      %v1671 = vpack.c.b16 %v1599, %v1598
      %1744 = vmatprep.subr.bf16.mxu0 0
      %1745 = vmatpush1.bf16.msra.mxu0 %v1600
      %1746 = vmatprep.subr.bf16.mxu0 0
      %1747 = vmatpush1.bf16.msra.mxu0 %v1601
      %1748 = vmatprep.subr.bf16.mxu0 0
      %1749 = vmatpush1.bf16.msra.mxu0 %v1602
      %1750 = vmatprep.subr.bf16.mxu0 0
      %1751 = vmatpush1.bf16.msra.mxu0 %v1603
      %1752 = vmatprep.subr.bf16.mxu0 0
      %1753 = vmatpush1.bf16.msra.mxu0 %v1604
      %1754 = vmatprep.subr.bf16.mxu0 0
      %1755 = vmatpush1.bf16.msra.mxu0 %v1605
      %1756 = vmatprep.subr.bf16.mxu0 0
      %1757 = vmatpush1.bf16.msra.mxu0 %v1606
      %1758 = vmatprep.subr.bf16.mxu0 0
      %1759 = vmatpush1.bf16.msra.mxu0 %v1607
      %1760 = vmatprep.subr.bf16.mxu0 0
      %1761 = vmatpush1.bf16.msra.mxu0 %v1608
      %1762 = vmatprep.subr.bf16.mxu0 0
      %1763 = vmatpush1.bf16.msra.mxu0 %v1609
      %1764 = vmatprep.subr.bf16.mxu0 0
      %1765 = vmatpush1.bf16.msra.mxu0 %v1610
      %1766 = vmatprep.subr.bf16.mxu0 0
      %1767 = vmatpush1.bf16.msra.mxu0 %v1611
      %1768 = vmatprep.subr.bf16.mxu0 0
      %1769 = vmatpush1.bf16.msra.mxu0 %v1612
      %1770 = vmatprep.subr.bf16.mxu0 0
      %1771 = vmatpush1.bf16.msra.mxu0 %v1613
      %1772 = vmatprep.subr.bf16.mxu0 0
      %1773 = vmatpush1.bf16.msra.mxu0 %v1614
      %1774 = vmatprep.subr.bf16.mxu0 0
      %1775 = vmatpush1.bf16.msra.mxu0 %v1615
      %1776 = vmatprep.mubr.bf16.mxu0 %v1048
      %1777 = vmatmul.mubr.bf16.gmra.mrb[0].mxu0 %v984
      %v1778 = vpop.f32.mrb[0].mxu0
      %v1779 = vadd.f32 0.0, %v1778
      %v1780 = vpop.f32.mrb[0].mxu0
      %v1781 = vpop.f32.mrb[0].mxu0
      %v1782 = vadd.f32 0.0, %v1781
      %v1783 = vpop.f32.mrb[0].mxu0
      %1784 = vmatprep.mubr.bf16.mxu0 %v1049
      %1785 = vmatmul.mubr.bf16.gmra.mrb[0].mxu0 %v985
      %v1786 = vpop.f32.mrb[0].mxu0
      %v1787 = vadd.f32 0.0, %v1786
      %v1788 = vpop.f32.mrb[0].mxu0
      %v1789 = vpop.f32.mrb[0].mxu0
      %v1790 = vadd.f32 0.0, %v1789
      %v1791 = vpop.f32.mrb[0].mxu0
      %1792 = vmatprep.mubr.bf16.mxu0 %v1050
      %1793 = vmatmul.mubr.bf16.gmra.mrb[0].mxu0 %v986
      %v1794 = vpop.f32.mrb[0].mxu0
      %v1795 = vadd.f32 0.0, %v1794
      %v1796 = vpop.f32.mrb[0].mxu0
      %v1797 = vpop.f32.mrb[0].mxu0
      %v1798 = vadd.f32 0.0, %v1797
      %v1799 = vpop.f32.mrb[0].mxu0
      %1800 = vmatprep.mubr.bf16.mxu0 %v1051
      %1801 = vmatmul.mubr.bf16.gmra.mrb[0].mxu0 %v987
      %v1802 = vpop.f32.mrb[0].mxu0
      %v1803 = vadd.f32 0.0, %v1802
      %v1804 = vpop.f32.mrb[0].mxu0
      %v1805 = vpop.f32.mrb[0].mxu0
      %v1806 = vadd.f32 0.0, %v1805
      %v1807 = vpop.f32.mrb[0].mxu0
      %1808 = vmatprep.mubr.bf16.mxu0 %v1052
      %1809 = vmatmul.mubr.bf16.gmra.mrb[0].mxu0 %v988
      %v1810 = vpop.f32.mrb[0].mxu0
      %v1811 = vadd.f32 0.0, %v1810
      %v1812 = vpop.f32.mrb[0].mxu0
      %v1813 = vpop.f32.mrb[0].mxu0
      %v1814 = vadd.f32 0.0, %v1813
      %v1815 = vpop.f32.mrb[0].mxu0
      %1816 = vmatprep.mubr.bf16.mxu0 %v1053
      %1817 = vmatmul.mubr.bf16.gmra.mrb[0].mxu0 %v989
      %v1818 = vpop.f32.mrb[0].mxu0
      %v1819 = vadd.f32 0.0, %v1818
      %v1820 = vpop.f32.mrb[0].mxu0
      %v1821 = vpop.f32.mrb[0].mxu0
      %v1822 = vadd.f32 0.0, %v1821
      %v1823 = vpop.f32.mrb[0].mxu0
      %1824 = vmatprep.mubr.bf16.mxu0 %v1054
      %1825 = vmatmul.mubr.bf16.gmra.mrb[0].mxu0 %v990
      %v1826 = vpop.f32.mrb[0].mxu0
      %v1827 = vadd.f32 0.0, %v1826
      %v1828 = vpop.f32.mrb[0].mxu0
      %v1829 = vpop.f32.mrb[0].mxu0
      %v1830 = vadd.f32 0.0, %v1829
      %v1831 = vpop.f32.mrb[0].mxu0
      %1832 = vmatprep.mubr.bf16.mxu0 %v1055
      %1833 = vmatmul.mubr.bf16.gmra.mrb[0].mxu0 %v991
      %v1834 = vpop.f32.mrb[0].mxu0
      %v1835 = vadd.f32 0.0, %v1834
      %v1836 = vpop.f32.mrb[0].mxu0
      %v1837 = vpop.f32.mrb[0].mxu0
      %v1838 = vadd.f32 0.0, %v1837
      %v1839 = vpop.f32.mrb[0].mxu0
      %1840 = vmatprep.mubr.bf16.mxu0 %v1056
      %1841 = vmatmul.mubr.bf16.gmra.mrb[0].mxu0 %v992
      %v1842 = vpop.f32.mrb[0].mxu0
      %v1843 = vadd.f32 0.0, %v1842
      %v1844 = vpop.f32.mrb[0].mxu0
      %v1845 = vpop.f32.mrb[0].mxu0
      %v1846 = vadd.f32 0.0, %v1845
      %v1847 = vpop.f32.mrb[0].mxu0
      %1848 = vmatprep.mubr.bf16.mxu0 %v1057
      %1849 = vmatmul.mubr.bf16.gmra.mrb[0].mxu0 %v993
      %v1850 = vpop.f32.mrb[0].mxu0
      %v1851 = vadd.f32 0.0, %v1850
      %v1852 = vpop.f32.mrb[0].mxu0
      %v1853 = vpop.f32.mrb[0].mxu0
      %v1854 = vadd.f32 0.0, %v1853
      %v1855 = vpop.f32.mrb[0].mxu0
      %1856 = vmatprep.mubr.bf16.mxu0 %v1058
      %1857 = vmatmul.mubr.bf16.gmra.mrb[0].mxu0 %v994
      %v1858 = vpop.f32.mrb[0].mxu0
      %v1859 = vadd.f32 0.0, %v1858
      %v1860 = vpop.f32.mrb[0].mxu0
      %v1861 = vpop.f32.mrb[0].mxu0
      %v1862 = vadd.f32 0.0, %v1861
      %v1863 = vpop.f32.mrb[0].mxu0
      %1864 = vmatprep.mubr.bf16.mxu0 %v1059
      %1865 = vmatmul.mubr.bf16.gmra.mrb[0].mxu0 %v995
      %v1866 = vpop.f32.mrb[0].mxu0
      %v1867 = vadd.f32 0.0, %v1866
      %v1868 = vpop.f32.mrb[0].mxu0
      %v1869 = vpop.f32.mrb[0].mxu0
      %v1870 = vadd.f32 0.0, %v1869
      %v1871 = vpop.f32.mrb[0].mxu0
      %1872 = vmatprep.mubr.bf16.mxu0 %v1060
      %1873 = vmatmul.mubr.bf16.gmra.mrb[0].mxu0 %v996
      %v1874 = vpop.f32.mrb[0].mxu0
      %v1875 = vadd.f32 0.0, %v1874
      %v1876 = vpop.f32.mrb[0].mxu0
      %v1877 = vpop.f32.mrb[0].mxu0
      %v1878 = vadd.f32 0.0, %v1877
      %v1879 = vpop.f32.mrb[0].mxu0
      %1880 = vmatprep.mubr.bf16.mxu0 %v1061
      %1881 = vmatmul.mubr.bf16.gmra.mrb[0].mxu0 %v997
      %v1882 = vpop.f32.mrb[0].mxu0
      %v1883 = vadd.f32 0.0, %v1882
      %v1884 = vpop.f32.mrb[0].mxu0
      %v1885 = vpop.f32.mrb[0].mxu0
      %v1886 = vadd.f32 0.0, %v1885
      %v1887 = vpop.f32.mrb[0].mxu0
      %1888 = vmatprep.mubr.bf16.mxu0 %v1062
      %1889 = vmatmul.mubr.bf16.gmra.mrb[0].mxu0 %v998
      %v1890 = vpop.f32.mrb[0].mxu0
      %v1891 = vadd.f32 0.0, %v1890
      %v1892 = vpop.f32.mrb[0].mxu0
      %v1893 = vpop.f32.mrb[0].mxu0
      %v1894 = vadd.f32 0.0, %v1893
      %v1895 = vpop.f32.mrb[0].mxu0
      %1896 = vmatprep.mubr.bf16.mxu0 %v1063
      %1897 = vmatmul.mubr.bf16.gmra.mrb[0].mxu0 %v999
      %v1898 = vpop.f32.mrb[0].mxu0
      %v1899 = vadd.f32 0.0, %v1898
      %v1900 = vpop.f32.mrb[0].mxu0
      %v1901 = vpop.f32.mrb[0].mxu0
      %v1902 = vadd.f32 0.0, %v1901
      %v1903 = vpop.f32.mrb[0].mxu0
      %1904 = vdwg.mxu0
      %1905 = vmatprep.subr.bf16.mxu0 0
      %1906 = vmatpush1.bf16.msra.mxu0 %v1616
      %1907 = vmatprep.subr.bf16.mxu0 0
      %1908 = vmatpush1.bf16.msra.mxu0 %v1617
      %1909 = vmatprep.subr.bf16.mxu0 0
      %1910 = vmatpush1.bf16.msra.mxu0 %v1618
      %1911 = vmatprep.subr.bf16.mxu0 0
      %1912 = vmatpush1.bf16.msra.mxu0 %v1619
      %1913 = vmatprep.subr.bf16.mxu0 0
      %1914 = vmatpush1.bf16.msra.mxu0 %v1620
      %1915 = vmatprep.subr.bf16.mxu0 0
      %1916 = vmatpush1.bf16.msra.mxu0 %v1621
      %1917 = vmatprep.subr.bf16.mxu0 0
      %1918 = vmatpush1.bf16.msra.mxu0 %v1622
      %1919 = vmatprep.subr.bf16.mxu0 0
      %1920 = vmatpush1.bf16.msra.mxu0 %v1623
      %1921 = vmatprep.subr.bf16.mxu0 0
      %1922 = vmatpush1.bf16.msra.mxu0 %v1624
      %1923 = vmatprep.subr.bf16.mxu0 0
      %1924 = vmatpush1.bf16.msra.mxu0 %v1625
      %1925 = vmatprep.subr.bf16.mxu0 0
      %1926 = vmatpush1.bf16.msra.mxu0 %v1626
      %1927 = vmatprep.subr.bf16.mxu0 0
      %1928 = vmatpush1.bf16.msra.mxu0 %v1627
      %1929 = vmatprep.subr.bf16.mxu0 0
      %1930 = vmatpush1.bf16.msra.mxu0 %v1628
      %1931 = vmatprep.subr.bf16.mxu0 0
      %1932 = vmatpush1.bf16.msra.mxu0 %v1629
      %1933 = vmatprep.subr.bf16.mxu0 0
      %1934 = vmatpush1.bf16.msra.mxu0 %v1630
      %1935 = vmatprep.subr.bf16.mxu0 0
      %1936 = vmatpush1.bf16.msra.mxu0 %v1631
      %1937 = vmatprep.mubr.bf16.mxu0 %v985
      %1938 = vmatmul.mubr.bf16.gmra.mrb[0].mxu0 %v1112
      %v1939 = vpop.f32.mrb[0].mxu0
      %v1940 = vadd.f32 %v1779, %v1939
      %v1941 = vpop.f32.mrb[0].mxu0
      %v1942 = vpop.f32.mrb[0].mxu0
      %v1943 = vadd.f32 %v1782, %v1942
      %v1944 = vpop.f32.mrb[0].mxu0
      %1945 = vmatprep.mubr.bf16.mxu0 %v986
      %1946 = vmatmul.mubr.bf16.gmra.mrb[0].mxu0 %v1113
      %v1947 = vpop.f32.mrb[0].mxu0
      %v1948 = vadd.f32 %v1787, %v1947
      %v1949 = vpop.f32.mrb[0].mxu0
      %v1950 = vpop.f32.mrb[0].mxu0
      %v1951 = vadd.f32 %v1790, %v1950
      %v1952 = vpop.f32.mrb[0].mxu0
      %1953 = vmatprep.mubr.bf16.mxu0 %v987
      %1954 = vmatmul.mubr.bf16.gmra.mrb[0].mxu0 %v1114
      %v1955 = vpop.f32.mrb[0].mxu0
      %v1956 = vadd.f32 %v1795, %v1955
      %v1957 = vpop.f32.mrb[0].mxu0
      %v1958 = vpop.f32.mrb[0].mxu0
      %v1959 = vadd.f32 %v1798, %v1958
      %v1960 = vpop.f32.mrb[0].mxu0
      %1961 = vmatprep.mubr.bf16.mxu0 %v988
      %1962 = vmatmul.mubr.bf16.gmra.mrb[0].mxu0 %v1115
      %v1963 = vpop.f32.mrb[0].mxu0
      %v1964 = vadd.f32 %v1803, %v1963
      %v1965 = vpop.f32.mrb[0].mxu0
      %v1966 = vpop.f32.mrb[0].mxu0
      %v1967 = vadd.f32 %v1806, %v1966
      %v1968 = vpop.f32.mrb[0].mxu0
      %1969 = vmatprep.mubr.bf16.mxu0 %v989
      %1970 = vmatmul.mubr.bf16.gmra.mrb[0].mxu0 %v1116
      %v1971 = vpop.f32.mrb[0].mxu0
      %v1972 = vadd.f32 %v1811, %v1971
      %v1973 = vpop.f32.mrb[0].mxu0
      %v1974 = vpop.f32.mrb[0].mxu0
      %v1975 = vadd.f32 %v1814, %v1974
      %v1976 = vpop.f32.mrb[0].mxu0
      %1977 = vmatprep.mubr.bf16.mxu0 %v990
      %1978 = vmatmul.mubr.bf16.gmra.mrb[0].mxu0 %v1117
      %v1979 = vpop.f32.mrb[0].mxu0
      %v1980 = vadd.f32 %v1819, %v1979
      %v1981 = vpop.f32.mrb[0].mxu0
      %v1982 = vpop.f32.mrb[0].mxu0
      %v1983 = vadd.f32 %v1822, %v1982
      %v1984 = vpop.f32.mrb[0].mxu0
      %1985 = vmatprep.mubr.bf16.mxu0 %v991
      %1986 = vmatmul.mubr.bf16.gmra.mrb[0].mxu0 %v1118
      %v1987 = vpop.f32.mrb[0].mxu0
      %v1988 = vadd.f32 %v1827, %v1987
      %v1989 = vpop.f32.mrb[0].mxu0
      %v1990 = vpop.f32.mrb[0].mxu0
      %v1991 = vadd.f32 %v1830, %v1990
      %v1992 = vpop.f32.mrb[0].mxu0
      %1993 = vmatprep.mubr.bf16.mxu0 %v992
      %1994 = vmatmul.mubr.bf16.gmra.mrb[0].mxu0 %v1119
      %v1995 = vpop.f32.mrb[0].mxu0
      %v1996 = vadd.f32 %v1835, %v1995
      %v1997 = vpop.f32.mrb[0].mxu0
      %v1998 = vpop.f32.mrb[0].mxu0
      %v1999 = vadd.f32 %v1838, %v1998
      %v2000 = vpop.f32.mrb[0].mxu0
      %2001 = vmatprep.mubr.bf16.mxu0 %v993
      %2002 = vmatmul.mubr.bf16.gmra.mrb[0].mxu0 %v1120
      %v2003 = vpop.f32.mrb[0].mxu0
      %v2004 = vadd.f32 %v1843, %v2003
      %v2005 = vpop.f32.mrb[0].mxu0
      %v2006 = vpop.f32.mrb[0].mxu0
      %v2007 = vadd.f32 %v1846, %v2006
      %v2008 = vpop.f32.mrb[0].mxu0
      %2009 = vmatprep.mubr.bf16.mxu0 %v994
      %2010 = vmatmul.mubr.bf16.gmra.mrb[0].mxu0 %v1121
      %v2011 = vpop.f32.mrb[0].mxu0
      %v2012 = vadd.f32 %v1851, %v2011
      %v2013 = vpop.f32.mrb[0].mxu0
      %v2014 = vpop.f32.mrb[0].mxu0
      %v2015 = vadd.f32 %v1854, %v2014
      %v2016 = vpop.f32.mrb[0].mxu0
      %2017 = vmatprep.mubr.bf16.mxu0 %v995
      %2018 = vmatmul.mubr.bf16.gmra.mrb[0].mxu0 %v1122
      %v2019 = vpop.f32.mrb[0].mxu0
      %v2020 = vadd.f32 %v1859, %v2019
      %v2021 = vpop.f32.mrb[0].mxu0
      %v2022 = vpop.f32.mrb[0].mxu0
      %v2023 = vadd.f32 %v1862, %v2022
      %v2024 = vpop.f32.mrb[0].mxu0
      %2025 = vmatprep.mubr.bf16.mxu0 %v996
      %2026 = vmatmul.mubr.bf16.gmra.mrb[0].mxu0 %v1123
      %v2027 = vpop.f32.mrb[0].mxu0
      %v2028 = vadd.f32 %v1867, %v2027
      %v2029 = vpop.f32.mrb[0].mxu0
      %v2030 = vpop.f32.mrb[0].mxu0
      %v2031 = vadd.f32 %v1870, %v2030
      %v2032 = vpop.f32.mrb[0].mxu0
      %2033 = vmatprep.mubr.bf16.mxu0 %v997
      %2034 = vmatmul.mubr.bf16.gmra.mrb[0].mxu0 %v1124
      %v2035 = vpop.f32.mrb[0].mxu0
      %v2036 = vadd.f32 %v1875, %v2035
      %v2037 = vpop.f32.mrb[0].mxu0
      %v2038 = vpop.f32.mrb[0].mxu0
      %v2039 = vadd.f32 %v1878, %v2038
      %v2040 = vpop.f32.mrb[0].mxu0
      %2041 = vmatprep.mubr.bf16.mxu0 %v998
      %2042 = vmatmul.mubr.bf16.gmra.mrb[0].mxu0 %v1125
      %v2043 = vpop.f32.mrb[0].mxu0
      %v2044 = vadd.f32 %v1883, %v2043
      %v2045 = vpop.f32.mrb[0].mxu0
      %v2046 = vpop.f32.mrb[0].mxu0
      %v2047 = vadd.f32 %v1886, %v2046
      %v2048 = vpop.f32.mrb[0].mxu0
      %2049 = vmatprep.mubr.bf16.mxu0 %v999
      %2050 = vmatmul.mubr.bf16.gmra.mrb[0].mxu0 %v1126
      %v2051 = vpop.f32.mrb[0].mxu0
      %v2052 = vadd.f32 %v1891, %v2051
      %v2053 = vpop.f32.mrb[0].mxu0
      %v2054 = vpop.f32.mrb[0].mxu0
      %v2055 = vadd.f32 %v1894, %v2054
      %v2056 = vpop.f32.mrb[0].mxu0
      %2057 = vmatprep.mubr.bf16.mxu0 %v1146
      %2058 = vmatmul.mubr.bf16.gmra.mrb[0].mxu0 %v1127
      %v2059 = vpop.f32.mrb[0].mxu0
      %v2060 = vadd.f32 %v1899, %v2059
      %v2061 = vpop.f32.mrb[0].mxu0
      %v2062 = vpop.f32.mrb[0].mxu0
      %v2063 = vadd.f32 %v1902, %v2062
      %v2064 = vpop.f32.mrb[0].mxu0
      %2065 = vdwg.mxu0
      %2066 = vmatprep.subr.bf16.mxu0 0
      %2067 = vmatpush1.bf16.msra.mxu0 %v1632
      %2068 = vmatprep.subr.bf16.mxu0 0
      %2069 = vmatpush1.bf16.msra.mxu0 %v1633
      %2070 = vmatprep.subr.bf16.mxu0 0
      %2071 = vmatpush1.bf16.msra.mxu0 %v1634
      %2072 = vmatprep.subr.bf16.mxu0 0
      %2073 = vmatpush1.bf16.msra.mxu0 %v1635
      %2074 = vmatprep.subr.bf16.mxu0 0
      %2075 = vmatpush1.bf16.msra.mxu0 %v1636
      %2076 = vmatprep.subr.bf16.mxu0 0
      %2077 = vmatpush1.bf16.msra.mxu0 %v1637
      %2078 = vmatprep.subr.bf16.mxu0 0
      %2079 = vmatpush1.bf16.msra.mxu0 %v1638
      %2080 = vmatprep.subr.bf16.mxu0 0
      %2081 = vmatpush1.bf16.msra.mxu0 %v1639
      %2082 = vmatprep.subr.bf16.mxu0 0
      %2083 = vmatpush1.bf16.msra.mxu0 %v1640
      %2084 = vmatprep.subr.bf16.mxu0 0
      %2085 = vmatpush1.bf16.msra.mxu0 %v1641
      %2086 = vmatprep.subr.bf16.mxu0 0
      %2087 = vmatpush1.bf16.msra.mxu0 %v1642
      %2088 = vmatprep.subr.bf16.mxu0 0
      %2089 = vmatpush1.bf16.msra.mxu0 %v1643
      %2090 = vmatprep.subr.bf16.mxu0 0
      %2091 = vmatpush1.bf16.msra.mxu0 %v1644
      %2092 = vmatprep.subr.bf16.mxu0 0
      %2093 = vmatpush1.bf16.msra.mxu0 %v1645
      %2094 = vmatprep.subr.bf16.mxu0 0
      %2095 = vmatpush1.bf16.msra.mxu0 %v1646
      %2096 = vmatprep.subr.bf16.mxu0 0
      %2097 = vmatpush1.bf16.msra.mxu0 %v1647
      %2098 = vmatprep.mubr.bf16.mxu0 %v1113
      %2099 = vmatmul.mubr.bf16.gmra.mrb[0].mxu0 %v1049
      %v2100 = vpop.f32.mrb[0].mxu0
      %v2101 = vadd.f32 %v1940, %v2100
      %v2102 = vpop.f32.mrb[0].mxu0
      %v2103 = vpop.f32.mrb[0].mxu0
      %v2104 = vadd.f32 %v1943, %v2103
      %v2105 = vpop.f32.mrb[0].mxu0
      %2106 = vmatprep.mubr.bf16.mxu0 %v1114
      %2107 = vmatmul.mubr.bf16.gmra.mrb[0].mxu0 %v1050
      %v2108 = vpop.f32.mrb[0].mxu0
      %v2109 = vadd.f32 %v1948, %v2108
      %v2110 = vpop.f32.mrb[0].mxu0
      %v2111 = vpop.f32.mrb[0].mxu0
      %v2112 = vadd.f32 %v1951, %v2111
      %v2113 = vpop.f32.mrb[0].mxu0
      %2114 = vmatprep.mubr.bf16.mxu0 %v1115
      %2115 = vmatmul.mubr.bf16.gmra.mrb[0].mxu0 %v1051
      %v2116 = vpop.f32.mrb[0].mxu0
      %v2117 = vadd.f32 %v1956, %v2116
      %v2118 = vpop.f32.mrb[0].mxu0
      %v2119 = vpop.f32.mrb[0].mxu0
      %v2120 = vadd.f32 %v1959, %v2119
      %v2121 = vpop.f32.mrb[0].mxu0
      %2122 = vmatprep.mubr.bf16.mxu0 %v1116
      %2123 = vmatmul.mubr.bf16.gmra.mrb[0].mxu0 %v1052
      %v2124 = vpop.f32.mrb[0].mxu0
      %v2125 = vadd.f32 %v1964, %v2124
      %v2126 = vpop.f32.mrb[0].mxu0
      %v2127 = vpop.f32.mrb[0].mxu0
      %v2128 = vadd.f32 %v1967, %v2127
      %v2129 = vpop.f32.mrb[0].mxu0
      %2130 = vmatprep.mubr.bf16.mxu0 %v1117
      %2131 = vmatmul.mubr.bf16.gmra.mrb[0].mxu0 %v1053
      %v2132 = vpop.f32.mrb[0].mxu0
      %v2133 = vadd.f32 %v1972, %v2132
      %v2134 = vpop.f32.mrb[0].mxu0
      %v2135 = vpop.f32.mrb[0].mxu0
      %v2136 = vadd.f32 %v1975, %v2135
      %v2137 = vpop.f32.mrb[0].mxu0
      %2138 = vmatprep.mubr.bf16.mxu0 %v1118
      %2139 = vmatmul.mubr.bf16.gmra.mrb[0].mxu0 %v1054
      %v2140 = vpop.f32.mrb[0].mxu0
      %v2141 = vadd.f32 %v1980, %v2140
      %v2142 = vpop.f32.mrb[0].mxu0
      %v2143 = vpop.f32.mrb[0].mxu0
      %v2144 = vadd.f32 %v1983, %v2143
      %v2145 = vpop.f32.mrb[0].mxu0
      %2146 = vmatprep.mubr.bf16.mxu0 %v1119
      %2147 = vmatmul.mubr.bf16.gmra.mrb[0].mxu0 %v1055
      %v2148 = vpop.f32.mrb[0].mxu0
      %v2149 = vadd.f32 %v1988, %v2148
      %v2150 = vpop.f32.mrb[0].mxu0
      %v2151 = vpop.f32.mrb[0].mxu0
      %v2152 = vadd.f32 %v1991, %v2151
      %v2153 = vpop.f32.mrb[0].mxu0
      %2154 = vmatprep.mubr.bf16.mxu0 %v1120
      %2155 = vmatmul.mubr.bf16.gmra.mrb[0].mxu0 %v1056
      %v2156 = vpop.f32.mrb[0].mxu0
      %v2157 = vadd.f32 %v1996, %v2156
      %v2158 = vpop.f32.mrb[0].mxu0
      %v2159 = vpop.f32.mrb[0].mxu0
      %v2160 = vadd.f32 %v1999, %v2159
      %v2161 = vpop.f32.mrb[0].mxu0
      %2162 = vmatprep.mubr.bf16.mxu0 %v1121
      %2163 = vmatmul.mubr.bf16.gmra.mrb[0].mxu0 %v1057
      %v2164 = vpop.f32.mrb[0].mxu0
      %v2165 = vadd.f32 %v2004, %v2164
      %v2166 = vpop.f32.mrb[0].mxu0
      %v2167 = vpop.f32.mrb[0].mxu0
      %v2168 = vadd.f32 %v2007, %v2167
      %v2169 = vpop.f32.mrb[0].mxu0
      %2170 = vmatprep.mubr.bf16.mxu0 %v1122
      %2171 = vmatmul.mubr.bf16.gmra.mrb[0].mxu0 %v1058
      %v2172 = vpop.f32.mrb[0].mxu0
      %v2173 = vadd.f32 %v2012, %v2172
      %v2174 = vpop.f32.mrb[0].mxu0
      %v2175 = vpop.f32.mrb[0].mxu0
      %v2176 = vadd.f32 %v2015, %v2175
      %v2177 = vpop.f32.mrb[0].mxu0
      %2178 = vmatprep.mubr.bf16.mxu0 %v1123
      %2179 = vmatmul.mubr.bf16.gmra.mrb[0].mxu0 %v1059
      %v2180 = vpop.f32.mrb[0].mxu0
      %v2181 = vadd.f32 %v2020, %v2180
      %v2182 = vpop.f32.mrb[0].mxu0
      %v2183 = vpop.f32.mrb[0].mxu0
      %v2184 = vadd.f32 %v2023, %v2183
      %v2185 = vpop.f32.mrb[0].mxu0
      %2186 = vmatprep.mubr.bf16.mxu0 %v1124
      %2187 = vmatmul.mubr.bf16.gmra.mrb[0].mxu0 %v1060
      %v2188 = vpop.f32.mrb[0].mxu0
      %v2189 = vadd.f32 %v2028, %v2188
      %v2190 = vpop.f32.mrb[0].mxu0
      %v2191 = vpop.f32.mrb[0].mxu0
      %v2192 = vadd.f32 %v2031, %v2191
      %v2193 = vpop.f32.mrb[0].mxu0
      %2194 = vmatprep.mubr.bf16.mxu0 %v1125
      %2195 = vmatmul.mubr.bf16.gmra.mrb[0].mxu0 %v1061
      %v2196 = vpop.f32.mrb[0].mxu0
      %v2197 = vadd.f32 %v2036, %v2196
      %v2198 = vpop.f32.mrb[0].mxu0
      %v2199 = vpop.f32.mrb[0].mxu0
      %v2200 = vadd.f32 %v2039, %v2199
      %v2201 = vpop.f32.mrb[0].mxu0
      %2202 = vmatprep.mubr.bf16.mxu0 %v1126
      %2203 = vmatmul.mubr.bf16.gmra.mrb[0].mxu0 %v1062
      %v2204 = vpop.f32.mrb[0].mxu0
      %v2205 = vadd.f32 %v2044, %v2204
      %v2206 = vpop.f32.mrb[0].mxu0
      %v2207 = vpop.f32.mrb[0].mxu0
      %v2208 = vadd.f32 %v2047, %v2207
      %v2209 = vpop.f32.mrb[0].mxu0
      %2210 = vmatprep.mubr.bf16.mxu0 %v1127
      %2211 = vmatmul.mubr.bf16.gmra.mrb[0].mxu0 %v1063
      %v2212 = vpop.f32.mrb[0].mxu0
      %v2213 = vadd.f32 %v2052, %v2212
      %v2214 = vpop.f32.mrb[0].mxu0
      %v2215 = vpop.f32.mrb[0].mxu0
      %v2216 = vadd.f32 %v2055, %v2215
      %v2217 = vpop.f32.mrb[0].mxu0
      %2218 = vmatprep.mubr.bf16.mxu0 %v1154
      %2219 = vmatmul.mubr.bf16.gmra.mrb[0].mxu0 %v1150
      %v2220 = vpop.f32.mrb[0].mxu0
      %v2221 = vadd.f32 %v2060, %v2220
      %v2222 = vpop.f32.mrb[0].mxu0
      %v2223 = vpop.f32.mrb[0].mxu0
      %v2224 = vadd.f32 %v2063, %v2223
      %v2225 = vpop.f32.mrb[0].mxu0
      %2226 = vdwg.mxu0
      %2227 = vmatprep.subr.bf16.mxu0 0
      %2228 = vmatpush1.bf16.msra.mxu0 %v1648
      %2229 = vmatprep.subr.bf16.mxu0 0
      %2230 = vmatpush1.bf16.msra.mxu0 %v1649
      %2231 = vmatprep.subr.bf16.mxu0 0
      %2232 = vmatpush1.bf16.msra.mxu0 %v1650
      %2233 = vmatprep.subr.bf16.mxu0 0
      %2234 = vmatpush1.bf16.msra.mxu0 %v1651
      %2235 = vmatprep.subr.bf16.mxu0 0
      %2236 = vmatpush1.bf16.msra.mxu0 %v1652
      %2237 = vmatprep.subr.bf16.mxu0 0
      %2238 = vmatpush1.bf16.msra.mxu0 %v1653
      %2239 = vmatprep.subr.bf16.mxu0 0
      %2240 = vmatpush1.bf16.msra.mxu0 %v1654
      %2241 = vmatprep.subr.bf16.mxu0 0
      %2242 = vmatpush1.bf16.msra.mxu0 %v1655
      %2243 = vmatprep.subr.bf16.mxu0 0
      %2244 = vmatpush1.bf16.msra.mxu0 %v1656
      %2245 = vmatprep.subr.bf16.mxu0 0
      %2246 = vmatpush1.bf16.msra.mxu0 %v1657
      %2247 = vmatprep.subr.bf16.mxu0 0
      %2248 = vmatpush1.bf16.msra.mxu0 %v1658
      %2249 = vmatprep.subr.bf16.mxu0 0
      %2250 = vmatpush1.bf16.msra.mxu0 %v1659
      %2251 = vmatprep.subr.bf16.mxu0 0
      %2252 = vmatpush1.bf16.msra.mxu0 %v1660
      %2253 = vmatprep.subr.bf16.mxu0 0
      %2254 = vmatpush1.bf16.msra.mxu0 %v1661
      %2255 = vmatprep.subr.bf16.mxu0 0
      %2256 = vmatpush1.bf16.msra.mxu0 %v1662
      %2257 = vmatprep.subr.bf16.mxu0 0
      %2258 = vmatpush1.bf16.msra.mxu0 %v1663
      %2259 = vmatprep.mubr.bf16.mxu0 %v1050
      %2260 = vmatmul.mubr.bf16.gmra.mrb[0].mxu0 %v986
      %v2261 = vpop.f32.mrb[0].mxu0
      %v2262 = vadd.f32 %v2101, %v2261
      %v2263 = vpop.f32.mrb[0].mxu0
      %v2264 = vpop.f32.mrb[0].mxu0
      %v2265 = vadd.f32 %v2104, %v2264
      %v2266 = vpop.f32.mrb[0].mxu0
      %2267 = vmatprep.mubr.bf16.mxu0 %v1051
      %2268 = vmatmul.mubr.bf16.gmra.mrb[0].mxu0 %v987
      %v2269 = vpop.f32.mrb[0].mxu0
      %v2270 = vadd.f32 %v2109, %v2269
      %v2271 = vpop.f32.mrb[0].mxu0
      %v2272 = vpop.f32.mrb[0].mxu0
      %v2273 = vadd.f32 %v2112, %v2272
      %v2274 = vpop.f32.mrb[0].mxu0
      %2275 = vmatprep.mubr.bf16.mxu0 %v1052
      %2276 = vmatmul.mubr.bf16.gmra.mrb[0].mxu0 %v988
      %v2277 = vpop.f32.mrb[0].mxu0
      %v2278 = vadd.f32 %v2117, %v2277
      %v2279 = vpop.f32.mrb[0].mxu0
      %v2280 = vpop.f32.mrb[0].mxu0
      %v2281 = vadd.f32 %v2120, %v2280
      %v2282 = vpop.f32.mrb[0].mxu0
      %2283 = vmatprep.mubr.bf16.mxu0 %v1053
      %2284 = vmatmul.mubr.bf16.gmra.mrb[0].mxu0 %v989
      %v2285 = vpop.f32.mrb[0].mxu0
      %v2286 = vadd.f32 %v2125, %v2285
      %v2287 = vpop.f32.mrb[0].mxu0
      %v2288 = vpop.f32.mrb[0].mxu0
      %v2289 = vadd.f32 %v2128, %v2288
      %v2290 = vpop.f32.mrb[0].mxu0
      %2291 = vmatprep.mubr.bf16.mxu0 %v1054
      %2292 = vmatmul.mubr.bf16.gmra.mrb[0].mxu0 %v990
      %v2293 = vpop.f32.mrb[0].mxu0
      %v2294 = vadd.f32 %v2133, %v2293
      %v2295 = vpop.f32.mrb[0].mxu0
      %v2296 = vpop.f32.mrb[0].mxu0
      %v2297 = vadd.f32 %v2136, %v2296
      %v2298 = vpop.f32.mrb[0].mxu0
      %2299 = vmatprep.mubr.bf16.mxu0 %v1055
      %2300 = vmatmul.mubr.bf16.gmra.mrb[0].mxu0 %v991
      %v2301 = vpop.f32.mrb[0].mxu0
      %v2302 = vadd.f32 %v2141, %v2301
      %v2303 = vpop.f32.mrb[0].mxu0
      %v2304 = vpop.f32.mrb[0].mxu0
      %v2305 = vadd.f32 %v2144, %v2304
      %v2306 = vpop.f32.mrb[0].mxu0
      %2307 = vmatprep.mubr.bf16.mxu0 %v1056
      %2308 = vmatmul.mubr.bf16.gmra.mrb[0].mxu0 %v992
      %v2309 = vpop.f32.mrb[0].mxu0
      %v2310 = vadd.f32 %v2149, %v2309
      %v2311 = vpop.f32.mrb[0].mxu0
      %v2312 = vpop.f32.mrb[0].mxu0
      %v2313 = vadd.f32 %v2152, %v2312
      %v2314 = vpop.f32.mrb[0].mxu0
      %2315 = vmatprep.mubr.bf16.mxu0 %v1057
      %2316 = vmatmul.mubr.bf16.gmra.mrb[0].mxu0 %v993
      %v2317 = vpop.f32.mrb[0].mxu0
      %v2318 = vadd.f32 %v2157, %v2317
      %v2319 = vpop.f32.mrb[0].mxu0
      %v2320 = vpop.f32.mrb[0].mxu0
      %v2321 = vadd.f32 %v2160, %v2320
      %v2322 = vpop.f32.mrb[0].mxu0
      %2323 = vmatprep.mubr.bf16.mxu0 %v1058
      %2324 = vmatmul.mubr.bf16.gmra.mrb[0].mxu0 %v994
      %v2325 = vpop.f32.mrb[0].mxu0
      %v2326 = vadd.f32 %v2165, %v2325
      %v2327 = vpop.f32.mrb[0].mxu0
      %v2328 = vpop.f32.mrb[0].mxu0
      %v2329 = vadd.f32 %v2168, %v2328
      %v2330 = vpop.f32.mrb[0].mxu0
      %2331 = vmatprep.mubr.bf16.mxu0 %v1059
      %2332 = vmatmul.mubr.bf16.gmra.mrb[0].mxu0 %v995
      %v2333 = vpop.f32.mrb[0].mxu0
      %v2334 = vadd.f32 %v2173, %v2333
      %v2335 = vpop.f32.mrb[0].mxu0
      %v2336 = vpop.f32.mrb[0].mxu0
      %v2337 = vadd.f32 %v2176, %v2336
      %v2338 = vpop.f32.mrb[0].mxu0
      %2339 = vmatprep.mubr.bf16.mxu0 %v1060
      %2340 = vmatmul.mubr.bf16.gmra.mrb[0].mxu0 %v996
      %v2341 = vpop.f32.mrb[0].mxu0
      %v2342 = vadd.f32 %v2181, %v2341
      %v2343 = vpop.f32.mrb[0].mxu0
      %v2344 = vpop.f32.mrb[0].mxu0
      %v2345 = vadd.f32 %v2184, %v2344
      %v2346 = vpop.f32.mrb[0].mxu0
      %2347 = vmatprep.mubr.bf16.mxu0 %v1061
      %2348 = vmatmul.mubr.bf16.gmra.mrb[0].mxu0 %v997
      %v2349 = vpop.f32.mrb[0].mxu0
      %v2350 = vadd.f32 %v2189, %v2349
      %v2351 = vpop.f32.mrb[0].mxu0
      %v2352 = vpop.f32.mrb[0].mxu0
      %v2353 = vadd.f32 %v2192, %v2352
      %v2354 = vpop.f32.mrb[0].mxu0
      %2355 = vmatprep.mubr.bf16.mxu0 %v1062
      %2356 = vmatmul.mubr.bf16.gmra.mrb[0].mxu0 %v998
      %v2357 = vpop.f32.mrb[0].mxu0
      %v2358 = vadd.f32 %v2197, %v2357
      %v2359 = vpop.f32.mrb[0].mxu0
      %v2360 = vpop.f32.mrb[0].mxu0
      %v2361 = vadd.f32 %v2200, %v2360
      %v2362 = vpop.f32.mrb[0].mxu0
      %2363 = vmatprep.mubr.bf16.mxu0 %v1063
      %2364 = vmatmul.mubr.bf16.gmra.mrb[0].mxu0 %v999
      %v2365 = vpop.f32.mrb[0].mxu0
      %v2366 = vadd.f32 %v2205, %v2365
      %v2367 = vpop.f32.mrb[0].mxu0
      %v2368 = vpop.f32.mrb[0].mxu0
      %v2369 = vadd.f32 %v2208, %v2368
      %v2370 = vpop.f32.mrb[0].mxu0
      %2371 = vmatprep.mubr.bf16.mxu0 %v1150
      %2372 = vmatmul.mubr.bf16.gmra.mrb[0].mxu0 %v1146
      %v2373 = vpop.f32.mrb[0].mxu0
      %v2374 = vadd.f32 %v2213, %v2373
      %v2375 = vpop.f32.mrb[0].mxu0
      %v2376 = vpop.f32.mrb[0].mxu0
      %v2377 = vadd.f32 %v2216, %v2376
      %v2378 = vpop.f32.mrb[0].mxu0
      %2379 = vmatprep.mubr.bf16.mxu0 %v1162
      %2380 = vmatmul.mubr.bf16.gmra.mrb[0].mxu0 %v1158
      %v2381 = vpop.f32.mrb[0].mxu0
      %v2382 = vadd.f32 %v2221, %v2381
      %v2383 = vpop.f32.mrb[0].mxu0
      %v2384 = vpop.f32.mrb[0].mxu0
      %v2385 = vadd.f32 %v2224, %v2384
      %v2386 = vpop.f32.mrb[0].mxu0
      %2387 = vdwg.mxu0
      %2388 = vmatprep.subr.bf16.mxu0 0
      %2389 = vmatpush1.bf16.msra.mxu0 %v1664
      %2390 = vmatprep.subr.bf16.mxu0 0
      %2391 = vmatpush1.bf16.msra.mxu0 %v1665
      %2392 = vmatprep.subr.bf16.mxu0 0
      %2393 = vmatpush1.bf16.msra.mxu0 %v1666
      %2394 = vmatprep.subr.bf16.mxu0 0
      %2395 = vmatpush1.bf16.msra.mxu0 %v1667
      %2396 = vmatprep.subr.bf16.mxu0 0
      %2397 = vmatpush1.bf16.msra.mxu0 %v1668
      %2398 = vmatprep.subr.bf16.mxu0 0
      %2399 = vmatpush1.bf16.msra.mxu0 %v1669
      %2400 = vmatprep.subr.bf16.mxu0 0
      %2401 = vmatpush1.bf16.msra.mxu0 %v1670
      %2402 = vmatprep.subr.bf16.mxu0 0
      %2403 = vmatpush1.bf16.msra.mxu0 %v1671
      %2404 = vmatprep.subr.bf16.mxu0 0
      %2405 = vmatpush1.bf16.msra.mxu0 0
      %2406 = vmatprep.subr.bf16.mxu0 0
      %2407 = vmatpush1.bf16.msra.mxu0 0
      %2408 = vmatprep.subr.bf16.mxu0 0
      %2409 = vmatpush1.bf16.msra.mxu0 0
      %2410 = vmatprep.subr.bf16.mxu0 0
      %2411 = vmatpush1.bf16.msra.mxu0 0
      %2412 = vmatprep.subr.bf16.mxu0 0
      %2413 = vmatpush1.bf16.msra.mxu0 0
      %2414 = vmatprep.subr.bf16.mxu0 0
      %2415 = vmatpush1.bf16.msra.mxu0 0
      %2416 = vmatprep.subr.bf16.mxu0 0
      %2417 = vmatpush1.bf16.msra.mxu0 0
      %2418 = vmatprep.subr.bf16.mxu0 0
      %2419 = vmatpush1.bf16.msra.mxu0 0
      %2420 = vmatprep.mubr.bf16.mxu0 0
      %2421 = vmatmul.mubr.bf16.gmra.mrb[0].mxu0 %v1114
      %v2422 = vpop.f32.mrb[0].mxu0
      %v2423 = vadd.f32 %v2262, %v2422
      %v2424 = vpop.f32.mrb[0].mxu0
      %v2425 = vpop.f32.mrb[0].mxu0
      %v2426 = vadd.f32 %v2265, %v2425
      %v2427 = vpop.f32.mrb[0].mxu0
      %2428 = vmatprep.mubr.bf16.mxu0 0
      %2429 = vmatmul.mubr.bf16.gmra.mrb[0].mxu0 %v1115
      %v2430 = vpop.f32.mrb[0].mxu0
      %v2431 = vadd.f32 %v2270, %v2430
      %v2432 = vpop.f32.mrb[0].mxu0
      %v2433 = vpop.f32.mrb[0].mxu0
      %v2434 = vadd.f32 %v2273, %v2433
      %v2435 = vpop.f32.mrb[0].mxu0
      %2436 = vmatprep.mubr.bf16.mxu0 0
      %2437 = vmatmul.mubr.bf16.gmra.mrb[0].mxu0 %v1116
      %v2438 = vpop.f32.mrb[0].mxu0
      %v2439 = vadd.f32 %v2278, %v2438
      %v2440 = vpop.f32.mrb[0].mxu0
      %v2441 = vpop.f32.mrb[0].mxu0
      %v2442 = vadd.f32 %v2281, %v2441
      %v2443 = vpop.f32.mrb[0].mxu0
      %2444 = vmatprep.mubr.bf16.mxu0 0
      %2445 = vmatmul.mubr.bf16.gmra.mrb[0].mxu0 %v1117
      %v2446 = vpop.f32.mrb[0].mxu0
      %v2447 = vadd.f32 %v2286, %v2446
      %v2448 = vpop.f32.mrb[0].mxu0
      %v2449 = vpop.f32.mrb[0].mxu0
      %v2450 = vadd.f32 %v2289, %v2449
      %v2451 = vpop.f32.mrb[0].mxu0
      %2452 = vmatprep.mubr.bf16.mxu0 0
      %2453 = vmatmul.mubr.bf16.gmra.mrb[0].mxu0 %v1118
      %v2454 = vpop.f32.mrb[0].mxu0
      %v2455 = vadd.f32 %v2294, %v2454
      %v2456 = vpop.f32.mrb[0].mxu0
      %v2457 = vpop.f32.mrb[0].mxu0
      %v2458 = vadd.f32 %v2297, %v2457
      %v2459 = vpop.f32.mrb[0].mxu0
      %2460 = vmatprep.mubr.bf16.mxu0 0
      %2461 = vmatmul.mubr.bf16.gmra.mrb[0].mxu0 %v1119
      %v2462 = vpop.f32.mrb[0].mxu0
      %v2463 = vadd.f32 %v2302, %v2462
      %v2464 = vpop.f32.mrb[0].mxu0
      %v2465 = vpop.f32.mrb[0].mxu0
      %v2466 = vadd.f32 %v2305, %v2465
      %v2467 = vpop.f32.mrb[0].mxu0
      %2468 = vmatprep.mubr.bf16.mxu0 0
      %2469 = vmatmul.mubr.bf16.gmra.mrb[0].mxu0 %v1120
      %v2470 = vpop.f32.mrb[0].mxu0
      %v2471 = vadd.f32 %v2310, %v2470
      %v2472 = vpop.f32.mrb[0].mxu0
      %v2473 = vpop.f32.mrb[0].mxu0
      %v2474 = vadd.f32 %v2313, %v2473
      %v2475 = vpop.f32.mrb[0].mxu0
      %2476 = vmatprep.mubr.bf16.mxu0 0
      %2477 = vmatmul.mubr.bf16.gmra.mrb[0].mxu0 %v1121
      %v2478 = vpop.f32.mrb[0].mxu0
      %v2479 = vadd.f32 %v2318, %v2478
      %v2480 = vpop.f32.mrb[0].mxu0
      %v2481 = vpop.f32.mrb[0].mxu0
      %v2482 = vadd.f32 %v2321, %v2481
      %v2483 = vpop.f32.mrb[0].mxu0
      %2484 = vmatprep.mubr.bf16.mxu0 0
      %2485 = vmatmul.mubr.bf16.gmra.mrb[0].mxu0 %v1122
      %v2486 = vpop.f32.mrb[0].mxu0
      %v2487 = vadd.f32 %v2326, %v2486
      %v2488 = vpop.f32.mrb[0].mxu0
      %v2489 = vpop.f32.mrb[0].mxu0
      %v2490 = vadd.f32 %v2329, %v2489
      %v2491 = vpop.f32.mrb[0].mxu0
      %2492 = vmatprep.mubr.bf16.mxu0 0
      %2493 = vmatmul.mubr.bf16.gmra.mrb[0].mxu0 %v1123
      %v2494 = vpop.f32.mrb[0].mxu0
      %v2495 = vadd.f32 %v2334, %v2494
      %v2496 = vpop.f32.mrb[0].mxu0
      %v2497 = vpop.f32.mrb[0].mxu0
      %v2498 = vadd.f32 %v2337, %v2497
      %v2499 = vpop.f32.mrb[0].mxu0
      %2500 = vmatprep.mubr.bf16.mxu0 0
      %2501 = vmatmul.mubr.bf16.gmra.mrb[0].mxu0 %v1124
      %v2502 = vpop.f32.mrb[0].mxu0
      %v2503 = vadd.f32 %v2342, %v2502
      %v2504 = vpop.f32.mrb[0].mxu0
      %v2505 = vpop.f32.mrb[0].mxu0
      %v2506 = vadd.f32 %v2345, %v2505
      %v2507 = vpop.f32.mrb[0].mxu0
      %2508 = vmatprep.mubr.bf16.mxu0 0
      %2509 = vmatmul.mubr.bf16.gmra.mrb[0].mxu0 %v1125
      %v2510 = vpop.f32.mrb[0].mxu0
      %v2511 = vadd.f32 %v2350, %v2510
      %v2512 = vpop.f32.mrb[0].mxu0
      %v2513 = vpop.f32.mrb[0].mxu0
      %v2514 = vadd.f32 %v2353, %v2513
      %v2515 = vpop.f32.mrb[0].mxu0
      %2516 = vmatprep.mubr.bf16.mxu0 0
      %2517 = vmatmul.mubr.bf16.gmra.mrb[0].mxu0 %v1126
      %v2518 = vpop.f32.mrb[0].mxu0
      %v2519 = vadd.f32 %v2358, %v2518
      %v2520 = vpop.f32.mrb[0].mxu0
      %v2521 = vpop.f32.mrb[0].mxu0
      %v2522 = vadd.f32 %v2361, %v2521
      %v2523 = vpop.f32.mrb[0].mxu0
      %2524 = vmatprep.mubr.bf16.mxu0 0
      %2525 = vmatmul.mubr.bf16.gmra.mrb[0].mxu0 %v1127
      %v2526 = vpop.f32.mrb[0].mxu0
      %v2527 = vadd.f32 %v2366, %v2526
      %v2528 = vpop.f32.mrb[0].mxu0
      %v2529 = vpop.f32.mrb[0].mxu0
      %v2530 = vadd.f32 %v2369, %v2529
      %v2531 = vpop.f32.mrb[0].mxu0
      %2532 = vmatprep.mubr.bf16.mxu0 0
      %2533 = vmatmul.mubr.bf16.gmra.mrb[0].mxu0 %v1154
      %v2534 = vpop.f32.mrb[0].mxu0
      %v2535 = vadd.f32 %v2374, %v2534
      %v2536 = vpop.f32.mrb[0].mxu0
      %v2537 = vpop.f32.mrb[0].mxu0
      %v2538 = vadd.f32 %v2377, %v2537
      %v2539 = vpop.f32.mrb[0].mxu0
      %2540 = vmatprep.mubr.bf16.mxu0 0
      %2541 = vmatmul.mubr.bf16.gmra.mrb[0].mxu0 %v1166
      %v2542 = vpop.f32.mrb[0].mxu0
      %v2543 = vadd.f32 %v2382, %v2542
      %v2544 = vpop.f32.mrb[0].mxu0
      %v2545 = vpop.f32.mrb[0].mxu0
      %v2546 = vadd.f32 %v2385, %v2545
      %v2547 = vpop.f32.mrb[0].mxu0
      %2548 = vdwg.mxu0
      %v2549 = vld [vmem:[%s2] sm:$0x1]
      %v2551 = vlaneseq
      %v2552 = vshrl.u32 %v2551, 7
      %v2553 = vsub.s32 0, %v2552
      %v2554 = vrot.slane %v2549, %v2553
      %v2556 = vmul.f32 %v2423, %v2554
      %v2557 = vmul.f32 %v2426, %v2554
      %v2558 = vmul.f32 %v2431, %v2554
      %v2559 = vmul.f32 %v2434, %v2554
      %v2560 = vmul.f32 %v2439, %v2554
      %v2561 = vmul.f32 %v2442, %v2554
      %v2562 = vmul.f32 %v2447, %v2554
      %v2563 = vmul.f32 %v2450, %v2554
      %v2564 = vmul.f32 %v2455, %v2554
      %v2565 = vmul.f32 %v2458, %v2554
      %v2566 = vmul.f32 %v2463, %v2554
      %v2567 = vmul.f32 %v2466, %v2554
      %v2568 = vmul.f32 %v2471, %v2554
      %v2569 = vmul.f32 %v2474, %v2554
      %v2570 = vmul.f32 %v2479, %v2554
      %v2571 = vmul.f32 %v2482, %v2554
      %v2572 = vmul.f32 %v2487, %v2554
      %v2573 = vmul.f32 %v2490, %v2554
      %v2574 = vmul.f32 %v2495, %v2554
      %v2575 = vmul.f32 %v2498, %v2554
      %v2576 = vmul.f32 %v2503, %v2554
      %v2577 = vmul.f32 %v2506, %v2554
      %v2578 = vmul.f32 %v2511, %v2554
      %v2579 = vmul.f32 %v2514, %v2554
      %v2580 = vmul.f32 %v2519, %v2554
      %v2581 = vmul.f32 %v2522, %v2554
      %v2582 = vmul.f32 %v2527, %v2554
      %v2583 = vmul.f32 %v2530, %v2554
      %v2584 = vmul.f32 %v2535, %v2554
      %v2585 = vmul.f32 %v2538, %v2554
      %v2586 = vmul.f32 %v2543, %v2554
      %v2587 = vmul.f32 %v2546, %v2554
      %v2588 = vld [vmem:[%s3] sm:$0x1]
      %v2590 = vlaneseq
      %v2591 = vshrl.u32 %v2590, 7
      %v2592 = vsub.s32 0, %v2591
      %v2593 = vrot.slane %v2588, %v2592
      %v2595 = vadd.f32 %v2556, %v2593
      %v2596 = vadd.f32 %v2557, %v2593
      %v2597 = vadd.f32 %v2558, %v2593
      %v2598 = vadd.f32 %v2559, %v2593
      %v2599 = vadd.f32 %v2560, %v2593
      %v2600 = vadd.f32 %v2561, %v2593
      %v2601 = vadd.f32 %v2562, %v2593
      %v2602 = vadd.f32 %v2563, %v2593
      %v2603 = vadd.f32 %v2564, %v2593
      %v2604 = vadd.f32 %v2565, %v2593
      %v2605 = vadd.f32 %v2566, %v2593
      %v2606 = vadd.f32 %v2567, %v2593
      %v2607 = vadd.f32 %v2568, %v2593
      %v2608 = vadd.f32 %v2569, %v2593
      %v2609 = vadd.f32 %v2570, %v2593
      %v2610 = vadd.f32 %v2571, %v2593
      %v2611 = vadd.f32 %v2572, %v2593
      %v2612 = vadd.f32 %v2573, %v2593
      %v2613 = vadd.f32 %v2574, %v2593
      %v2614 = vadd.f32 %v2575, %v2593
      %v2615 = vadd.f32 %v2576, %v2593
      %v2616 = vadd.f32 %v2577, %v2593
      %v2617 = vadd.f32 %v2578, %v2593
      %v2618 = vadd.f32 %v2579, %v2593
      %v2619 = vadd.f32 %v2580, %v2593
      %v2620 = vadd.f32 %v2581, %v2593
      %v2621 = vadd.f32 %v2582, %v2593
      %v2622 = vadd.f32 %v2583, %v2593
      %v2623 = vadd.f32 %v2584, %v2593
      %v2624 = vadd.f32 %v2585, %v2593
      %v2625 = vadd.f32 %v2586, %v2593
      %v2626 = vadd.f32 %v2587, %v2593
      %v2627 = vmax.f32 %v2595, 0.0
      %v2628 = vmax.f32 %v2596, 0.0
      %v2629 = vmax.f32 %v2597, 0.0
      %v2630 = vmax.f32 %v2598, 0.0
      %v2631 = vmax.f32 %v2599, 0.0
      %v2632 = vmax.f32 %v2600, 0.0
      %v2633 = vmax.f32 %v2601, 0.0
      %v2634 = vmax.f32 %v2602, 0.0
      %v2635 = vmax.f32 %v2603, 0.0
      %v2636 = vmax.f32 %v2604, 0.0
      %v2637 = vmax.f32 %v2605, 0.0
      %v2638 = vmax.f32 %v2606, 0.0
      %v2639 = vmax.f32 %v2607, 0.0
      %v2640 = vmax.f32 %v2608, 0.0
      %v2641 = vmax.f32 %v2609, 0.0
      %v2642 = vmax.f32 %v2610, 0.0
      %v2643 = vmax.f32 %v2611, 0.0
      %v2644 = vmax.f32 %v2612, 0.0
      %v2645 = vmax.f32 %v2613, 0.0
      %v2646 = vmax.f32 %v2614, 0.0
      %v2647 = vmax.f32 %v2615, 0.0
      %v2648 = vmax.f32 %v2616, 0.0
      %v2649 = vmax.f32 %v2617, 0.0
      %v2650 = vmax.f32 %v2618, 0.0
      %v2651 = vmax.f32 %v2619, 0.0
      %v2652 = vmax.f32 %v2620, 0.0
      %v2653 = vmax.f32 %v2621, 0.0
      %v2654 = vmax.f32 %v2622, 0.0
      %v2655 = vmax.f32 %v2623, 0.0
      %v2656 = vmax.f32 %v2624, 0.0
      %v2657 = vmax.f32 %v2625, 0.0
      %v2658 = vmax.f32 %v2626, 0.0
      %2659 = vst [vmem:[#allocation2] sm:$0xf] 0
      %2660 = vst [vmem:[#allocation2 + $0x4] sm:$0xf] 0
      %2661 = vst [vmem:[#allocation2 + $0x8] sm:$0x1] 0
      %2662 = vst [vmem:[#allocation2 + $0xc] sm:$0xf] 0
      %2663 = vst [vmem:[#allocation2 + $0x10] sm:$0xf] 0
      %2664 = vst [vmem:[#allocation2 + $0x14] sm:$0x1] 0
      %2665 = vst [vmem:[#allocation2 + $0x18] sm:$0xf] 0
      %2666 = vst [vmem:[#allocation2 + $0x1c] sm:$0xf] 0
      %2667 = vst [vmem:[#allocation2 + $0x20] sm:$0x1] 0
      %2668 = vst [vmem:[#allocation2 + $0x24] sm:$0xf] 0
      %2669 = vst [vmem:[#allocation2 + $0x28] sm:$0xf] 0
      %2670 = vst [vmem:[#allocation2 + $0x2c] sm:$0x1] 0
      %2671 = vst [vmem:[#allocation2 + $0x30] sm:$0xf] 0
      %2672 = vst [vmem:[#allocation2 + $0x34] sm:$0xf] 0
      %2673 = vst [vmem:[#allocation2 + $0x38] sm:$0x1] 0
      %2674 = vst [vmem:[#allocation2 + $0x3c] sm:$0xf] 0
      %2675 = vst [vmem:[#allocation2 + $0x40] sm:$0xf] 0
      %2676 = vst [vmem:[#allocation2 + $0x44] sm:$0x1] 0
      %2677 = vst [vmem:[#allocation2 + $0x48] sm:$0xf] 0
      %2678 = vst [vmem:[#allocation2 + $0x4c] sm:$0xf] 0
      %2679 = vst [vmem:[#allocation2 + $0x50] sm:$0x1] 0
      %2680 = vst [vmem:[#allocation2 + $0x54] sm:$0xf] 0
      %2681 = vst [vmem:[#allocation2 + $0x58] sm:$0xf] 0
      %2682 = vst [vmem:[#allocation2 + $0x5c] sm:$0x1] 0
      %2683 = vst [vmem:[#allocation2 + $0x60] sm:$0xf] 0
      %2684 = vst [vmem:[#allocation2 + $0x64] sm:$0xf] 0
      %2685 = vst [vmem:[#allocation2 + $0x68] sm:$0x1] 0
      %2686 = vst [vmem:[#allocation2 + $0x6c] sm:$0xf] 0
      %2687 = vst [vmem:[#allocation2 + $0x70] sm:$0xf] 0
      %2688 = vst [vmem:[#allocation2 + $0x74] sm:$0x1] 0
      %2689 = vst [vmem:[#allocation2 + $0x78] sm:$0xf] 0
      %2690 = vst [vmem:[#allocation2 + $0x7c] sm:$0xf] 0
      %2691 = vst [vmem:[#allocation2 + $0x80] sm:$0x1] 0
      %2692 = vst [vmem:[#allocation2 + $0x84] sm:$0xf] 0
      %2693 = vst [vmem:[#allocation2 + $0x88] sm:$0xf] 0
      %2694 = vst [vmem:[#allocation2 + $0x8c] sm:$0x1] 0
      %2695 = vst [vmem:[#allocation2 + $0x90] sm:$0xf] 0
      %2696 = vst [vmem:[#allocation2 + $0x94] sm:$0xf] 0
      %2697 = vst [vmem:[#allocation2 + $0x98] sm:$0x1] 0
      %2698 = vst [vmem:[#allocation2 + $0x9c] sm:$0xf] 0
      %2699 = vst [vmem:[#allocation2 + $0xa0] sm:$0xf] 0
      %2700 = vst [vmem:[#allocation2 + $0xa4] sm:$0x1] 0
      %2701 = vst [vmem:[#allocation2 + $0xa8] sm:$0xf] 0
      %2702 = vst [vmem:[#allocation2 + $0xac] sm:$0xf] 0
      %2703 = vst [vmem:[#allocation2 + $0xb0] sm:$0x1] 0
      %2704 = vst [vmem:[#allocation2 + $0xb4] sm:$0xf] 0
      %2705 = vst [vmem:[#allocation2 + $0xb8] sm:$0xf] 0
      %2706 = vst [vmem:[#allocation2 + $0xbc] sm:$0x1] 0
      %2707 = vst [vmem:[#allocation2 + $0xc0] sm:$0xf] 0
      %2708 = vst [vmem:[#allocation2 + $0xc4] sm:$0xf] 0
      %2709 = vst [vmem:[#allocation2 + $0xc8] sm:$0x1] 0
      %2710 = vst [vmem:[#allocation2 + $0xcc] sm:$0xf] 0
      %2711 = vst [vmem:[#allocation2 + $0xd0] sm:$0xf] 0
      %2712 = vst [vmem:[#allocation2 + $0xd4] sm:$0x1] 0
      %v2713 = vpack.c.bf16 %v2628, %v2627
      %v2714 = vpack.c.bf16 %v2630, %v2629
      %v2715 = vpack.c.bf16 %v2632, %v2631
      %v2716 = vpack.c.bf16 %v2634, %v2633
      %v2717 = vpack.c.bf16 %v2636, %v2635
      %v2718 = vpack.c.bf16 %v2638, %v2637
      %v2719 = vpack.c.bf16 %v2640, %v2639
      %v2720 = vpack.c.bf16 %v2642, %v2641
      %v2721 = vpack.c.bf16 %v2644, %v2643
      %v2722 = vpack.c.bf16 %v2646, %v2645
      %v2723 = vpack.c.bf16 %v2648, %v2647
      %v2724 = vpack.c.bf16 %v2650, %v2649
      %v2725 = vpack.c.bf16 %v2652, %v2651
      %v2726 = vpack.c.bf16 %v2654, %v2653
      %v2727 = vpack.c.bf16 %v2656, %v2655
      %v2728 = vpack.c.bf16 %v2658, %v2657
      %v2745 = vunpack.c.l.b16 %v2713
      %v2746 = vunpack.c.h.b16 %v2713
      %v2747 = vunpack.c.l.b16 %v2714
      %v2748 = vunpack.c.h.b16 %v2714
      %v2749 = vunpack.c.l.b16 %v2715
      %v2750 = vunpack.c.h.b16 %v2715
      %v2751 = vunpack.c.l.b16 %v2716
      %v2752 = vunpack.c.h.b16 %v2716
      %v2753 = vunpack.c.l.b16 %v2717
      %v2754 = vunpack.c.h.b16 %v2717
      %v2755 = vunpack.c.l.b16 %v2718
      %v2756 = vunpack.c.h.b16 %v2718
      %v2757 = vunpack.c.l.b16 %v2719
      %v2758 = vunpack.c.h.b16 %v2719
      %v2759 = vunpack.c.l.b16 %v2720
      %v2760 = vunpack.c.h.b16 %v2720
      %v2761 = vunpack.c.l.b16 %v2721
      %v2762 = vunpack.c.h.b16 %v2721
      %v2763 = vunpack.c.l.b16 %v2722
      %v2764 = vunpack.c.h.b16 %v2722
      %v2765 = vunpack.c.l.b16 %v2723
      %v2766 = vunpack.c.h.b16 %v2723
      %v2767 = vunpack.c.l.b16 %v2724
      %v2768 = vunpack.c.h.b16 %v2724
      %v2769 = vunpack.c.l.b16 %v2725
      %v2770 = vunpack.c.h.b16 %v2725
      %v2771 = vunpack.c.l.b16 %v2726
      %v2772 = vunpack.c.h.b16 %v2726
      %v2773 = vunpack.c.l.b16 %v2727
      %v2774 = vunpack.c.h.b16 %v2727
      %v2775 = vunpack.c.l.b16 %v2728
      %v2776 = vunpack.c.h.b16 %v2728
      %v2777 = vpack.c.b16 %v2745, %v2745
      %v2778 = vpack.c.b16 %v2746, %v2746
      %v2779 = vpack.c.b16 %v2747, %v2747
      %v2780 = vpack.c.b16 %v2748, %v2748
      %v2781 = vpack.c.b16 %v2749, %v2749
      %v2782 = vpack.c.b16 %v2750, %v2750
      %v2783 = vpack.c.b16 %v2751, %v2751
      %v2784 = vpack.c.b16 %v2752, %v2752
      %v2785 = vpack.c.b16 %v2753, %v2753
      %v2786 = vpack.c.b16 %v2754, %v2754
      %v2787 = vpack.c.b16 %v2755, %v2755
      %v2788 = vpack.c.b16 %v2756, %v2756
      %v2789 = vpack.c.b16 %v2757, %v2757
      %v2790 = vpack.c.b16 %v2758, %v2758
      %v2791 = vpack.c.b16 %v2759, %v2759
      %v2792 = vpack.c.b16 %v2760, %v2760
      %v2793 = vpack.c.b16 %v2761, %v2761
      %v2794 = vpack.c.b16 %v2762, %v2762
      %v2795 = vpack.c.b16 %v2763, %v2763
      %v2796 = vpack.c.b16 %v2764, %v2764
      %v2797 = vpack.c.b16 %v2765, %v2765
      %v2798 = vpack.c.b16 %v2766, %v2766
      %v2799 = vpack.c.b16 %v2767, %v2767
      %v2800 = vpack.c.b16 %v2768, %v2768
      %v2801 = vpack.c.b16 %v2769, %v2769
      %v2802 = vpack.c.b16 %v2770, %v2770
      %v2803 = vpack.c.b16 %v2771, %v2771
      %v2804 = vpack.c.b16 %v2772, %v2772
      %v2805 = vpack.c.b16 %v2773, %v2773
      %v2806 = vpack.c.b16 %v2774, %v2774
      %v2807 = vpack.c.b16 %v2775, %v2775
      %v2808 = vpack.c.b16 %v2776, %v2776
      %vm2809 = vsmask.f32 256
      %vm2810 = vsmask.f32 4368
      %vm2811 = vmor %vm2809, %vm2810
      %v2813 = vshrl.u32 %v2777, 16
      %v2815 = vrot.slane %v2813, 7
      %v2816 = vshll.u32 %v2777, 16
      %v2818 = vor.u32 %v2815, %v2816
      %v2819 = vrot.slane %v2815, 4
      %v2821 = vshrl.u32 %v2778, 16
      %v2823 = vrot.slane %v2821, 7
      %v2824 = vshll.u32 %v2778, 16
      %v2826 = vor.u32 %v2823, %v2824
      %v2827 = vsel %vm2811, %v2819, %v2826
      %v2828 = vrot.slane %v2823, 4
      %v2830 = vshrl.u32 %v2779, 16
      %v2832 = vrot.slane %v2830, 7
      %v2833 = vshll.u32 %v2779, 16
      %v2835 = vor.u32 %v2832, %v2833
      %v2836 = vrot.slane %v2832, 4
      %v2838 = vshrl.u32 %v2780, 16
      %v2840 = vrot.slane %v2838, 7
      %v2841 = vshll.u32 %v2780, 16
      %v2843 = vor.u32 %v2840, %v2841
      %v2844 = vsel %vm2811, %v2836, %v2843
      %v2845 = vrot.slane %v2840, 4
      %v2847 = vshrl.u32 %v2781, 16
      %v2849 = vrot.slane %v2847, 7
      %v2850 = vshll.u32 %v2781, 16
      %v2852 = vor.u32 %v2849, %v2850
      %v2853 = vrot.slane %v2849, 4
      %v2855 = vshrl.u32 %v2782, 16
      %v2857 = vrot.slane %v2855, 7
      %v2858 = vshll.u32 %v2782, 16
      %v2860 = vor.u32 %v2857, %v2858
      %v2861 = vsel %vm2811, %v2853, %v2860
      %v2862 = vrot.slane %v2857, 4
      %v2864 = vshrl.u32 %v2783, 16
      %v2866 = vrot.slane %v2864, 7
      %v2867 = vshll.u32 %v2783, 16
      %v2869 = vor.u32 %v2866, %v2867
      %v2870 = vrot.slane %v2866, 4
      %v2872 = vshrl.u32 %v2784, 16
      %v2874 = vrot.slane %v2872, 7
      %v2875 = vshll.u32 %v2784, 16
      %v2877 = vor.u32 %v2874, %v2875
      %v2878 = vsel %vm2811, %v2870, %v2877
      %v2879 = vrot.slane %v2874, 4
      %v2881 = vshrl.u32 %v2785, 16
      %v2883 = vrot.slane %v2881, 7
      %v2884 = vshll.u32 %v2785, 16
      %v2886 = vor.u32 %v2883, %v2884
      %v2887 = vrot.slane %v2883, 4
      %v2889 = vshrl.u32 %v2786, 16
      %v2891 = vrot.slane %v2889, 7
      %v2892 = vshll.u32 %v2786, 16
      %v2894 = vor.u32 %v2891, %v2892
      %v2895 = vsel %vm2811, %v2887, %v2894
      %v2896 = vrot.slane %v2891, 4
      %v2898 = vshrl.u32 %v2787, 16
      %v2900 = vrot.slane %v2898, 7
      %v2901 = vshll.u32 %v2787, 16
      %v2903 = vor.u32 %v2900, %v2901
      %v2904 = vrot.slane %v2900, 4
      %v2906 = vshrl.u32 %v2788, 16
      %v2908 = vrot.slane %v2906, 7
      %v2909 = vshll.u32 %v2788, 16
      %v2911 = vor.u32 %v2908, %v2909
      %v2912 = vsel %vm2811, %v2904, %v2911
      %v2913 = vrot.slane %v2908, 4
      %v2915 = vshrl.u32 %v2789, 16
      %v2917 = vrot.slane %v2915, 7
      %v2918 = vshll.u32 %v2789, 16
      %v2920 = vor.u32 %v2917, %v2918
      %v2921 = vrot.slane %v2917, 4
      %v2923 = vshrl.u32 %v2790, 16
      %v2925 = vrot.slane %v2923, 7
      %v2926 = vshll.u32 %v2790, 16
      %v2928 = vor.u32 %v2925, %v2926
      %v2929 = vsel %vm2811, %v2921, %v2928
      %v2930 = vrot.slane %v2925, 4
      %v2932 = vshrl.u32 %v2791, 16
      %v2934 = vrot.slane %v2932, 7
      %v2935 = vshll.u32 %v2791, 16
      %v2937 = vor.u32 %v2934, %v2935
      %v2938 = vrot.slane %v2934, 4
      %v2940 = vshrl.u32 %v2792, 16
      %v2942 = vrot.slane %v2940, 7
      %v2943 = vshll.u32 %v2792, 16
      %v2945 = vor.u32 %v2942, %v2943
      %v2946 = vsel %vm2811, %v2938, %v2945
      %v2947 = vrot.slane %v2942, 4
      %v2949 = vshrl.u32 %v2793, 16
      %v2951 = vrot.slane %v2949, 7
      %v2952 = vshll.u32 %v2793, 16
      %v2954 = vor.u32 %v2951, %v2952
      %v2955 = vrot.slane %v2951, 4
      %v2957 = vshrl.u32 %v2794, 16
      %v2959 = vrot.slane %v2957, 7
      %v2960 = vshll.u32 %v2794, 16
      %v2962 = vor.u32 %v2959, %v2960
      %v2963 = vsel %vm2811, %v2955, %v2962
      %v2964 = vrot.slane %v2959, 4
      %v2966 = vshrl.u32 %v2795, 16
      %v2968 = vrot.slane %v2966, 7
      %v2969 = vshll.u32 %v2795, 16
      %v2971 = vor.u32 %v2968, %v2969
      %v2972 = vrot.slane %v2968, 4
      %v2974 = vshrl.u32 %v2796, 16
      %v2976 = vrot.slane %v2974, 7
      %v2977 = vshll.u32 %v2796, 16
      %v2979 = vor.u32 %v2976, %v2977
      %v2980 = vsel %vm2811, %v2972, %v2979
      %v2981 = vrot.slane %v2976, 4
      %v2983 = vshrl.u32 %v2797, 16
      %v2985 = vrot.slane %v2983, 7
      %v2986 = vshll.u32 %v2797, 16
      %v2988 = vor.u32 %v2985, %v2986
      %v2989 = vrot.slane %v2985, 4
      %v2991 = vshrl.u32 %v2798, 16
      %v2993 = vrot.slane %v2991, 7
      %v2994 = vshll.u32 %v2798, 16
      %v2996 = vor.u32 %v2993, %v2994
      %v2997 = vsel %vm2811, %v2989, %v2996
      %v2998 = vrot.slane %v2993, 4
      %v3000 = vshrl.u32 %v2799, 16
      %v3002 = vrot.slane %v3000, 7
      %v3003 = vshll.u32 %v2799, 16
      %v3005 = vor.u32 %v3002, %v3003
      %v3006 = vrot.slane %v3002, 4
      %v3008 = vshrl.u32 %v2800, 16
      %v3010 = vrot.slane %v3008, 7
      %v3011 = vshll.u32 %v2800, 16
      %v3013 = vor.u32 %v3010, %v3011
      %v3014 = vsel %vm2811, %v3006, %v3013
      %v3015 = vrot.slane %v3010, 4
      %v3017 = vshrl.u32 %v2801, 16
      %v3019 = vrot.slane %v3017, 7
      %v3020 = vshll.u32 %v2801, 16
      %v3022 = vor.u32 %v3019, %v3020
      %v3023 = vrot.slane %v3019, 4
      %v3025 = vshrl.u32 %v2802, 16
      %v3027 = vrot.slane %v3025, 7
      %v3028 = vshll.u32 %v2802, 16
      %v3030 = vor.u32 %v3027, %v3028
      %v3031 = vsel %vm2811, %v3023, %v3030
      %v3032 = vrot.slane %v3027, 4
      %v3034 = vshrl.u32 %v2803, 16
      %v3036 = vrot.slane %v3034, 7
      %v3037 = vshll.u32 %v2803, 16
      %v3039 = vor.u32 %v3036, %v3037
      %v3040 = vrot.slane %v3036, 4
      %v3042 = vshrl.u32 %v2804, 16
      %v3044 = vrot.slane %v3042, 7
      %v3045 = vshll.u32 %v2804, 16
      %v3047 = vor.u32 %v3044, %v3045
      %v3048 = vsel %vm2811, %v3040, %v3047
      %v3049 = vrot.slane %v3044, 4
      %v3051 = vshrl.u32 %v2805, 16
      %v3053 = vrot.slane %v3051, 7
      %v3054 = vshll.u32 %v2805, 16
      %v3056 = vor.u32 %v3053, %v3054
      %v3057 = vrot.slane %v3053, 4
      %v3059 = vshrl.u32 %v2806, 16
      %v3061 = vrot.slane %v3059, 7
      %v3062 = vshll.u32 %v2806, 16
      %v3064 = vor.u32 %v3061, %v3062
      %v3065 = vsel %vm2811, %v3057, %v3064
      %v3066 = vrot.slane %v3061, 4
      %v3068 = vshrl.u32 %v2807, 16
      %v3070 = vrot.slane %v3068, 7
      %v3071 = vshll.u32 %v2807, 16
      %v3073 = vor.u32 %v3070, %v3071
      %v3074 = vrot.slane %v3070, 4
      %v3076 = vshrl.u32 %v2808, 16
      %v3078 = vrot.slane %v3076, 7
      %v3079 = vshll.u32 %v2808, 16
      %v3081 = vor.u32 %v3078, %v3079
      %v3082 = vsel %vm2811, %v3074, %v3081
      %v3083 = vrot.slane %v3078, 4
      %s3132 = scalar_lea.vmem [#allocation2], 12
      %vm3133 = vcmask 1043456
      %vm3134 = vsmask.f32 7938
      %vm3135 = vmand %vm3133, %vm3134
      %v3136 = vld [vmem:[%s3132] sm:$0xf]
      %v3137 = vsel %vm3135, %v2818, %v3136
      %3138 = vst [vmem:[%s3132] sm:$0xf] %v3137
      %3139 = vst [vmem:[%s3132 + $0x4] sm:$0xf] %v2827
      %vm3140 = vcmask 1040384
      %vm3141 = vmand %vm3140, %vm2809
      %v3142 = vld [vmem:[%s3132 + $0x8] sm:$0x1]
      %v3143 = vsel %vm3141, %v2828, %v3142
      %3144 = vst [vmem:[%s3132 + $0x8] sm:$0x1] %v3143
      %v3145 = vld [vmem:[%s3132 + $0xc] sm:$0xf]
      %v3146 = vsel %vm3135, %v2835, %v3145
      %3147 = vst [vmem:[%s3132 + $0xc] sm:$0xf] %v3146
      %3148 = vst [vmem:[%s3132 + $0x10] sm:$0xf] %v2844
      %v3149 = vld [vmem:[%s3132 + $0x14] sm:$0x1]
      %v3150 = vsel %vm3141, %v2845, %v3149
      %3151 = vst [vmem:[%s3132 + $0x14] sm:$0x1] %v3150
      %v3152 = vld [vmem:[%s3132 + $0x18] sm:$0xf]
      %v3153 = vsel %vm3135, %v2852, %v3152
      %3154 = vst [vmem:[%s3132 + $0x18] sm:$0xf] %v3153
      %3155 = vst [vmem:[%s3132 + $0x1c] sm:$0xf] %v2861
      %v3156 = vld [vmem:[%s3132 + $0x20] sm:$0x1]
      %v3157 = vsel %vm3141, %v2862, %v3156
      %3158 = vst [vmem:[%s3132 + $0x20] sm:$0x1] %v3157
      %v3159 = vld [vmem:[%s3132 + $0x24] sm:$0xf]
      %v3160 = vsel %vm3135, %v2869, %v3159
      %3161 = vst [vmem:[%s3132 + $0x24] sm:$0xf] %v3160
      %3162 = vst [vmem:[%s3132 + $0x28] sm:$0xf] %v2878
      %v3163 = vld [vmem:[%s3132 + $0x2c] sm:$0x1]
      %v3164 = vsel %vm3141, %v2879, %v3163
      %3165 = vst [vmem:[%s3132 + $0x2c] sm:$0x1] %v3164
      %v3166 = vld [vmem:[%s3132 + $0x30] sm:$0xf]
      %v3167 = vsel %vm3135, %v2886, %v3166
      %3168 = vst [vmem:[%s3132 + $0x30] sm:$0xf] %v3167
      %3169 = vst [vmem:[%s3132 + $0x34] sm:$0xf] %v2895
      %v3170 = vld [vmem:[%s3132 + $0x38] sm:$0x1]
      %v3171 = vsel %vm3141, %v2896, %v3170
      %3172 = vst [vmem:[%s3132 + $0x38] sm:$0x1] %v3171
      %v3173 = vld [vmem:[%s3132 + $0x3c] sm:$0xf]
      %v3174 = vsel %vm3135, %v2903, %v3173
      %3175 = vst [vmem:[%s3132 + $0x3c] sm:$0xf] %v3174
      %3176 = vst [vmem:[%s3132 + $0x40] sm:$0xf] %v2912
      %v3177 = vld [vmem:[%s3132 + $0x44] sm:$0x1]
      %v3178 = vsel %vm3141, %v2913, %v3177
      %3179 = vst [vmem:[%s3132 + $0x44] sm:$0x1] %v3178
      %v3180 = vld [vmem:[%s3132 + $0x48] sm:$0xf]
      %v3181 = vsel %vm3135, %v2920, %v3180
      %3182 = vst [vmem:[%s3132 + $0x48] sm:$0xf] %v3181
      %3183 = vst [vmem:[%s3132 + $0x4c] sm:$0xf] %v2929
      %v3184 = vld [vmem:[%s3132 + $0x50] sm:$0x1]
      %v3185 = vsel %vm3141, %v2930, %v3184
      %3186 = vst [vmem:[%s3132 + $0x50] sm:$0x1] %v3185
      %v3187 = vld [vmem:[%s3132 + $0x54] sm:$0xf]
      %v3188 = vsel %vm3135, %v2937, %v3187
      %3189 = vst [vmem:[%s3132 + $0x54] sm:$0xf] %v3188
      %3190 = vst [vmem:[%s3132 + $0x58] sm:$0xf] %v2946
      %v3191 = vld [vmem:[%s3132 + $0x5c] sm:$0x1]
      %v3192 = vsel %vm3141, %v2947, %v3191
      %3193 = vst [vmem:[%s3132 + $0x5c] sm:$0x1] %v3192
      %v3194 = vld [vmem:[%s3132 + $0x60] sm:$0xf]
      %v3195 = vsel %vm3135, %v2954, %v3194
      %3196 = vst [vmem:[%s3132 + $0x60] sm:$0xf] %v3195
      %3197 = vst [vmem:[%s3132 + $0x64] sm:$0xf] %v2963
      %v3198 = vld [vmem:[%s3132 + $0x68] sm:$0x1]
      %v3199 = vsel %vm3141, %v2964, %v3198
      %3200 = vst [vmem:[%s3132 + $0x68] sm:$0x1] %v3199
      %v3201 = vld [vmem:[%s3132 + $0x6c] sm:$0xf]
      %v3202 = vsel %vm3135, %v2971, %v3201
      %3203 = vst [vmem:[%s3132 + $0x6c] sm:$0xf] %v3202
      %3204 = vst [vmem:[%s3132 + $0x70] sm:$0xf] %v2980
      %v3205 = vld [vmem:[%s3132 + $0x74] sm:$0x1]
      %v3206 = vsel %vm3141, %v2981, %v3205
      %3207 = vst [vmem:[%s3132 + $0x74] sm:$0x1] %v3206
      %v3208 = vld [vmem:[%s3132 + $0x78] sm:$0xf]
      %v3209 = vsel %vm3135, %v2988, %v3208
      %3210 = vst [vmem:[%s3132 + $0x78] sm:$0xf] %v3209
      %3211 = vst [vmem:[%s3132 + $0x7c] sm:$0xf] %v2997
      %v3212 = vld [vmem:[%s3132 + $0x80] sm:$0x1]
      %v3213 = vsel %vm3141, %v2998, %v3212
      %3214 = vst [vmem:[%s3132 + $0x80] sm:$0x1] %v3213
      %v3215 = vld [vmem:[%s3132 + $0x84] sm:$0xf]
      %v3216 = vsel %vm3135, %v3005, %v3215
      %3217 = vst [vmem:[%s3132 + $0x84] sm:$0xf] %v3216
      %3218 = vst [vmem:[%s3132 + $0x88] sm:$0xf] %v3014
      %v3219 = vld [vmem:[%s3132 + $0x8c] sm:$0x1]
      %v3220 = vsel %vm3141, %v3015, %v3219
      %3221 = vst [vmem:[%s3132 + $0x8c] sm:$0x1] %v3220
      %v3222 = vld [vmem:[%s3132 + $0x90] sm:$0xf]
      %v3223 = vsel %vm3135, %v3022, %v3222
      %3224 = vst [vmem:[%s3132 + $0x90] sm:$0xf] %v3223
      %3225 = vst [vmem:[%s3132 + $0x94] sm:$0xf] %v3031
      %v3226 = vld [vmem:[%s3132 + $0x98] sm:$0x1]
      %v3227 = vsel %vm3141, %v3032, %v3226
      %3228 = vst [vmem:[%s3132 + $0x98] sm:$0x1] %v3227
      %v3229 = vld [vmem:[%s3132 + $0x9c] sm:$0xf]
      %v3230 = vsel %vm3135, %v3039, %v3229
      %3231 = vst [vmem:[%s3132 + $0x9c] sm:$0xf] %v3230
      %3232 = vst [vmem:[%s3132 + $0xa0] sm:$0xf] %v3048
      %v3233 = vld [vmem:[%s3132 + $0xa4] sm:$0x1]
      %v3234 = vsel %vm3141, %v3049, %v3233
      %3235 = vst [vmem:[%s3132 + $0xa4] sm:$0x1] %v3234
      %v3236 = vld [vmem:[%s3132 + $0xa8] sm:$0xf]
      %v3237 = vsel %vm3135, %v3056, %v3236
      %3238 = vst [vmem:[%s3132 + $0xa8] sm:$0xf] %v3237
      %3239 = vst [vmem:[%s3132 + $0xac] sm:$0xf] %v3065
      %v3240 = vld [vmem:[%s3132 + $0xb0] sm:$0x1]
      %v3241 = vsel %vm3141, %v3066, %v3240
      %3242 = vst [vmem:[%s3132 + $0xb0] sm:$0x1] %v3241
      %v3243 = vld [vmem:[%s3132 + $0xb4] sm:$0xf]
      %v3244 = vsel %vm3135, %v3073, %v3243
      %3245 = vst [vmem:[%s3132 + $0xb4] sm:$0xf] %v3244
      %3246 = vst [vmem:[%s3132 + $0xb8] sm:$0xf] %v3082
      %v3247 = vld [vmem:[%s3132 + $0xbc] sm:$0x1]
      %v3248 = vsel %vm3141, %v3083, %v3247
      %3249 = vst [vmem:[%s3132 + $0xbc] sm:$0x1] %v3248
      %v3250 = vld [vmem:[#allocation2] sm:$0xf]
      %v3251 = vld [vmem:[#allocation2 + $0x4] sm:$0xf]
      %v3252 = vld [vmem:[#allocation2 + $0x8] sm:$0x1]
      %v3253 = vld [vmem:[#allocation2 + $0xc] sm:$0xf]
      %v3254 = vld [vmem:[#allocation2 + $0x10] sm:$0xf]
      %v3255 = vld [vmem:[#allocation2 + $0x14] sm:$0x1]
      %v3256 = vld [vmem:[#allocation2 + $0x18] sm:$0xf]
      %v3257 = vld [vmem:[#allocation2 + $0x1c] sm:$0xf]
      %v3258 = vld [vmem:[#allocation2 + $0x20] sm:$0x1]
      %v3259 = vld [vmem:[#allocation2 + $0x24] sm:$0xf]
      %v3260 = vld [vmem:[#allocation2 + $0x28] sm:$0xf]
      %v3261 = vld [vmem:[#allocation2 + $0x2c] sm:$0x1]
      %v3262 = vld [vmem:[#allocation2 + $0x30] sm:$0xf]
      %v3263 = vld [vmem:[#allocation2 + $0x34] sm:$0xf]
      %v3264 = vld [vmem:[#allocation2 + $0x38] sm:$0x1]
      %v3265 = vld [vmem:[#allocation2 + $0x3c] sm:$0xf]
      %v3266 = vld [vmem:[#allocation2 + $0x40] sm:$0xf]
      %v3267 = vld [vmem:[#allocation2 + $0x44] sm:$0x1]
      %v3268 = vld [vmem:[#allocation2 + $0x48] sm:$0xf]
      %v3269 = vld [vmem:[#allocation2 + $0x4c] sm:$0xf]
      %v3270 = vld [vmem:[#allocation2 + $0x50] sm:$0x1]
      %v3271 = vld [vmem:[#allocation2 + $0x54] sm:$0xf]
      %v3272 = vld [vmem:[#allocation2 + $0x58] sm:$0xf]
      %v3273 = vld [vmem:[#allocation2 + $0x5c] sm:$0x1]
      %v3274 = vld [vmem:[#allocation2 + $0x60] sm:$0xf]
      %v3275 = vld [vmem:[#allocation2 + $0x64] sm:$0xf]
      %v3276 = vld [vmem:[#allocation2 + $0x68] sm:$0x1]
      %v3277 = vld [vmem:[#allocation2 + $0x6c] sm:$0xf]
      %v3278 = vld [vmem:[#allocation2 + $0x70] sm:$0xf]
      %v3279 = vld [vmem:[#allocation2 + $0x74] sm:$0x1]
      %v3280 = vld [vmem:[#allocation2 + $0x78] sm:$0xf]
      %v3281 = vld [vmem:[#allocation2 + $0x7c] sm:$0xf]
      %v3282 = vld [vmem:[#allocation2 + $0x80] sm:$0x1]
      %v3283 = vld [vmem:[#allocation2 + $0x84] sm:$0xf]
      %v3284 = vld [vmem:[#allocation2 + $0x88] sm:$0xf]
      %v3285 = vld [vmem:[#allocation2 + $0x8c] sm:$0x1]
      %v3286 = vld [vmem:[#allocation2 + $0x90] sm:$0xf]
      %v3287 = vld [vmem:[#allocation2 + $0x94] sm:$0xf]
      %v3288 = vld [vmem:[#allocation2 + $0x98] sm:$0x1]
      %v3289 = vld [vmem:[#allocation2 + $0x9c] sm:$0xf]
      %v3290 = vld [vmem:[#allocation2 + $0xa0] sm:$0xf]
      %v3291 = vld [vmem:[#allocation2 + $0xa4] sm:$0x1]
      %v3292 = vld [vmem:[#allocation2 + $0xa8] sm:$0xf]
      %v3293 = vld [vmem:[#allocation2 + $0xac] sm:$0xf]
      %v3294 = vld [vmem:[#allocation2 + $0xb0] sm:$0x1]
      %v3295 = vld [vmem:[#allocation2 + $0xb4] sm:$0xf]
      %v3296 = vld [vmem:[#allocation2 + $0xb8] sm:$0xf]
      %v3297 = vld [vmem:[#allocation2 + $0xbc] sm:$0x1]
      %v3298 = vld [vmem:[#allocation2 + $0xc0] sm:$0xf]
      %v3299 = vld [vmem:[#allocation2 + $0xc4] sm:$0xf]
      %v3300 = vld [vmem:[#allocation2 + $0xc8] sm:$0x1]
      %v3301 = vld [vmem:[#allocation2 + $0xcc] sm:$0xf]
      %v3302 = vld [vmem:[#allocation2 + $0xd0] sm:$0xf]
      %v3303 = vld [vmem:[#allocation2 + $0xd4] sm:$0x1]
      %v3305 = vshrl.u32 %v3250, 16
      %v3307 = vrot.slane %v3305, 4
      %v3308 = vshll.u32 %v3250, 16
      %v3310 = vrot.slane %v3308, 5
      %v3311 = vor.u32 %v3307, %v3310
      %v3312 = vrot.slane %v3311, 4
      %v3314 = vshll.u32 %v3251, 16
      %v3316 = vrot.slane %v3314, 5
      %v3317 = vsel %vm336, %v3312, %v3316
      %v3318 = vshrl.u32 %v3251, 16
      %v3320 = vrot.slane %v3318, 4
      %v3321 = vor.u32 %v3320, %v3316
      %v3322 = vrot.slane %v3321, 4
      %v3324 = vshll.u32 %v3252, 16
      %v3326 = vrot.slane %v3324, 5
      %v3327 = vsel %vm336, %v3322, %v3326
      %v3329 = vshrl.u32 %v3253, 16
      %v3331 = vrot.slane %v3329, 4
      %v3332 = vshll.u32 %v3253, 16
      %v3334 = vrot.slane %v3332, 5
      %v3335 = vor.u32 %v3331, %v3334
      %v3336 = vrot.slane %v3335, 4
      %v3338 = vshll.u32 %v3254, 16
      %v3340 = vrot.slane %v3338, 5
      %v3341 = vsel %vm336, %v3336, %v3340
      %v3342 = vshrl.u32 %v3254, 16
      %v3344 = vrot.slane %v3342, 4
      %v3345 = vor.u32 %v3344, %v3340
      %v3346 = vrot.slane %v3345, 4
      %v3348 = vshll.u32 %v3255, 16
      %v3350 = vrot.slane %v3348, 5
      %v3351 = vsel %vm336, %v3346, %v3350
      %v3353 = vshrl.u32 %v3256, 16
      %v3355 = vrot.slane %v3353, 4
      %v3356 = vshll.u32 %v3256, 16
      %v3358 = vrot.slane %v3356, 5
      %v3359 = vor.u32 %v3355, %v3358
      %v3360 = vrot.slane %v3359, 4
      %v3362 = vshll.u32 %v3257, 16
      %v3364 = vrot.slane %v3362, 5
      %v3365 = vsel %vm336, %v3360, %v3364
      %v3366 = vshrl.u32 %v3257, 16
      %v3368 = vrot.slane %v3366, 4
      %v3369 = vor.u32 %v3368, %v3364
      %v3370 = vrot.slane %v3369, 4
      %v3372 = vshll.u32 %v3258, 16
      %v3374 = vrot.slane %v3372, 5
      %v3375 = vsel %vm336, %v3370, %v3374
      %v3377 = vshrl.u32 %v3259, 16
      %v3379 = vrot.slane %v3377, 4
      %v3380 = vshll.u32 %v3259, 16
      %v3382 = vrot.slane %v3380, 5
      %v3383 = vor.u32 %v3379, %v3382
      %v3384 = vrot.slane %v3383, 4
      %v3386 = vshll.u32 %v3260, 16
      %v3388 = vrot.slane %v3386, 5
      %v3389 = vsel %vm336, %v3384, %v3388
      %v3390 = vshrl.u32 %v3260, 16
      %v3392 = vrot.slane %v3390, 4
      %v3393 = vor.u32 %v3392, %v3388
      %v3394 = vrot.slane %v3393, 4
      %v3396 = vshll.u32 %v3261, 16
      %v3398 = vrot.slane %v3396, 5
      %v3399 = vsel %vm336, %v3394, %v3398
      %v3401 = vshrl.u32 %v3262, 16
      %v3403 = vrot.slane %v3401, 4
      %v3404 = vshll.u32 %v3262, 16
      %v3406 = vrot.slane %v3404, 5
      %v3407 = vor.u32 %v3403, %v3406
      %v3408 = vrot.slane %v3407, 4
      %v3410 = vshll.u32 %v3263, 16
      %v3412 = vrot.slane %v3410, 5
      %v3413 = vsel %vm336, %v3408, %v3412
      %v3414 = vshrl.u32 %v3263, 16
      %v3416 = vrot.slane %v3414, 4
      %v3417 = vor.u32 %v3416, %v3412
      %v3418 = vrot.slane %v3417, 4
      %v3420 = vshll.u32 %v3264, 16
      %v3422 = vrot.slane %v3420, 5
      %v3423 = vsel %vm336, %v3418, %v3422
      %v3425 = vshrl.u32 %v3265, 16
      %v3427 = vrot.slane %v3425, 4
      %v3428 = vshll.u32 %v3265, 16
      %v3430 = vrot.slane %v3428, 5
      %v3431 = vor.u32 %v3427, %v3430
      %v3432 = vrot.slane %v3431, 4
      %v3434 = vshll.u32 %v3266, 16
      %v3436 = vrot.slane %v3434, 5
      %v3437 = vsel %vm336, %v3432, %v3436
      %v3438 = vshrl.u32 %v3266, 16
      %v3440 = vrot.slane %v3438, 4
      %v3441 = vor.u32 %v3440, %v3436
      %v3442 = vrot.slane %v3441, 4
      %v3444 = vshll.u32 %v3267, 16
      %v3446 = vrot.slane %v3444, 5
      %v3447 = vsel %vm336, %v3442, %v3446
      %v3449 = vshrl.u32 %v3268, 16
      %v3451 = vrot.slane %v3449, 4
      %v3452 = vshll.u32 %v3268, 16
      %v3454 = vrot.slane %v3452, 5
      %v3455 = vor.u32 %v3451, %v3454
      %v3456 = vrot.slane %v3455, 4
      %v3458 = vshll.u32 %v3269, 16
      %v3460 = vrot.slane %v3458, 5
      %v3461 = vsel %vm336, %v3456, %v3460
      %v3462 = vshrl.u32 %v3269, 16
      %v3464 = vrot.slane %v3462, 4
      %v3465 = vor.u32 %v3464, %v3460
      %v3466 = vrot.slane %v3465, 4
      %v3468 = vshll.u32 %v3270, 16
      %v3470 = vrot.slane %v3468, 5
      %v3471 = vsel %vm336, %v3466, %v3470
      %v3473 = vshrl.u32 %v3271, 16
      %v3475 = vrot.slane %v3473, 4
      %v3476 = vshll.u32 %v3271, 16
      %v3478 = vrot.slane %v3476, 5
      %v3479 = vor.u32 %v3475, %v3478
      %v3480 = vrot.slane %v3479, 4
      %v3482 = vshll.u32 %v3272, 16
      %v3484 = vrot.slane %v3482, 5
      %v3485 = vsel %vm336, %v3480, %v3484
      %v3486 = vshrl.u32 %v3272, 16
      %v3488 = vrot.slane %v3486, 4
      %v3489 = vor.u32 %v3488, %v3484
      %v3490 = vrot.slane %v3489, 4
      %v3492 = vshll.u32 %v3273, 16
      %v3494 = vrot.slane %v3492, 5
      %v3495 = vsel %vm336, %v3490, %v3494
      %v3497 = vshrl.u32 %v3274, 16
      %v3499 = vrot.slane %v3497, 4
      %v3500 = vshll.u32 %v3274, 16
      %v3502 = vrot.slane %v3500, 5
      %v3503 = vor.u32 %v3499, %v3502
      %v3504 = vrot.slane %v3503, 4
      %v3506 = vshll.u32 %v3275, 16
      %v3508 = vrot.slane %v3506, 5
      %v3509 = vsel %vm336, %v3504, %v3508
      %v3510 = vshrl.u32 %v3275, 16
      %v3512 = vrot.slane %v3510, 4
      %v3513 = vor.u32 %v3512, %v3508
      %v3514 = vrot.slane %v3513, 4
      %v3516 = vshll.u32 %v3276, 16
      %v3518 = vrot.slane %v3516, 5
      %v3519 = vsel %vm336, %v3514, %v3518
      %v3521 = vshrl.u32 %v3277, 16
      %v3523 = vrot.slane %v3521, 4
      %v3524 = vshll.u32 %v3277, 16
      %v3526 = vrot.slane %v3524, 5
      %v3527 = vor.u32 %v3523, %v3526
      %v3528 = vrot.slane %v3527, 4
      %v3530 = vshll.u32 %v3278, 16
      %v3532 = vrot.slane %v3530, 5
      %v3533 = vsel %vm336, %v3528, %v3532
      %v3534 = vshrl.u32 %v3278, 16
      %v3536 = vrot.slane %v3534, 4
      %v3537 = vor.u32 %v3536, %v3532
      %v3538 = vrot.slane %v3537, 4
      %v3540 = vshll.u32 %v3279, 16
      %v3542 = vrot.slane %v3540, 5
      %v3543 = vsel %vm336, %v3538, %v3542
      %v3545 = vshrl.u32 %v3280, 16
      %v3547 = vrot.slane %v3545, 4
      %v3548 = vshll.u32 %v3280, 16
      %v3550 = vrot.slane %v3548, 5
      %v3551 = vor.u32 %v3547, %v3550
      %v3552 = vrot.slane %v3551, 4
      %v3554 = vshll.u32 %v3281, 16
      %v3556 = vrot.slane %v3554, 5
      %v3557 = vsel %vm336, %v3552, %v3556
      %v3558 = vshrl.u32 %v3281, 16
      %v3560 = vrot.slane %v3558, 4
      %v3561 = vor.u32 %v3560, %v3556
      %v3562 = vrot.slane %v3561, 4
      %v3564 = vshll.u32 %v3282, 16
      %v3566 = vrot.slane %v3564, 5
      %v3567 = vsel %vm336, %v3562, %v3566
      %v3569 = vshrl.u32 %v3283, 16
      %v3571 = vrot.slane %v3569, 4
      %v3572 = vshll.u32 %v3283, 16
      %v3574 = vrot.slane %v3572, 5
      %v3575 = vor.u32 %v3571, %v3574
      %v3576 = vrot.slane %v3575, 4
      %v3578 = vshll.u32 %v3284, 16
      %v3580 = vrot.slane %v3578, 5
      %v3581 = vsel %vm336, %v3576, %v3580
      %v3582 = vshrl.u32 %v3284, 16
      %v3584 = vrot.slane %v3582, 4
      %v3585 = vor.u32 %v3584, %v3580
      %v3586 = vrot.slane %v3585, 4
      %v3588 = vshll.u32 %v3285, 16
      %v3590 = vrot.slane %v3588, 5
      %v3591 = vsel %vm336, %v3586, %v3590
      %v3593 = vshrl.u32 %v3286, 16
      %v3595 = vrot.slane %v3593, 4
      %v3596 = vshll.u32 %v3286, 16
      %v3598 = vrot.slane %v3596, 5
      %v3599 = vor.u32 %v3595, %v3598
      %v3600 = vrot.slane %v3599, 4
      %v3602 = vshll.u32 %v3287, 16
      %v3604 = vrot.slane %v3602, 5
      %v3605 = vsel %vm336, %v3600, %v3604
      %v3606 = vshrl.u32 %v3287, 16
      %v3608 = vrot.slane %v3606, 4
      %v3609 = vor.u32 %v3608, %v3604
      %v3610 = vrot.slane %v3609, 4
      %v3612 = vshll.u32 %v3288, 16
      %v3614 = vrot.slane %v3612, 5
      %v3615 = vsel %vm336, %v3610, %v3614
      %v3617 = vshrl.u32 %v3289, 16
      %v3619 = vrot.slane %v3617, 4
      %v3620 = vshll.u32 %v3289, 16
      %v3622 = vrot.slane %v3620, 5
      %v3623 = vor.u32 %v3619, %v3622
      %v3624 = vrot.slane %v3623, 4
      %v3626 = vshll.u32 %v3290, 16
      %v3628 = vrot.slane %v3626, 5
      %v3629 = vsel %vm336, %v3624, %v3628
      %v3630 = vshrl.u32 %v3290, 16
      %v3632 = vrot.slane %v3630, 4
      %v3633 = vor.u32 %v3632, %v3628
      %v3634 = vrot.slane %v3633, 4
      %v3636 = vshll.u32 %v3291, 16
      %v3638 = vrot.slane %v3636, 5
      %v3639 = vsel %vm336, %v3634, %v3638
      %v3641 = vshrl.u32 %v3292, 16
      %v3643 = vrot.slane %v3641, 4
      %v3644 = vshll.u32 %v3292, 16
      %v3646 = vrot.slane %v3644, 5
      %v3647 = vor.u32 %v3643, %v3646
      %v3648 = vrot.slane %v3647, 4
      %v3650 = vshll.u32 %v3293, 16
      %v3652 = vrot.slane %v3650, 5
      %v3653 = vsel %vm336, %v3648, %v3652
      %v3654 = vshrl.u32 %v3293, 16
      %v3656 = vrot.slane %v3654, 4
      %v3657 = vor.u32 %v3656, %v3652
      %v3658 = vrot.slane %v3657, 4
      %v3660 = vshll.u32 %v3294, 16
      %v3662 = vrot.slane %v3660, 5
      %v3663 = vsel %vm336, %v3658, %v3662
      %v3665 = vshrl.u32 %v3295, 16
      %v3667 = vrot.slane %v3665, 4
      %v3668 = vshll.u32 %v3295, 16
      %v3670 = vrot.slane %v3668, 5
      %v3671 = vor.u32 %v3667, %v3670
      %v3672 = vrot.slane %v3671, 4
      %v3674 = vshll.u32 %v3296, 16
      %v3676 = vrot.slane %v3674, 5
      %v3677 = vsel %vm336, %v3672, %v3676
      %v3678 = vshrl.u32 %v3296, 16
      %v3680 = vrot.slane %v3678, 4
      %v3681 = vor.u32 %v3680, %v3676
      %v3682 = vrot.slane %v3681, 4
      %v3684 = vshll.u32 %v3297, 16
      %v3686 = vrot.slane %v3684, 5
      %v3687 = vsel %vm336, %v3682, %v3686
      %v3736 = vrot.slane %v3250, 5
      %v3737 = vrot.slane %v3736, 4
      %v3738 = vrot.slane %v3251, 5
      %v3739 = vsel %vm771, %v3737, %v3738
      %v3740 = vrot.slane %v3738, 4
      %v3741 = vrot.slane %v3252, 5
      %v3742 = vsel %vm771, %v3740, %v3741
      %v3743 = vrot.slane %v3253, 5
      %v3744 = vrot.slane %v3743, 4
      %v3745 = vrot.slane %v3254, 5
      %v3746 = vsel %vm771, %v3744, %v3745
      %v3747 = vrot.slane %v3745, 4
      %v3748 = vrot.slane %v3255, 5
      %v3749 = vsel %vm771, %v3747, %v3748
      %v3750 = vrot.slane %v3256, 5
      %v3751 = vrot.slane %v3750, 4
      %v3752 = vrot.slane %v3257, 5
      %v3753 = vsel %vm771, %v3751, %v3752
      %v3754 = vrot.slane %v3752, 4
      %v3755 = vrot.slane %v3258, 5
      %v3756 = vsel %vm771, %v3754, %v3755
      %v3757 = vrot.slane %v3259, 5
      %v3758 = vrot.slane %v3757, 4
      %v3759 = vrot.slane %v3260, 5
      %v3760 = vsel %vm771, %v3758, %v3759
      %v3761 = vrot.slane %v3759, 4
      %v3762 = vrot.slane %v3261, 5
      %v3763 = vsel %vm771, %v3761, %v3762
      %v3764 = vrot.slane %v3262, 5
      %v3765 = vrot.slane %v3764, 4
      %v3766 = vrot.slane %v3263, 5
      %v3767 = vsel %vm771, %v3765, %v3766
      %v3768 = vrot.slane %v3766, 4
      %v3769 = vrot.slane %v3264, 5
      %v3770 = vsel %vm771, %v3768, %v3769
      %v3771 = vrot.slane %v3265, 5
      %v3772 = vrot.slane %v3771, 4
      %v3773 = vrot.slane %v3266, 5
      %v3774 = vsel %vm771, %v3772, %v3773
      %v3775 = vrot.slane %v3773, 4
      %v3776 = vrot.slane %v3267, 5
      %v3777 = vsel %vm771, %v3775, %v3776
      %v3778 = vrot.slane %v3268, 5
      %v3779 = vrot.slane %v3778, 4
      %v3780 = vrot.slane %v3269, 5
      %v3781 = vsel %vm771, %v3779, %v3780
      %v3782 = vrot.slane %v3780, 4
      %v3783 = vrot.slane %v3270, 5
      %v3784 = vsel %vm771, %v3782, %v3783
      %v3785 = vrot.slane %v3271, 5
      %v3786 = vrot.slane %v3785, 4
      %v3787 = vrot.slane %v3272, 5
      %v3788 = vsel %vm771, %v3786, %v3787
      %v3789 = vrot.slane %v3787, 4
      %v3790 = vrot.slane %v3273, 5
      %v3791 = vsel %vm771, %v3789, %v3790
      %v3792 = vrot.slane %v3274, 5
      %v3793 = vrot.slane %v3792, 4
      %v3794 = vrot.slane %v3275, 5
      %v3795 = vsel %vm771, %v3793, %v3794
      %v3796 = vrot.slane %v3794, 4
      %v3797 = vrot.slane %v3276, 5
      %v3798 = vsel %vm771, %v3796, %v3797
      %v3799 = vrot.slane %v3277, 5
      %v3800 = vrot.slane %v3799, 4
      %v3801 = vrot.slane %v3278, 5
      %v3802 = vsel %vm771, %v3800, %v3801
      %v3803 = vrot.slane %v3801, 4
      %v3804 = vrot.slane %v3279, 5
      %v3805 = vsel %vm771, %v3803, %v3804
      %v3806 = vrot.slane %v3280, 5
      %v3807 = vrot.slane %v3806, 4
      %v3808 = vrot.slane %v3281, 5
      %v3809 = vsel %vm771, %v3807, %v3808
      %v3810 = vrot.slane %v3808, 4
      %v3811 = vrot.slane %v3282, 5
      %v3812 = vsel %vm771, %v3810, %v3811
      %v3813 = vrot.slane %v3283, 5
      %v3814 = vrot.slane %v3813, 4
      %v3815 = vrot.slane %v3284, 5
      %v3816 = vsel %vm771, %v3814, %v3815
      %v3817 = vrot.slane %v3815, 4
      %v3818 = vrot.slane %v3285, 5
      %v3819 = vsel %vm771, %v3817, %v3818
      %v3820 = vrot.slane %v3286, 5
      %v3821 = vrot.slane %v3820, 4
      %v3822 = vrot.slane %v3287, 5
      %v3823 = vsel %vm771, %v3821, %v3822
      %v3824 = vrot.slane %v3822, 4
      %v3825 = vrot.slane %v3288, 5
      %v3826 = vsel %vm771, %v3824, %v3825
      %v3827 = vrot.slane %v3289, 5
      %v3828 = vrot.slane %v3827, 4
      %v3829 = vrot.slane %v3290, 5
      %v3830 = vsel %vm771, %v3828, %v3829
      %v3831 = vrot.slane %v3829, 4
      %v3832 = vrot.slane %v3291, 5
      %v3833 = vsel %vm771, %v3831, %v3832
      %v3834 = vrot.slane %v3292, 5
      %v3835 = vrot.slane %v3834, 4
      %v3836 = vrot.slane %v3293, 5
      %v3837 = vsel %vm771, %v3835, %v3836
      %v3838 = vrot.slane %v3836, 4
      %v3839 = vrot.slane %v3294, 5
      %v3840 = vsel %vm771, %v3838, %v3839
      %v3841 = vrot.slane %v3295, 5
      %v3842 = vrot.slane %v3841, 4
      %v3843 = vrot.slane %v3296, 5
      %v3844 = vsel %vm771, %v3842, %v3843
      %v3845 = vrot.slane %v3843, 4
      %v3846 = vrot.slane %v3297, 5
      %v3847 = vsel %vm771, %v3845, %v3846
      %v3849 = vshrl.u32 %v3298, 16
      %v3851 = vrot.slane %v3849, 4
      %v3852 = vshll.u32 %v3298, 16
      %v3854 = vrot.slane %v3852, 5
      %v3855 = vor.u32 %v3851, %v3854
      %v3856 = vrot.slane %v3855, 4
      %v3858 = vshll.u32 %v3299, 16
      %v3860 = vrot.slane %v3858, 5
      %v3861 = vsel %vm336, %v3856, %v3860
      %v3862 = vshrl.u32 %v3299, 16
      %v3864 = vrot.slane %v3862, 4
      %v3865 = vor.u32 %v3864, %v3860
      %v3866 = vrot.slane %v3865, 4
      %v3868 = vshll.u32 %v3300, 16
      %v3870 = vrot.slane %v3868, 5
      %v3871 = vsel %vm336, %v3866, %v3870
      %v3875 = vrot.slane %v3298, 5
      %v3876 = vrot.slane %v3875, 4
      %v3877 = vrot.slane %v3299, 5
      %v3878 = vsel %vm771, %v3876, %v3877
      %v3879 = vrot.slane %v3877, 4
      %v3880 = vrot.slane %v3300, 5
      %v3881 = vsel %vm771, %v3879, %v3880
      %v3883 = vshrl.u32 %v3301, 16
      %v3885 = vrot.slane %v3883, 4
      %v3886 = vshll.u32 %v3301, 16
      %v3888 = vrot.slane %v3886, 5
      %v3889 = vor.u32 %v3885, %v3888
      %v3890 = vrot.slane %v3889, 4
      %v3892 = vshll.u32 %v3302, 16
      %v3894 = vrot.slane %v3892, 5
      %v3895 = vsel %vm336, %v3890, %v3894
      %v3896 = vshrl.u32 %v3302, 16
      %v3898 = vrot.slane %v3896, 4
      %v3899 = vor.u32 %v3898, %v3894
      %v3900 = vrot.slane %v3899, 4
      %v3902 = vshll.u32 %v3303, 16
      %v3904 = vrot.slane %v3902, 5
      %v3905 = vsel %vm336, %v3900, %v3904
      %v3909 = vrot.slane %v3301, 5
      %v3910 = vrot.slane %v3909, 4
      %v3911 = vrot.slane %v3302, 5
      %v3912 = vsel %vm771, %v3910, %v3911
      %v3913 = vrot.slane %v3911, 4
      %v3914 = vrot.slane %v3303, 5
      %v3915 = vsel %vm771, %v3913, %v3914
      %v3916 = vunpack.c.l.b16 %v3250
      %v3917 = vunpack.c.l.b16 %v3251
      %v3918 = vunpack.c.l.b16 %v3253
      %v3919 = vunpack.c.l.b16 %v3254
      %v3920 = vunpack.c.l.b16 %v3256
      %v3921 = vunpack.c.l.b16 %v3257
      %v3922 = vunpack.c.l.b16 %v3259
      %v3923 = vunpack.c.l.b16 %v3260
      %v3924 = vunpack.c.l.b16 %v3262
      %v3925 = vunpack.c.l.b16 %v3263
      %v3926 = vunpack.c.l.b16 %v3265
      %v3927 = vunpack.c.l.b16 %v3266
      %v3928 = vunpack.c.l.b16 %v3268
      %v3929 = vunpack.c.l.b16 %v3269
      %v3930 = vunpack.c.l.b16 %v3271
      %v3931 = vunpack.c.l.b16 %v3272
      %v3932 = vunpack.c.l.b16 %v3274
      %v3933 = vunpack.c.l.b16 %v3275
      %v3934 = vunpack.c.l.b16 %v3277
      %v3935 = vunpack.c.l.b16 %v3278
      %v3936 = vunpack.c.l.b16 %v3280
      %v3937 = vunpack.c.l.b16 %v3281
      %v3938 = vunpack.c.l.b16 %v3283
      %v3939 = vunpack.c.l.b16 %v3284
      %v3940 = vunpack.c.l.b16 %v3286
      %v3941 = vunpack.c.l.b16 %v3287
      %v3942 = vunpack.c.l.b16 %v3289
      %v3943 = vunpack.c.l.b16 %v3290
      %v3944 = vunpack.c.l.b16 %v3292
      %v3945 = vunpack.c.l.b16 %v3293
      %v3946 = vunpack.c.l.b16 %v3295
      %v3947 = vunpack.c.l.b16 %v3296
      %v3948 = vpack.c.b16 %v3917, %v3916
      %v3949 = vpack.c.b16 %v3919, %v3918
      %v3950 = vpack.c.b16 %v3921, %v3920
      %v3951 = vpack.c.b16 %v3923, %v3922
      %v3952 = vpack.c.b16 %v3925, %v3924
      %v3953 = vpack.c.b16 %v3927, %v3926
      %v3954 = vpack.c.b16 %v3929, %v3928
      %v3955 = vpack.c.b16 %v3931, %v3930
      %v3956 = vpack.c.b16 %v3933, %v3932
      %v3957 = vpack.c.b16 %v3935, %v3934
      %v3958 = vpack.c.b16 %v3937, %v3936
      %v3959 = vpack.c.b16 %v3939, %v3938
      %v3960 = vpack.c.b16 %v3941, %v3940
      %v3961 = vpack.c.b16 %v3943, %v3942
      %v3962 = vpack.c.b16 %v3945, %v3944
      %v3963 = vpack.c.b16 %v3947, %v3946
      %v3980 = vunpack.c.l.b16 %v3317
      %v3981 = vunpack.c.l.b16 %v3327
      %v3982 = vunpack.c.l.b16 %v3341
      %v3983 = vunpack.c.l.b16 %v3351
      %v3984 = vunpack.c.l.b16 %v3365
      %v3985 = vunpack.c.l.b16 %v3375
      %v3986 = vunpack.c.l.b16 %v3389
      %v3987 = vunpack.c.l.b16 %v3399
      %v3988 = vunpack.c.l.b16 %v3413
      %v3989 = vunpack.c.l.b16 %v3423
      %v3990 = vunpack.c.l.b16 %v3437
      %v3991 = vunpack.c.l.b16 %v3447
      %v3992 = vunpack.c.l.b16 %v3461
      %v3993 = vunpack.c.l.b16 %v3471
      %v3994 = vunpack.c.l.b16 %v3485
      %v3995 = vunpack.c.l.b16 %v3495
      %v3996 = vunpack.c.l.b16 %v3509
      %v3997 = vunpack.c.l.b16 %v3519
      %v3998 = vunpack.c.l.b16 %v3533
      %v3999 = vunpack.c.l.b16 %v3543
      %v4000 = vunpack.c.l.b16 %v3557
      %v4001 = vunpack.c.l.b16 %v3567
      %v4002 = vunpack.c.l.b16 %v3581
      %v4003 = vunpack.c.l.b16 %v3591
      %v4004 = vunpack.c.l.b16 %v3605
      %v4005 = vunpack.c.l.b16 %v3615
      %v4006 = vunpack.c.l.b16 %v3629
      %v4007 = vunpack.c.l.b16 %v3639
      %v4008 = vunpack.c.l.b16 %v3653
      %v4009 = vunpack.c.l.b16 %v3663
      %v4010 = vunpack.c.l.b16 %v3677
      %v4011 = vunpack.c.l.b16 %v3687
      %v4012 = vpack.c.b16 %v3981, %v3980
      %v4013 = vpack.c.b16 %v3983, %v3982
      %v4014 = vpack.c.b16 %v3985, %v3984
      %v4015 = vpack.c.b16 %v3987, %v3986
      %v4016 = vpack.c.b16 %v3989, %v3988
      %v4017 = vpack.c.b16 %v3991, %v3990
      %v4018 = vpack.c.b16 %v3993, %v3992
      %v4019 = vpack.c.b16 %v3995, %v3994
      %v4020 = vpack.c.b16 %v3997, %v3996
      %v4021 = vpack.c.b16 %v3999, %v3998
      %v4022 = vpack.c.b16 %v4001, %v4000
      %v4023 = vpack.c.b16 %v4003, %v4002
      %v4024 = vpack.c.b16 %v4005, %v4004
      %v4025 = vpack.c.b16 %v4007, %v4006
      %v4026 = vpack.c.b16 %v4009, %v4008
      %v4027 = vpack.c.b16 %v4011, %v4010
      %v4044 = vunpack.c.l.b16 %v3739
      %v4045 = vunpack.c.l.b16 %v3742
      %v4046 = vunpack.c.l.b16 %v3746
      %v4047 = vunpack.c.l.b16 %v3749
      %v4048 = vunpack.c.l.b16 %v3753
      %v4049 = vunpack.c.l.b16 %v3756
      %v4050 = vunpack.c.l.b16 %v3760
      %v4051 = vunpack.c.l.b16 %v3763
      %v4052 = vunpack.c.l.b16 %v3767
      %v4053 = vunpack.c.l.b16 %v3770
      %v4054 = vunpack.c.l.b16 %v3774
      %v4055 = vunpack.c.l.b16 %v3777
      %v4056 = vunpack.c.l.b16 %v3781
      %v4057 = vunpack.c.l.b16 %v3784
      %v4058 = vunpack.c.l.b16 %v3788
      %v4059 = vunpack.c.l.b16 %v3791
      %v4060 = vunpack.c.l.b16 %v3795
      %v4061 = vunpack.c.l.b16 %v3798
      %v4062 = vunpack.c.l.b16 %v3802
      %v4063 = vunpack.c.l.b16 %v3805
      %v4064 = vunpack.c.l.b16 %v3809
      %v4065 = vunpack.c.l.b16 %v3812
      %v4066 = vunpack.c.l.b16 %v3816
      %v4067 = vunpack.c.l.b16 %v3819
      %v4068 = vunpack.c.l.b16 %v3823
      %v4069 = vunpack.c.l.b16 %v3826
      %v4070 = vunpack.c.l.b16 %v3830
      %v4071 = vunpack.c.l.b16 %v3833
      %v4072 = vunpack.c.l.b16 %v3837
      %v4073 = vunpack.c.l.b16 %v3840
      %v4074 = vunpack.c.l.b16 %v3844
      %v4075 = vunpack.c.l.b16 %v3847
      %v4076 = vpack.c.b16 %v4045, %v4044
      %v4077 = vpack.c.b16 %v4047, %v4046
      %v4078 = vpack.c.b16 %v4049, %v4048
      %v4079 = vpack.c.b16 %v4051, %v4050
      %v4080 = vpack.c.b16 %v4053, %v4052
      %v4081 = vpack.c.b16 %v4055, %v4054
      %v4082 = vpack.c.b16 %v4057, %v4056
      %v4083 = vpack.c.b16 %v4059, %v4058
      %v4084 = vpack.c.b16 %v4061, %v4060
      %v4085 = vpack.c.b16 %v4063, %v4062
      %v4086 = vpack.c.b16 %v4065, %v4064
      %v4087 = vpack.c.b16 %v4067, %v4066
      %v4088 = vpack.c.b16 %v4069, %v4068
      %v4089 = vpack.c.b16 %v4071, %v4070
      %v4090 = vpack.c.b16 %v4073, %v4072
      %v4091 = vpack.c.b16 %v4075, %v4074
      %v4108 = vunpack.c.l.b16 %v3298
      %v4109 = vunpack.c.l.b16 %v3299
      %v4110 = vpack.c.b16 %v4109, %v4108
      %v4112 = vunpack.c.l.b16 %v3861
      %v4113 = vunpack.c.l.b16 %v3871
      %v4114 = vpack.c.b16 %v4113, %v4112
      %v4116 = vunpack.c.l.b16 %v3878
      %v4117 = vunpack.c.l.b16 %v3881
      %v4118 = vpack.c.b16 %v4117, %v4116
      %v4120 = vunpack.c.l.b16 %v3301
      %v4121 = vunpack.c.l.b16 %v3302
      %v4122 = vpack.c.b16 %v4121, %v4120
      %v4124 = vunpack.c.l.b16 %v3895
      %v4125 = vunpack.c.l.b16 %v3905
      %v4126 = vpack.c.b16 %v4125, %v4124
      %v4128 = vunpack.c.l.b16 %v3912
      %v4129 = vunpack.c.l.b16 %v3915
      %v4130 = vpack.c.b16 %v4129, %v4128
      %v4132 = vld [vmem:[%s4] sm:$0xf]
      %v4133 = vld [vmem:[%s4 + $0x4] sm:$0xf]
      %v4134 = vld [vmem:[%s4 + $0x8] sm:$0xf]
      %v4135 = vld [vmem:[%s4 + $0xc] sm:$0xf]
      %v4136 = vld [vmem:[%s4 + $0x10] sm:$0xf]
      %v4137 = vld [vmem:[%s4 + $0x14] sm:$0xf]
      %v4138 = vld [vmem:[%s4 + $0x18] sm:$0xf]
      %v4139 = vld [vmem:[%s4 + $0x1c] sm:$0xf]
      %v4140 = vld [vmem:[%s4 + $0x20] sm:$0xf]
      %v4141 = vld [vmem:[%s4 + $0x24] sm:$0xf]
      %v4142 = vld [vmem:[%s4 + $0x28] sm:$0xf]
      %v4143 = vld [vmem:[%s4 + $0x2c] sm:$0xf]
      %v4144 = vld [vmem:[%s4 + $0x30] sm:$0xf]
      %v4145 = vld [vmem:[%s4 + $0x34] sm:$0xf]
      %v4146 = vld [vmem:[%s4 + $0x38] sm:$0xf]
      %v4147 = vld [vmem:[%s4 + $0x3c] sm:$0xf]
      %v4148 = vld [vmem:[%s4 + $0x40] sm:$0xf]
      %v4149 = vld [vmem:[%s4 + $0x44] sm:$0xf]
      %v4150 = vld [vmem:[%s4 + $0x48] sm:$0xf]
      %v4151 = vld [vmem:[%s4 + $0x4c] sm:$0xf]
      %v4152 = vld [vmem:[%s4 + $0x50] sm:$0xf]
      %v4153 = vld [vmem:[%s4 + $0x54] sm:$0xf]
      %v4154 = vld [vmem:[%s4 + $0x58] sm:$0xf]
      %v4155 = vld [vmem:[%s4 + $0x5c] sm:$0xf]
      %v4156 = vld [vmem:[%s4 + $0x60] sm:$0xf]
      %v4157 = vld [vmem:[%s4 + $0x64] sm:$0xf]
      %v4158 = vld [vmem:[%s4 + $0x68] sm:$0xf]
      %v4159 = vld [vmem:[%s4 + $0x6c] sm:$0xf]
      %v4160 = vld [vmem:[%s4 + $0x70] sm:$0xf]
      %v4161 = vld [vmem:[%s4 + $0x74] sm:$0xf]
      %v4162 = vld [vmem:[%s4 + $0x78] sm:$0xf]
      %v4163 = vld [vmem:[%s4 + $0x7c] sm:$0xf]
      %v4164 = vld [vmem:[%s4 + $0x80] sm:$0xf]
      %v4165 = vld [vmem:[%s4 + $0x84] sm:$0xf]
      %v4166 = vld [vmem:[%s4 + $0x88] sm:$0xf]
      %v4167 = vld [vmem:[%s4 + $0x8c] sm:$0xf]
      %v4168 = vld [vmem:[%s4 + $0x90] sm:$0xf]
      %v4169 = vld [vmem:[%s4 + $0x94] sm:$0xf]
      %v4170 = vld [vmem:[%s4 + $0x98] sm:$0xf]
      %v4171 = vld [vmem:[%s4 + $0x9c] sm:$0xf]
      %v4172 = vld [vmem:[%s4 + $0xa0] sm:$0xf]
      %v4173 = vld [vmem:[%s4 + $0xa4] sm:$0xf]
      %v4174 = vld [vmem:[%s4 + $0xa8] sm:$0xf]
      %v4175 = vld [vmem:[%s4 + $0xac] sm:$0xf]
      %v4176 = vld [vmem:[%s4 + $0xb0] sm:$0xf]
      %v4177 = vld [vmem:[%s4 + $0xb4] sm:$0xf]
      %v4178 = vld [vmem:[%s4 + $0xb8] sm:$0xf]
      %v4179 = vld [vmem:[%s4 + $0xbc] sm:$0xf]
      %v4180 = vld [vmem:[%s4 + $0xc0] sm:$0xf]
      %v4181 = vld [vmem:[%s4 + $0xc4] sm:$0xf]
      %v4182 = vld [vmem:[%s4 + $0xc8] sm:$0xf]
      %v4183 = vld [vmem:[%s4 + $0xcc] sm:$0xf]
      %v4184 = vld [vmem:[%s4 + $0xd0] sm:$0xf]
      %v4185 = vld [vmem:[%s4 + $0xd4] sm:$0xf]
      %v4186 = vld [vmem:[%s4 + $0xd8] sm:$0xf]
      %v4187 = vld [vmem:[%s4 + $0xdc] sm:$0xf]
      %v4188 = vld [vmem:[%s4 + $0xe0] sm:$0xf]
      %v4189 = vld [vmem:[%s4 + $0xe4] sm:$0xf]
      %v4190 = vld [vmem:[%s4 + $0xe8] sm:$0xf]
      %v4191 = vld [vmem:[%s4 + $0xec] sm:$0xf]
      %v4192 = vld [vmem:[%s4 + $0xf0] sm:$0xf]
      %v4193 = vld [vmem:[%s4 + $0xf4] sm:$0xf]
      %v4194 = vld [vmem:[%s4 + $0xf8] sm:$0xf]
      %v4195 = vld [vmem:[%s4 + $0xfc] sm:$0xf]
      %v4196 = vld [vmem:[%s4 + $0x100] sm:$0xf]
      %v4197 = vld [vmem:[%s4 + $0x104] sm:$0xf]
      %v4198 = vld [vmem:[%s4 + $0x108] sm:$0xf]
      %v4199 = vld [vmem:[%s4 + $0x10c] sm:$0xf]
      %v4200 = vld [vmem:[%s4 + $0x110] sm:$0xf]
      %v4201 = vld [vmem:[%s4 + $0x114] sm:$0xf]
      %v4202 = vld [vmem:[%s4 + $0x118] sm:$0xf]
      %v4203 = vld [vmem:[%s4 + $0x11c] sm:$0xf]
      %v4204 = vld [vmem:[%s4 + $0x120] sm:$0xf]
      %v4205 = vld [vmem:[%s4 + $0x124] sm:$0xf]
      %v4206 = vld [vmem:[%s4 + $0x128] sm:$0xf]
      %v4207 = vld [vmem:[%s4 + $0x12c] sm:$0xf]
      %v4208 = vld [vmem:[%s4 + $0x130] sm:$0xf]
      %v4209 = vld [vmem:[%s4 + $0x134] sm:$0xf]
      %v4210 = vld [vmem:[%s4 + $0x138] sm:$0xf]
      %v4211 = vld [vmem:[%s4 + $0x13c] sm:$0xf]
      %v4212 = vld [vmem:[%s4 + $0x140] sm:$0xf]
      %v4213 = vld [vmem:[%s4 + $0x144] sm:$0xf]
      %v4214 = vld [vmem:[%s4 + $0x148] sm:$0xf]
      %v4215 = vld [vmem:[%s4 + $0x14c] sm:$0xf]
      %v4216 = vld [vmem:[%s4 + $0x150] sm:$0xf]
      %v4217 = vld [vmem:[%s4 + $0x154] sm:$0xf]
      %v4218 = vld [vmem:[%s4 + $0x158] sm:$0xf]
      %v4219 = vld [vmem:[%s4 + $0x15c] sm:$0xf]
      %v4220 = vld [vmem:[%s4 + $0x160] sm:$0xf]
      %v4221 = vld [vmem:[%s4 + $0x164] sm:$0xf]
      %v4222 = vld [vmem:[%s4 + $0x168] sm:$0xf]
      %v4223 = vld [vmem:[%s4 + $0x16c] sm:$0xf]
      %v4224 = vld [vmem:[%s4 + $0x170] sm:$0xf]
      %v4225 = vld [vmem:[%s4 + $0x174] sm:$0xf]
      %v4226 = vld [vmem:[%s4 + $0x178] sm:$0xf]
      %v4227 = vld [vmem:[%s4 + $0x17c] sm:$0xf]
      %v4228 = vld [vmem:[%s4 + $0x180] sm:$0xf]
      %v4229 = vld [vmem:[%s4 + $0x184] sm:$0xf]
      %v4230 = vld [vmem:[%s4 + $0x188] sm:$0xf]
      %v4231 = vld [vmem:[%s4 + $0x18c] sm:$0xf]
      %v4232 = vld [vmem:[%s4 + $0x190] sm:$0xf]
      %v4233 = vld [vmem:[%s4 + $0x194] sm:$0xf]
      %v4234 = vld [vmem:[%s4 + $0x198] sm:$0xf]
      %v4235 = vld [vmem:[%s4 + $0x19c] sm:$0xf]
      %v4236 = vld [vmem:[%s4 + $0x1a0] sm:$0xf]
      %v4237 = vld [vmem:[%s4 + $0x1a4] sm:$0xf]
      %v4238 = vld [vmem:[%s4 + $0x1a8] sm:$0xf]
      %v4239 = vld [vmem:[%s4 + $0x1ac] sm:$0xf]
      %v4240 = vld [vmem:[%s4 + $0x1b0] sm:$0xf]
      %v4241 = vld [vmem:[%s4 + $0x1b4] sm:$0xf]
      %v4242 = vld [vmem:[%s4 + $0x1b8] sm:$0xf]
      %v4243 = vld [vmem:[%s4 + $0x1bc] sm:$0xf]
      %v4244 = vld [vmem:[%s4 + $0x1c0] sm:$0xf]
      %v4245 = vld [vmem:[%s4 + $0x1c4] sm:$0xf]
      %v4246 = vld [vmem:[%s4 + $0x1c8] sm:$0xf]
      %v4247 = vld [vmem:[%s4 + $0x1cc] sm:$0xf]
      %v4248 = vld [vmem:[%s4 + $0x1d0] sm:$0xf]
      %v4249 = vld [vmem:[%s4 + $0x1d4] sm:$0xf]
      %v4250 = vld [vmem:[%s4 + $0x1d8] sm:$0xf]
      %v4251 = vld [vmem:[%s4 + $0x1dc] sm:$0xf]
      %v4252 = vld [vmem:[%s4 + $0x1e0] sm:$0xf]
      %v4253 = vld [vmem:[%s4 + $0x1e4] sm:$0xf]
      %v4254 = vld [vmem:[%s4 + $0x1e8] sm:$0xf]
      %v4255 = vld [vmem:[%s4 + $0x1ec] sm:$0xf]
      %v4256 = vld [vmem:[%s4 + $0x1f0] sm:$0xf]
      %v4257 = vld [vmem:[%s4 + $0x1f4] sm:$0xf]
      %v4258 = vld [vmem:[%s4 + $0x1f8] sm:$0xf]
      %v4259 = vld [vmem:[%s4 + $0x1fc] sm:$0xf]
      %v4260 = vld [vmem:[%s4 + $0x200] sm:$0xf]
      %v4261 = vld [vmem:[%s4 + $0x204] sm:$0xf]
      %v4262 = vld [vmem:[%s4 + $0x208] sm:$0xf]
      %v4263 = vld [vmem:[%s4 + $0x20c] sm:$0xf]
      %v4264 = vld [vmem:[%s4 + $0x210] sm:$0xf]
      %v4265 = vld [vmem:[%s4 + $0x214] sm:$0xf]
      %v4266 = vld [vmem:[%s4 + $0x218] sm:$0xf]
      %v4267 = vld [vmem:[%s4 + $0x21c] sm:$0xf]
      %v4268 = vld [vmem:[%s4 + $0x220] sm:$0xf]
      %v4269 = vld [vmem:[%s4 + $0x224] sm:$0xf]
      %v4270 = vld [vmem:[%s4 + $0x228] sm:$0xf]
      %v4271 = vld [vmem:[%s4 + $0x22c] sm:$0xf]
      %v4272 = vld [vmem:[%s4 + $0x230] sm:$0xf]
      %v4273 = vld [vmem:[%s4 + $0x234] sm:$0xf]
      %v4274 = vld [vmem:[%s4 + $0x238] sm:$0xf]
      %v4275 = vld [vmem:[%s4 + $0x23c] sm:$0xf]
      %v4420 = vunpack.c.l.b16 %v4132
      %v4421 = vunpack.c.l.b16 %v4133
      %v4422 = vunpack.c.l.b16 %v4134
      %v4423 = vunpack.c.l.b16 %v4135
      %v4424 = vunpack.c.l.b16 %v4136
      %v4425 = vunpack.c.l.b16 %v4137
      %v4426 = vunpack.c.l.b16 %v4138
      %v4427 = vunpack.c.l.b16 %v4139
      %v4428 = vunpack.c.l.b16 %v4140
      %v4429 = vunpack.c.l.b16 %v4141
      %v4430 = vunpack.c.l.b16 %v4142
      %v4431 = vunpack.c.l.b16 %v4143
      %v4432 = vunpack.c.l.b16 %v4144
      %v4433 = vunpack.c.l.b16 %v4145
      %v4434 = vunpack.c.l.b16 %v4146
      %v4435 = vunpack.c.l.b16 %v4147
      %v4436 = vunpack.c.l.b16 %v4148
      %v4437 = vunpack.c.l.b16 %v4149
      %v4438 = vunpack.c.l.b16 %v4150
      %v4439 = vunpack.c.l.b16 %v4151
      %v4440 = vunpack.c.l.b16 %v4152
      %v4441 = vunpack.c.l.b16 %v4153
      %v4442 = vunpack.c.l.b16 %v4154
      %v4443 = vunpack.c.l.b16 %v4155
      %v4444 = vunpack.c.l.b16 %v4156
      %v4445 = vunpack.c.l.b16 %v4157
      %v4446 = vunpack.c.l.b16 %v4158
      %v4447 = vunpack.c.l.b16 %v4159
      %v4448 = vunpack.c.l.b16 %v4160
      %v4449 = vunpack.c.l.b16 %v4161
      %v4450 = vunpack.c.l.b16 %v4162
      %v4451 = vunpack.c.l.b16 %v4163
      %v4452 = vunpack.c.l.b16 %v4164
      %v4453 = vunpack.c.l.b16 %v4165
      %v4454 = vunpack.c.l.b16 %v4166
      %v4455 = vunpack.c.l.b16 %v4167
      %v4456 = vunpack.c.l.b16 %v4168
      %v4457 = vunpack.c.l.b16 %v4169
      %v4458 = vunpack.c.l.b16 %v4170
      %v4459 = vunpack.c.l.b16 %v4171
      %v4460 = vunpack.c.l.b16 %v4172
      %v4461 = vunpack.c.l.b16 %v4173
      %v4462 = vunpack.c.l.b16 %v4174
      %v4463 = vunpack.c.l.b16 %v4175
      %v4464 = vunpack.c.l.b16 %v4176
      %v4465 = vunpack.c.l.b16 %v4177
      %v4466 = vunpack.c.l.b16 %v4178
      %v4467 = vunpack.c.l.b16 %v4179
      %v4468 = vunpack.c.l.b16 %v4180
      %v4469 = vunpack.c.l.b16 %v4181
      %v4470 = vunpack.c.l.b16 %v4182
      %v4471 = vunpack.c.l.b16 %v4183
      %v4472 = vunpack.c.l.b16 %v4184
      %v4473 = vunpack.c.l.b16 %v4185
      %v4474 = vunpack.c.l.b16 %v4186
      %v4475 = vunpack.c.l.b16 %v4187
      %v4476 = vunpack.c.l.b16 %v4188
      %v4477 = vunpack.c.l.b16 %v4189
      %v4478 = vunpack.c.l.b16 %v4190
      %v4479 = vunpack.c.l.b16 %v4191
      %v4480 = vunpack.c.l.b16 %v4192
      %v4481 = vunpack.c.l.b16 %v4193
      %v4482 = vunpack.c.l.b16 %v4194
      %v4483 = vunpack.c.l.b16 %v4195
      %v4484 = vunpack.c.l.b16 %v4196
      %v4485 = vunpack.c.l.b16 %v4197
      %v4486 = vunpack.c.l.b16 %v4198
      %v4487 = vunpack.c.l.b16 %v4199
      %v4488 = vunpack.c.l.b16 %v4200
      %v4489 = vunpack.c.l.b16 %v4201
      %v4490 = vunpack.c.l.b16 %v4202
      %v4491 = vunpack.c.l.b16 %v4203
      %v4492 = vunpack.c.l.b16 %v4204
      %v4493 = vunpack.c.l.b16 %v4205
      %v4494 = vunpack.c.l.b16 %v4206
      %v4495 = vunpack.c.l.b16 %v4207
      %v4496 = vunpack.c.l.b16 %v4208
      %v4497 = vunpack.c.l.b16 %v4209
      %v4498 = vunpack.c.l.b16 %v4210
      %v4499 = vunpack.c.l.b16 %v4211
      %v4500 = vunpack.c.l.b16 %v4212
      %v4501 = vunpack.c.l.b16 %v4213
      %v4502 = vunpack.c.l.b16 %v4214
      %v4503 = vunpack.c.l.b16 %v4215
      %v4504 = vunpack.c.l.b16 %v4216
      %v4505 = vunpack.c.l.b16 %v4217
      %v4506 = vunpack.c.l.b16 %v4218
      %v4507 = vunpack.c.l.b16 %v4219
      %v4508 = vunpack.c.l.b16 %v4220
      %v4509 = vunpack.c.l.b16 %v4221
      %v4510 = vunpack.c.l.b16 %v4222
      %v4511 = vunpack.c.l.b16 %v4223
      %v4512 = vunpack.c.l.b16 %v4224
      %v4513 = vunpack.c.l.b16 %v4225
      %v4514 = vunpack.c.l.b16 %v4226
      %v4515 = vunpack.c.l.b16 %v4227
      %v4516 = vunpack.c.l.b16 %v4228
      %v4517 = vunpack.c.l.b16 %v4229
      %v4518 = vunpack.c.l.b16 %v4230
      %v4519 = vunpack.c.l.b16 %v4231
      %v4520 = vunpack.c.l.b16 %v4232
      %v4521 = vunpack.c.l.b16 %v4233
      %v4522 = vunpack.c.l.b16 %v4234
      %v4523 = vunpack.c.l.b16 %v4235
      %v4524 = vunpack.c.l.b16 %v4236
      %v4525 = vunpack.c.l.b16 %v4237
      %v4526 = vunpack.c.l.b16 %v4238
      %v4527 = vunpack.c.l.b16 %v4239
      %v4528 = vunpack.c.l.b16 %v4240
      %v4529 = vunpack.c.l.b16 %v4241
      %v4530 = vunpack.c.l.b16 %v4242
      %v4531 = vunpack.c.l.b16 %v4243
      %v4532 = vunpack.c.l.b16 %v4244
      %v4533 = vunpack.c.l.b16 %v4245
      %v4534 = vunpack.c.l.b16 %v4246
      %v4535 = vunpack.c.l.b16 %v4247
      %v4536 = vunpack.c.l.b16 %v4248
      %v4537 = vunpack.c.l.b16 %v4249
      %v4538 = vunpack.c.l.b16 %v4250
      %v4539 = vunpack.c.l.b16 %v4251
      %v4540 = vunpack.c.l.b16 %v4252
      %v4541 = vunpack.c.l.b16 %v4253
      %v4542 = vunpack.c.l.b16 %v4254
      %v4543 = vunpack.c.l.b16 %v4255
      %v4544 = vunpack.c.l.b16 %v4256
      %v4545 = vunpack.c.l.b16 %v4257
      %v4546 = vunpack.c.l.b16 %v4258
      %v4547 = vunpack.c.l.b16 %v4259
      %v4548 = vunpack.c.l.b16 %v4260
      %v4549 = vunpack.c.l.b16 %v4261
      %v4550 = vunpack.c.l.b16 %v4262
      %v4551 = vunpack.c.l.b16 %v4263
      %v4552 = vunpack.c.l.b16 %v4264
      %v4553 = vunpack.c.l.b16 %v4265
      %v4554 = vunpack.c.l.b16 %v4266
      %v4555 = vunpack.c.l.b16 %v4267
      %v4556 = vunpack.c.l.b16 %v4268
      %v4557 = vunpack.c.l.b16 %v4269
      %v4558 = vunpack.c.l.b16 %v4270
      %v4559 = vunpack.c.l.b16 %v4271
      %v4560 = vunpack.c.l.b16 %v4272
      %v4561 = vunpack.c.l.b16 %v4273
      %v4562 = vunpack.c.l.b16 %v4274
      %v4563 = vunpack.c.l.b16 %v4275
      %v4564 = vpack.c.b16 %v4421, %v4420
      %v4565 = vpack.c.b16 %v4423, %v4422
      %v4566 = vpack.c.b16 %v4425, %v4424
      %v4567 = vpack.c.b16 %v4427, %v4426
      %v4568 = vpack.c.b16 %v4429, %v4428
      %v4569 = vpack.c.b16 %v4431, %v4430
      %v4570 = vpack.c.b16 %v4433, %v4432
      %v4571 = vpack.c.b16 %v4435, %v4434
      %v4572 = vpack.c.b16 %v4437, %v4436
      %v4573 = vpack.c.b16 %v4439, %v4438
      %v4574 = vpack.c.b16 %v4441, %v4440
      %v4575 = vpack.c.b16 %v4443, %v4442
      %v4576 = vpack.c.b16 %v4445, %v4444
      %v4577 = vpack.c.b16 %v4447, %v4446
      %v4578 = vpack.c.b16 %v4449, %v4448
      %v4579 = vpack.c.b16 %v4451, %v4450
      %v4580 = vpack.c.b16 %v4453, %v4452
      %v4581 = vpack.c.b16 %v4455, %v4454
      %v4582 = vpack.c.b16 %v4457, %v4456
      %v4583 = vpack.c.b16 %v4459, %v4458
      %v4584 = vpack.c.b16 %v4461, %v4460
      %v4585 = vpack.c.b16 %v4463, %v4462
      %v4586 = vpack.c.b16 %v4465, %v4464
      %v4587 = vpack.c.b16 %v4467, %v4466
      %v4588 = vpack.c.b16 %v4469, %v4468
      %v4589 = vpack.c.b16 %v4471, %v4470
      %v4590 = vpack.c.b16 %v4473, %v4472
      %v4591 = vpack.c.b16 %v4475, %v4474
      %v4592 = vpack.c.b16 %v4477, %v4476
      %v4593 = vpack.c.b16 %v4479, %v4478
      %v4594 = vpack.c.b16 %v4481, %v4480
      %v4595 = vpack.c.b16 %v4483, %v4482
      %v4596 = vpack.c.b16 %v4485, %v4484
      %v4597 = vpack.c.b16 %v4487, %v4486
      %v4598 = vpack.c.b16 %v4489, %v4488
      %v4599 = vpack.c.b16 %v4491, %v4490
      %v4600 = vpack.c.b16 %v4493, %v4492
      %v4601 = vpack.c.b16 %v4495, %v4494
      %v4602 = vpack.c.b16 %v4497, %v4496
      %v4603 = vpack.c.b16 %v4499, %v4498
      %v4604 = vpack.c.b16 %v4501, %v4500
      %v4605 = vpack.c.b16 %v4503, %v4502
      %v4606 = vpack.c.b16 %v4505, %v4504
      %v4607 = vpack.c.b16 %v4507, %v4506
      %v4608 = vpack.c.b16 %v4509, %v4508
      %v4609 = vpack.c.b16 %v4511, %v4510
      %v4610 = vpack.c.b16 %v4513, %v4512
      %v4611 = vpack.c.b16 %v4515, %v4514
      %v4612 = vpack.c.b16 %v4517, %v4516
      %v4613 = vpack.c.b16 %v4519, %v4518
      %v4614 = vpack.c.b16 %v4521, %v4520
      %v4615 = vpack.c.b16 %v4523, %v4522
      %v4616 = vpack.c.b16 %v4525, %v4524
      %v4617 = vpack.c.b16 %v4527, %v4526
      %v4618 = vpack.c.b16 %v4529, %v4528
      %v4619 = vpack.c.b16 %v4531, %v4530
      %v4620 = vpack.c.b16 %v4533, %v4532
      %v4621 = vpack.c.b16 %v4535, %v4534
      %v4622 = vpack.c.b16 %v4537, %v4536
      %v4623 = vpack.c.b16 %v4539, %v4538
      %v4624 = vpack.c.b16 %v4541, %v4540
      %v4625 = vpack.c.b16 %v4543, %v4542
      %v4626 = vpack.c.b16 %v4545, %v4544
      %v4627 = vpack.c.b16 %v4547, %v4546
      %v4628 = vpack.c.b16 %v4549, %v4548
      %v4629 = vpack.c.b16 %v4551, %v4550
      %v4630 = vpack.c.b16 %v4553, %v4552
      %v4631 = vpack.c.b16 %v4555, %v4554
      %v4632 = vpack.c.b16 %v4557, %v4556
      %v4633 = vpack.c.b16 %v4559, %v4558
      %v4634 = vpack.c.b16 %v4561, %v4560
      %v4635 = vpack.c.b16 %v4563, %v4562
      %4708 = vmatprep.subr.bf16.mxu0 0
      %4709 = vmatpush1.bf16.msra.mxu0 %v4564
      %4710 = vmatprep.subr.bf16.mxu0 0
      %4711 = vmatpush1.bf16.msra.mxu0 %v4565
      %4712 = vmatprep.subr.bf16.mxu0 0
      %4713 = vmatpush1.bf16.msra.mxu0 %v4566
      %4714 = vmatprep.subr.bf16.mxu0 0
      %4715 = vmatpush1.bf16.msra.mxu0 %v4567
      %4716 = vmatprep.subr.bf16.mxu0 0
      %4717 = vmatpush1.bf16.msra.mxu0 %v4568
      %4718 = vmatprep.subr.bf16.mxu0 0
      %4719 = vmatpush1.bf16.msra.mxu0 %v4569
      %4720 = vmatprep.subr.bf16.mxu0 0
      %4721 = vmatpush1.bf16.msra.mxu0 %v4570
      %4722 = vmatprep.subr.bf16.mxu0 0
      %4723 = vmatpush1.bf16.msra.mxu0 %v4571
      %4724 = vmatprep.subr.bf16.mxu0 0
      %4725 = vmatpush1.bf16.msra.mxu0 %v4572
      %4726 = vmatprep.subr.bf16.mxu0 0
      %4727 = vmatpush1.bf16.msra.mxu0 %v4573
      %4728 = vmatprep.subr.bf16.mxu0 0
      %4729 = vmatpush1.bf16.msra.mxu0 %v4574
      %4730 = vmatprep.subr.bf16.mxu0 0
      %4731 = vmatpush1.bf16.msra.mxu0 %v4575
      %4732 = vmatprep.subr.bf16.mxu0 0
      %4733 = vmatpush1.bf16.msra.mxu0 %v4576
      %4734 = vmatprep.subr.bf16.mxu0 0
      %4735 = vmatpush1.bf16.msra.mxu0 %v4577
      %4736 = vmatprep.subr.bf16.mxu0 0
      %4737 = vmatpush1.bf16.msra.mxu0 %v4578
      %4738 = vmatprep.subr.bf16.mxu0 0
      %4739 = vmatpush1.bf16.msra.mxu0 %v4579
      %4740 = vmatprep.mubr.bf16.mxu0 %v4012
      %4741 = vmatmul.mubr.bf16.gmra.mrb[0].mxu0 %v3948
      %v4742 = vpop.f32.mrb[0].mxu0
      %v4743 = vadd.f32 0.0, %v4742
      %v4744 = vpop.f32.mrb[0].mxu0
      %v4745 = vpop.f32.mrb[0].mxu0
      %v4746 = vadd.f32 0.0, %v4745
      %v4747 = vpop.f32.mrb[0].mxu0
      %4748 = vmatprep.mubr.bf16.mxu0 %v4013
      %4749 = vmatmul.mubr.bf16.gmra.mrb[0].mxu0 %v3949
      %v4750 = vpop.f32.mrb[0].mxu0
      %v4751 = vadd.f32 0.0, %v4750
      %v4752 = vpop.f32.mrb[0].mxu0
      %v4753 = vpop.f32.mrb[0].mxu0
      %v4754 = vadd.f32 0.0, %v4753
      %v4755 = vpop.f32.mrb[0].mxu0
      %4756 = vmatprep.mubr.bf16.mxu0 %v4014
      %4757 = vmatmul.mubr.bf16.gmra.mrb[0].mxu0 %v3950
      %v4758 = vpop.f32.mrb[0].mxu0
      %v4759 = vadd.f32 0.0, %v4758
      %v4760 = vpop.f32.mrb[0].mxu0
      %v4761 = vpop.f32.mrb[0].mxu0
      %v4762 = vadd.f32 0.0, %v4761
      %v4763 = vpop.f32.mrb[0].mxu0
      %4764 = vmatprep.mubr.bf16.mxu0 %v4015
      %4765 = vmatmul.mubr.bf16.gmra.mrb[0].mxu0 %v3951
      %v4766 = vpop.f32.mrb[0].mxu0
      %v4767 = vadd.f32 0.0, %v4766
      %v4768 = vpop.f32.mrb[0].mxu0
      %v4769 = vpop.f32.mrb[0].mxu0
      %v4770 = vadd.f32 0.0, %v4769
      %v4771 = vpop.f32.mrb[0].mxu0
      %4772 = vmatprep.mubr.bf16.mxu0 %v4016
      %4773 = vmatmul.mubr.bf16.gmra.mrb[0].mxu0 %v3952
      %v4774 = vpop.f32.mrb[0].mxu0
      %v4775 = vadd.f32 0.0, %v4774
      %v4776 = vpop.f32.mrb[0].mxu0
      %v4777 = vpop.f32.mrb[0].mxu0
      %v4778 = vadd.f32 0.0, %v4777
      %v4779 = vpop.f32.mrb[0].mxu0
      %4780 = vmatprep.mubr.bf16.mxu0 %v4017
      %4781 = vmatmul.mubr.bf16.gmra.mrb[0].mxu0 %v3953
      %v4782 = vpop.f32.mrb[0].mxu0
      %v4783 = vadd.f32 0.0, %v4782
      %v4784 = vpop.f32.mrb[0].mxu0
      %v4785 = vpop.f32.mrb[0].mxu0
      %v4786 = vadd.f32 0.0, %v4785
      %v4787 = vpop.f32.mrb[0].mxu0
      %4788 = vmatprep.mubr.bf16.mxu0 %v4018
      %4789 = vmatmul.mubr.bf16.gmra.mrb[0].mxu0 %v3954
      %v4790 = vpop.f32.mrb[0].mxu0
      %v4791 = vadd.f32 0.0, %v4790
      %v4792 = vpop.f32.mrb[0].mxu0
      %v4793 = vpop.f32.mrb[0].mxu0
      %v4794 = vadd.f32 0.0, %v4793
      %v4795 = vpop.f32.mrb[0].mxu0
      %4796 = vmatprep.mubr.bf16.mxu0 %v4019
      %4797 = vmatmul.mubr.bf16.gmra.mrb[0].mxu0 %v3955
      %v4798 = vpop.f32.mrb[0].mxu0
      %v4799 = vadd.f32 0.0, %v4798
      %v4800 = vpop.f32.mrb[0].mxu0
      %v4801 = vpop.f32.mrb[0].mxu0
      %v4802 = vadd.f32 0.0, %v4801
      %v4803 = vpop.f32.mrb[0].mxu0
      %4804 = vmatprep.mubr.bf16.mxu0 %v4020
      %4805 = vmatmul.mubr.bf16.gmra.mrb[0].mxu0 %v3956
      %v4806 = vpop.f32.mrb[0].mxu0
      %v4807 = vadd.f32 0.0, %v4806
      %v4808 = vpop.f32.mrb[0].mxu0
      %v4809 = vpop.f32.mrb[0].mxu0
      %v4810 = vadd.f32 0.0, %v4809
      %v4811 = vpop.f32.mrb[0].mxu0
      %4812 = vmatprep.mubr.bf16.mxu0 %v4021
      %4813 = vmatmul.mubr.bf16.gmra.mrb[0].mxu0 %v3957
      %v4814 = vpop.f32.mrb[0].mxu0
      %v4815 = vadd.f32 0.0, %v4814
      %v4816 = vpop.f32.mrb[0].mxu0
      %v4817 = vpop.f32.mrb[0].mxu0
      %v4818 = vadd.f32 0.0, %v4817
      %v4819 = vpop.f32.mrb[0].mxu0
      %4820 = vmatprep.mubr.bf16.mxu0 %v4022
      %4821 = vmatmul.mubr.bf16.gmra.mrb[0].mxu0 %v3958
      %v4822 = vpop.f32.mrb[0].mxu0
      %v4823 = vadd.f32 0.0, %v4822
      %v4824 = vpop.f32.mrb[0].mxu0
      %v4825 = vpop.f32.mrb[0].mxu0
      %v4826 = vadd.f32 0.0, %v4825
      %v4827 = vpop.f32.mrb[0].mxu0
      %4828 = vmatprep.mubr.bf16.mxu0 %v4023
      %4829 = vmatmul.mubr.bf16.gmra.mrb[0].mxu0 %v3959
      %v4830 = vpop.f32.mrb[0].mxu0
      %v4831 = vadd.f32 0.0, %v4830
      %v4832 = vpop.f32.mrb[0].mxu0
      %v4833 = vpop.f32.mrb[0].mxu0
      %v4834 = vadd.f32 0.0, %v4833
      %v4835 = vpop.f32.mrb[0].mxu0
      %4836 = vmatprep.mubr.bf16.mxu0 %v4024
      %4837 = vmatmul.mubr.bf16.gmra.mrb[0].mxu0 %v3960
      %v4838 = vpop.f32.mrb[0].mxu0
      %v4839 = vadd.f32 0.0, %v4838
      %v4840 = vpop.f32.mrb[0].mxu0
      %v4841 = vpop.f32.mrb[0].mxu0
      %v4842 = vadd.f32 0.0, %v4841
      %v4843 = vpop.f32.mrb[0].mxu0
      %4844 = vmatprep.mubr.bf16.mxu0 %v4025
      %4845 = vmatmul.mubr.bf16.gmra.mrb[0].mxu0 %v3961
      %v4846 = vpop.f32.mrb[0].mxu0
      %v4847 = vadd.f32 0.0, %v4846
      %v4848 = vpop.f32.mrb[0].mxu0
      %v4849 = vpop.f32.mrb[0].mxu0
      %v4850 = vadd.f32 0.0, %v4849
      %v4851 = vpop.f32.mrb[0].mxu0
      %4852 = vmatprep.mubr.bf16.mxu0 %v4026
      %4853 = vmatmul.mubr.bf16.gmra.mrb[0].mxu0 %v3962
      %v4854 = vpop.f32.mrb[0].mxu0
      %v4855 = vadd.f32 0.0, %v4854
      %v4856 = vpop.f32.mrb[0].mxu0
      %v4857 = vpop.f32.mrb[0].mxu0
      %v4858 = vadd.f32 0.0, %v4857
      %v4859 = vpop.f32.mrb[0].mxu0
      %4860 = vmatprep.mubr.bf16.mxu0 %v4027
      %4861 = vmatmul.mubr.bf16.gmra.mrb[0].mxu0 %v3963
      %v4862 = vpop.f32.mrb[0].mxu0
      %v4863 = vadd.f32 0.0, %v4862
      %v4864 = vpop.f32.mrb[0].mxu0
      %v4865 = vpop.f32.mrb[0].mxu0
      %v4866 = vadd.f32 0.0, %v4865
      %v4867 = vpop.f32.mrb[0].mxu0
      %4868 = vdwg.mxu0
      %4869 = vmatprep.subr.bf16.mxu0 0
      %4870 = vmatpush1.bf16.msra.mxu0 %v4580
      %4871 = vmatprep.subr.bf16.mxu0 0
      %4872 = vmatpush1.bf16.msra.mxu0 %v4581
      %4873 = vmatprep.subr.bf16.mxu0 0
      %4874 = vmatpush1.bf16.msra.mxu0 %v4582
      %4875 = vmatprep.subr.bf16.mxu0 0
      %4876 = vmatpush1.bf16.msra.mxu0 %v4583
      %4877 = vmatprep.subr.bf16.mxu0 0
      %4878 = vmatpush1.bf16.msra.mxu0 %v4584
      %4879 = vmatprep.subr.bf16.mxu0 0
      %4880 = vmatpush1.bf16.msra.mxu0 %v4585
      %4881 = vmatprep.subr.bf16.mxu0 0
      %4882 = vmatpush1.bf16.msra.mxu0 %v4586
      %4883 = vmatprep.subr.bf16.mxu0 0
      %4884 = vmatpush1.bf16.msra.mxu0 %v4587
      %4885 = vmatprep.subr.bf16.mxu0 0
      %4886 = vmatpush1.bf16.msra.mxu0 %v4588
      %4887 = vmatprep.subr.bf16.mxu0 0
      %4888 = vmatpush1.bf16.msra.mxu0 %v4589
      %4889 = vmatprep.subr.bf16.mxu0 0
      %4890 = vmatpush1.bf16.msra.mxu0 %v4590
      %4891 = vmatprep.subr.bf16.mxu0 0
      %4892 = vmatpush1.bf16.msra.mxu0 %v4591
      %4893 = vmatprep.subr.bf16.mxu0 0
      %4894 = vmatpush1.bf16.msra.mxu0 %v4592
      %4895 = vmatprep.subr.bf16.mxu0 0
      %4896 = vmatpush1.bf16.msra.mxu0 %v4593
      %4897 = vmatprep.subr.bf16.mxu0 0
      %4898 = vmatpush1.bf16.msra.mxu0 %v4594
      %4899 = vmatprep.subr.bf16.mxu0 0
      %4900 = vmatpush1.bf16.msra.mxu0 %v4595
      %4901 = vmatprep.mubr.bf16.mxu0 %v3949
      %4902 = vmatmul.mubr.bf16.gmra.mrb[0].mxu0 %v4076
      %v4903 = vpop.f32.mrb[0].mxu0
      %v4904 = vadd.f32 %v4743, %v4903
      %v4905 = vpop.f32.mrb[0].mxu0
      %v4906 = vpop.f32.mrb[0].mxu0
      %v4907 = vadd.f32 %v4746, %v4906
      %v4908 = vpop.f32.mrb[0].mxu0
      %4909 = vmatprep.mubr.bf16.mxu0 %v3950
      %4910 = vmatmul.mubr.bf16.gmra.mrb[0].mxu0 %v4077
      %v4911 = vpop.f32.mrb[0].mxu0
      %v4912 = vadd.f32 %v4751, %v4911
      %v4913 = vpop.f32.mrb[0].mxu0
      %v4914 = vpop.f32.mrb[0].mxu0
      %v4915 = vadd.f32 %v4754, %v4914
      %v4916 = vpop.f32.mrb[0].mxu0
      %4917 = vmatprep.mubr.bf16.mxu0 %v3951
      %4918 = vmatmul.mubr.bf16.gmra.mrb[0].mxu0 %v4078
      %v4919 = vpop.f32.mrb[0].mxu0
      %v4920 = vadd.f32 %v4759, %v4919
      %v4921 = vpop.f32.mrb[0].mxu0
      %v4922 = vpop.f32.mrb[0].mxu0
      %v4923 = vadd.f32 %v4762, %v4922
      %v4924 = vpop.f32.mrb[0].mxu0
      %4925 = vmatprep.mubr.bf16.mxu0 %v3952
      %4926 = vmatmul.mubr.bf16.gmra.mrb[0].mxu0 %v4079
      %v4927 = vpop.f32.mrb[0].mxu0
      %v4928 = vadd.f32 %v4767, %v4927
      %v4929 = vpop.f32.mrb[0].mxu0
      %v4930 = vpop.f32.mrb[0].mxu0
      %v4931 = vadd.f32 %v4770, %v4930
      %v4932 = vpop.f32.mrb[0].mxu0
      %4933 = vmatprep.mubr.bf16.mxu0 %v3953
      %4934 = vmatmul.mubr.bf16.gmra.mrb[0].mxu0 %v4080
      %v4935 = vpop.f32.mrb[0].mxu0
      %v4936 = vadd.f32 %v4775, %v4935
      %v4937 = vpop.f32.mrb[0].mxu0
      %v4938 = vpop.f32.mrb[0].mxu0
      %v4939 = vadd.f32 %v4778, %v4938
      %v4940 = vpop.f32.mrb[0].mxu0
      %4941 = vmatprep.mubr.bf16.mxu0 %v3954
      %4942 = vmatmul.mubr.bf16.gmra.mrb[0].mxu0 %v4081
      %v4943 = vpop.f32.mrb[0].mxu0
      %v4944 = vadd.f32 %v4783, %v4943
      %v4945 = vpop.f32.mrb[0].mxu0
      %v4946 = vpop.f32.mrb[0].mxu0
      %v4947 = vadd.f32 %v4786, %v4946
      %v4948 = vpop.f32.mrb[0].mxu0
      %4949 = vmatprep.mubr.bf16.mxu0 %v3955
      %4950 = vmatmul.mubr.bf16.gmra.mrb[0].mxu0 %v4082
      %v4951 = vpop.f32.mrb[0].mxu0
      %v4952 = vadd.f32 %v4791, %v4951
      %v4953 = vpop.f32.mrb[0].mxu0
      %v4954 = vpop.f32.mrb[0].mxu0
      %v4955 = vadd.f32 %v4794, %v4954
      %v4956 = vpop.f32.mrb[0].mxu0
      %4957 = vmatprep.mubr.bf16.mxu0 %v3956
      %4958 = vmatmul.mubr.bf16.gmra.mrb[0].mxu0 %v4083
      %v4959 = vpop.f32.mrb[0].mxu0
      %v4960 = vadd.f32 %v4799, %v4959
      %v4961 = vpop.f32.mrb[0].mxu0
      %v4962 = vpop.f32.mrb[0].mxu0
      %v4963 = vadd.f32 %v4802, %v4962
      %v4964 = vpop.f32.mrb[0].mxu0
      %4965 = vmatprep.mubr.bf16.mxu0 %v3957
      %4966 = vmatmul.mubr.bf16.gmra.mrb[0].mxu0 %v4084
      %v4967 = vpop.f32.mrb[0].mxu0
      %v4968 = vadd.f32 %v4807, %v4967
      %v4969 = vpop.f32.mrb[0].mxu0
      %v4970 = vpop.f32.mrb[0].mxu0
      %v4971 = vadd.f32 %v4810, %v4970
      %v4972 = vpop.f32.mrb[0].mxu0
      %4973 = vmatprep.mubr.bf16.mxu0 %v3958
      %4974 = vmatmul.mubr.bf16.gmra.mrb[0].mxu0 %v4085
      %v4975 = vpop.f32.mrb[0].mxu0
      %v4976 = vadd.f32 %v4815, %v4975
      %v4977 = vpop.f32.mrb[0].mxu0
      %v4978 = vpop.f32.mrb[0].mxu0
      %v4979 = vadd.f32 %v4818, %v4978
      %v4980 = vpop.f32.mrb[0].mxu0
      %4981 = vmatprep.mubr.bf16.mxu0 %v3959
      %4982 = vmatmul.mubr.bf16.gmra.mrb[0].mxu0 %v4086
      %v4983 = vpop.f32.mrb[0].mxu0
      %v4984 = vadd.f32 %v4823, %v4983
      %v4985 = vpop.f32.mrb[0].mxu0
      %v4986 = vpop.f32.mrb[0].mxu0
      %v4987 = vadd.f32 %v4826, %v4986
      %v4988 = vpop.f32.mrb[0].mxu0
      %4989 = vmatprep.mubr.bf16.mxu0 %v3960
      %4990 = vmatmul.mubr.bf16.gmra.mrb[0].mxu0 %v4087
      %v4991 = vpop.f32.mrb[0].mxu0
      %v4992 = vadd.f32 %v4831, %v4991
      %v4993 = vpop.f32.mrb[0].mxu0
      %v4994 = vpop.f32.mrb[0].mxu0
      %v4995 = vadd.f32 %v4834, %v4994
      %v4996 = vpop.f32.mrb[0].mxu0
      %4997 = vmatprep.mubr.bf16.mxu0 %v3961
      %4998 = vmatmul.mubr.bf16.gmra.mrb[0].mxu0 %v4088
      %v4999 = vpop.f32.mrb[0].mxu0
      %v5000 = vadd.f32 %v4839, %v4999
      %v5001 = vpop.f32.mrb[0].mxu0
      %v5002 = vpop.f32.mrb[0].mxu0
      %v5003 = vadd.f32 %v4842, %v5002
      %v5004 = vpop.f32.mrb[0].mxu0
      %5005 = vmatprep.mubr.bf16.mxu0 %v3962
      %5006 = vmatmul.mubr.bf16.gmra.mrb[0].mxu0 %v4089
      %v5007 = vpop.f32.mrb[0].mxu0
      %v5008 = vadd.f32 %v4847, %v5007
      %v5009 = vpop.f32.mrb[0].mxu0
      %v5010 = vpop.f32.mrb[0].mxu0
      %v5011 = vadd.f32 %v4850, %v5010
      %v5012 = vpop.f32.mrb[0].mxu0
      %5013 = vmatprep.mubr.bf16.mxu0 %v3963
      %5014 = vmatmul.mubr.bf16.gmra.mrb[0].mxu0 %v4090
      %v5015 = vpop.f32.mrb[0].mxu0
      %v5016 = vadd.f32 %v4855, %v5015
      %v5017 = vpop.f32.mrb[0].mxu0
      %v5018 = vpop.f32.mrb[0].mxu0
      %v5019 = vadd.f32 %v4858, %v5018
      %v5020 = vpop.f32.mrb[0].mxu0
      %5021 = vmatprep.mubr.bf16.mxu0 %v4110
      %5022 = vmatmul.mubr.bf16.gmra.mrb[0].mxu0 %v4091
      %v5023 = vpop.f32.mrb[0].mxu0
      %v5024 = vadd.f32 %v4863, %v5023
      %v5025 = vpop.f32.mrb[0].mxu0
      %v5026 = vpop.f32.mrb[0].mxu0
      %v5027 = vadd.f32 %v4866, %v5026
      %v5028 = vpop.f32.mrb[0].mxu0
      %5029 = vdwg.mxu0
      %5030 = vmatprep.subr.bf16.mxu0 0
      %5031 = vmatpush1.bf16.msra.mxu0 %v4596
      %5032 = vmatprep.subr.bf16.mxu0 0
      %5033 = vmatpush1.bf16.msra.mxu0 %v4597
      %5034 = vmatprep.subr.bf16.mxu0 0
      %5035 = vmatpush1.bf16.msra.mxu0 %v4598
      %5036 = vmatprep.subr.bf16.mxu0 0
      %5037 = vmatpush1.bf16.msra.mxu0 %v4599
      %5038 = vmatprep.subr.bf16.mxu0 0
      %5039 = vmatpush1.bf16.msra.mxu0 %v4600
      %5040 = vmatprep.subr.bf16.mxu0 0
      %5041 = vmatpush1.bf16.msra.mxu0 %v4601
      %5042 = vmatprep.subr.bf16.mxu0 0
      %5043 = vmatpush1.bf16.msra.mxu0 %v4602
      %5044 = vmatprep.subr.bf16.mxu0 0
      %5045 = vmatpush1.bf16.msra.mxu0 %v4603
      %5046 = vmatprep.subr.bf16.mxu0 0
      %5047 = vmatpush1.bf16.msra.mxu0 %v4604
      %5048 = vmatprep.subr.bf16.mxu0 0
      %5049 = vmatpush1.bf16.msra.mxu0 %v4605
      %5050 = vmatprep.subr.bf16.mxu0 0
      %5051 = vmatpush1.bf16.msra.mxu0 %v4606
      %5052 = vmatprep.subr.bf16.mxu0 0
      %5053 = vmatpush1.bf16.msra.mxu0 %v4607
      %5054 = vmatprep.subr.bf16.mxu0 0
      %5055 = vmatpush1.bf16.msra.mxu0 %v4608
      %5056 = vmatprep.subr.bf16.mxu0 0
      %5057 = vmatpush1.bf16.msra.mxu0 %v4609
      %5058 = vmatprep.subr.bf16.mxu0 0
      %5059 = vmatpush1.bf16.msra.mxu0 %v4610
      %5060 = vmatprep.subr.bf16.mxu0 0
      %5061 = vmatpush1.bf16.msra.mxu0 %v4611
      %5062 = vmatprep.mubr.bf16.mxu0 %v4077
      %5063 = vmatmul.mubr.bf16.gmra.mrb[0].mxu0 %v4013
      %v5064 = vpop.f32.mrb[0].mxu0
      %v5065 = vadd.f32 %v4904, %v5064
      %v5066 = vpop.f32.mrb[0].mxu0
      %v5067 = vpop.f32.mrb[0].mxu0
      %v5068 = vadd.f32 %v4907, %v5067
      %v5069 = vpop.f32.mrb[0].mxu0
      %5070 = vmatprep.mubr.bf16.mxu0 %v4078
      %5071 = vmatmul.mubr.bf16.gmra.mrb[0].mxu0 %v4014
      %v5072 = vpop.f32.mrb[0].mxu0
      %v5073 = vadd.f32 %v4912, %v5072
      %v5074 = vpop.f32.mrb[0].mxu0
      %v5075 = vpop.f32.mrb[0].mxu0
      %v5076 = vadd.f32 %v4915, %v5075
      %v5077 = vpop.f32.mrb[0].mxu0
      %5078 = vmatprep.mubr.bf16.mxu0 %v4079
      %5079 = vmatmul.mubr.bf16.gmra.mrb[0].mxu0 %v4015
      %v5080 = vpop.f32.mrb[0].mxu0
      %v5081 = vadd.f32 %v4920, %v5080
      %v5082 = vpop.f32.mrb[0].mxu0
      %v5083 = vpop.f32.mrb[0].mxu0
      %v5084 = vadd.f32 %v4923, %v5083
      %v5085 = vpop.f32.mrb[0].mxu0
      %5086 = vmatprep.mubr.bf16.mxu0 %v4080
      %5087 = vmatmul.mubr.bf16.gmra.mrb[0].mxu0 %v4016
      %v5088 = vpop.f32.mrb[0].mxu0
      %v5089 = vadd.f32 %v4928, %v5088
      %v5090 = vpop.f32.mrb[0].mxu0
      %v5091 = vpop.f32.mrb[0].mxu0
      %v5092 = vadd.f32 %v4931, %v5091
      %v5093 = vpop.f32.mrb[0].mxu0
      %5094 = vmatprep.mubr.bf16.mxu0 %v4081
      %5095 = vmatmul.mubr.bf16.gmra.mrb[0].mxu0 %v4017
      %v5096 = vpop.f32.mrb[0].mxu0
      %v5097 = vadd.f32 %v4936, %v5096
      %v5098 = vpop.f32.mrb[0].mxu0
      %v5099 = vpop.f32.mrb[0].mxu0
      %v5100 = vadd.f32 %v4939, %v5099
      %v5101 = vpop.f32.mrb[0].mxu0
      %5102 = vmatprep.mubr.bf16.mxu0 %v4082
      %5103 = vmatmul.mubr.bf16.gmra.mrb[0].mxu0 %v4018
      %v5104 = vpop.f32.mrb[0].mxu0
      %v5105 = vadd.f32 %v4944, %v5104
      %v5106 = vpop.f32.mrb[0].mxu0
      %v5107 = vpop.f32.mrb[0].mxu0
      %v5108 = vadd.f32 %v4947, %v5107
      %v5109 = vpop.f32.mrb[0].mxu0
      %5110 = vmatprep.mubr.bf16.mxu0 %v4083
      %5111 = vmatmul.mubr.bf16.gmra.mrb[0].mxu0 %v4019
      %v5112 = vpop.f32.mrb[0].mxu0
      %v5113 = vadd.f32 %v4952, %v5112
      %v5114 = vpop.f32.mrb[0].mxu0
      %v5115 = vpop.f32.mrb[0].mxu0
      %v5116 = vadd.f32 %v4955, %v5115
      %v5117 = vpop.f32.mrb[0].mxu0
      %5118 = vmatprep.mubr.bf16.mxu0 %v4084
      %5119 = vmatmul.mubr.bf16.gmra.mrb[0].mxu0 %v4020
      %v5120 = vpop.f32.mrb[0].mxu0
      %v5121 = vadd.f32 %v4960, %v5120
      %v5122 = vpop.f32.mrb[0].mxu0
      %v5123 = vpop.f32.mrb[0].mxu0
      %v5124 = vadd.f32 %v4963, %v5123
      %v5125 = vpop.f32.mrb[0].mxu0
      %5126 = vmatprep.mubr.bf16.mxu0 %v4085
      %5127 = vmatmul.mubr.bf16.gmra.mrb[0].mxu0 %v4021
      %v5128 = vpop.f32.mrb[0].mxu0
      %v5129 = vadd.f32 %v4968, %v5128
      %v5130 = vpop.f32.mrb[0].mxu0
      %v5131 = vpop.f32.mrb[0].mxu0
      %v5132 = vadd.f32 %v4971, %v5131
      %v5133 = vpop.f32.mrb[0].mxu0
      %5134 = vmatprep.mubr.bf16.mxu0 %v4086
      %5135 = vmatmul.mubr.bf16.gmra.mrb[0].mxu0 %v4022
      %v5136 = vpop.f32.mrb[0].mxu0
      %v5137 = vadd.f32 %v4976, %v5136
      %v5138 = vpop.f32.mrb[0].mxu0
      %v5139 = vpop.f32.mrb[0].mxu0
      %v5140 = vadd.f32 %v4979, %v5139
      %v5141 = vpop.f32.mrb[0].mxu0
      %5142 = vmatprep.mubr.bf16.mxu0 %v4087
      %5143 = vmatmul.mubr.bf16.gmra.mrb[0].mxu0 %v4023
      %v5144 = vpop.f32.mrb[0].mxu0
      %v5145 = vadd.f32 %v4984, %v5144
      %v5146 = vpop.f32.mrb[0].mxu0
      %v5147 = vpop.f32.mrb[0].mxu0
      %v5148 = vadd.f32 %v4987, %v5147
      %v5149 = vpop.f32.mrb[0].mxu0
      %5150 = vmatprep.mubr.bf16.mxu0 %v4088
      %5151 = vmatmul.mubr.bf16.gmra.mrb[0].mxu0 %v4024
      %v5152 = vpop.f32.mrb[0].mxu0
      %v5153 = vadd.f32 %v4992, %v5152
      %v5154 = vpop.f32.mrb[0].mxu0
      %v5155 = vpop.f32.mrb[0].mxu0
      %v5156 = vadd.f32 %v4995, %v5155
      %v5157 = vpop.f32.mrb[0].mxu0
      %5158 = vmatprep.mubr.bf16.mxu0 %v4089
      %5159 = vmatmul.mubr.bf16.gmra.mrb[0].mxu0 %v4025
      %v5160 = vpop.f32.mrb[0].mxu0
      %v5161 = vadd.f32 %v5000, %v5160
      %v5162 = vpop.f32.mrb[0].mxu0
      %v5163 = vpop.f32.mrb[0].mxu0
      %v5164 = vadd.f32 %v5003, %v5163
      %v5165 = vpop.f32.mrb[0].mxu0
      %5166 = vmatprep.mubr.bf16.mxu0 %v4090
      %5167 = vmatmul.mubr.bf16.gmra.mrb[0].mxu0 %v4026
      %v5168 = vpop.f32.mrb[0].mxu0
      %v5169 = vadd.f32 %v5008, %v5168
      %v5170 = vpop.f32.mrb[0].mxu0
      %v5171 = vpop.f32.mrb[0].mxu0
      %v5172 = vadd.f32 %v5011, %v5171
      %v5173 = vpop.f32.mrb[0].mxu0
      %5174 = vmatprep.mubr.bf16.mxu0 %v4091
      %5175 = vmatmul.mubr.bf16.gmra.mrb[0].mxu0 %v4027
      %v5176 = vpop.f32.mrb[0].mxu0
      %v5177 = vadd.f32 %v5016, %v5176
      %v5178 = vpop.f32.mrb[0].mxu0
      %v5179 = vpop.f32.mrb[0].mxu0
      %v5180 = vadd.f32 %v5019, %v5179
      %v5181 = vpop.f32.mrb[0].mxu0
      %5182 = vmatprep.mubr.bf16.mxu0 %v4118
      %5183 = vmatmul.mubr.bf16.gmra.mrb[0].mxu0 %v4114
      %v5184 = vpop.f32.mrb[0].mxu0
      %v5185 = vadd.f32 %v5024, %v5184
      %v5186 = vpop.f32.mrb[0].mxu0
      %v5187 = vpop.f32.mrb[0].mxu0
      %v5188 = vadd.f32 %v5027, %v5187
      %v5189 = vpop.f32.mrb[0].mxu0
      %5190 = vdwg.mxu0
      %5191 = vmatprep.subr.bf16.mxu0 0
      %5192 = vmatpush1.bf16.msra.mxu0 %v4612
      %5193 = vmatprep.subr.bf16.mxu0 0
      %5194 = vmatpush1.bf16.msra.mxu0 %v4613
      %5195 = vmatprep.subr.bf16.mxu0 0
      %5196 = vmatpush1.bf16.msra.mxu0 %v4614
      %5197 = vmatprep.subr.bf16.mxu0 0
      %5198 = vmatpush1.bf16.msra.mxu0 %v4615
      %5199 = vmatprep.subr.bf16.mxu0 0
      %5200 = vmatpush1.bf16.msra.mxu0 %v4616
      %5201 = vmatprep.subr.bf16.mxu0 0
      %5202 = vmatpush1.bf16.msra.mxu0 %v4617
      %5203 = vmatprep.subr.bf16.mxu0 0
      %5204 = vmatpush1.bf16.msra.mxu0 %v4618
      %5205 = vmatprep.subr.bf16.mxu0 0
      %5206 = vmatpush1.bf16.msra.mxu0 %v4619
      %5207 = vmatprep.subr.bf16.mxu0 0
      %5208 = vmatpush1.bf16.msra.mxu0 %v4620
      %5209 = vmatprep.subr.bf16.mxu0 0
      %5210 = vmatpush1.bf16.msra.mxu0 %v4621
      %5211 = vmatprep.subr.bf16.mxu0 0
      %5212 = vmatpush1.bf16.msra.mxu0 %v4622
      %5213 = vmatprep.subr.bf16.mxu0 0
      %5214 = vmatpush1.bf16.msra.mxu0 %v4623
      %5215 = vmatprep.subr.bf16.mxu0 0
      %5216 = vmatpush1.bf16.msra.mxu0 %v4624
      %5217 = vmatprep.subr.bf16.mxu0 0
      %5218 = vmatpush1.bf16.msra.mxu0 %v4625
      %5219 = vmatprep.subr.bf16.mxu0 0
      %5220 = vmatpush1.bf16.msra.mxu0 %v4626
      %5221 = vmatprep.subr.bf16.mxu0 0
      %5222 = vmatpush1.bf16.msra.mxu0 %v4627
      %5223 = vmatprep.mubr.bf16.mxu0 %v4014
      %5224 = vmatmul.mubr.bf16.gmra.mrb[0].mxu0 %v3950
      %v5225 = vpop.f32.mrb[0].mxu0
      %v5226 = vadd.f32 %v5065, %v5225
      %v5227 = vpop.f32.mrb[0].mxu0
      %v5228 = vpop.f32.mrb[0].mxu0
      %v5229 = vadd.f32 %v5068, %v5228
      %v5230 = vpop.f32.mrb[0].mxu0
      %5231 = vmatprep.mubr.bf16.mxu0 %v4015
      %5232 = vmatmul.mubr.bf16.gmra.mrb[0].mxu0 %v3951
      %v5233 = vpop.f32.mrb[0].mxu0
      %v5234 = vadd.f32 %v5073, %v5233
      %v5235 = vpop.f32.mrb[0].mxu0
      %v5236 = vpop.f32.mrb[0].mxu0
      %v5237 = vadd.f32 %v5076, %v5236
      %v5238 = vpop.f32.mrb[0].mxu0
      %5239 = vmatprep.mubr.bf16.mxu0 %v4016
      %5240 = vmatmul.mubr.bf16.gmra.mrb[0].mxu0 %v3952
      %v5241 = vpop.f32.mrb[0].mxu0
      %v5242 = vadd.f32 %v5081, %v5241
      %v5243 = vpop.f32.mrb[0].mxu0
      %v5244 = vpop.f32.mrb[0].mxu0
      %v5245 = vadd.f32 %v5084, %v5244
      %v5246 = vpop.f32.mrb[0].mxu0
      %5247 = vmatprep.mubr.bf16.mxu0 %v4017
      %5248 = vmatmul.mubr.bf16.gmra.mrb[0].mxu0 %v3953
      %v5249 = vpop.f32.mrb[0].mxu0
      %v5250 = vadd.f32 %v5089, %v5249
      %v5251 = vpop.f32.mrb[0].mxu0
      %v5252 = vpop.f32.mrb[0].mxu0
      %v5253 = vadd.f32 %v5092, %v5252
      %v5254 = vpop.f32.mrb[0].mxu0
      %5255 = vmatprep.mubr.bf16.mxu0 %v4018
      %5256 = vmatmul.mubr.bf16.gmra.mrb[0].mxu0 %v3954
      %v5257 = vpop.f32.mrb[0].mxu0
      %v5258 = vadd.f32 %v5097, %v5257
      %v5259 = vpop.f32.mrb[0].mxu0
      %v5260 = vpop.f32.mrb[0].mxu0
      %v5261 = vadd.f32 %v5100, %v5260
      %v5262 = vpop.f32.mrb[0].mxu0
      %5263 = vmatprep.mubr.bf16.mxu0 %v4019
      %5264 = vmatmul.mubr.bf16.gmra.mrb[0].mxu0 %v3955
      %v5265 = vpop.f32.mrb[0].mxu0
      %v5266 = vadd.f32 %v5105, %v5265
      %v5267 = vpop.f32.mrb[0].mxu0
      %v5268 = vpop.f32.mrb[0].mxu0
      %v5269 = vadd.f32 %v5108, %v5268
      %v5270 = vpop.f32.mrb[0].mxu0
      %5271 = vmatprep.mubr.bf16.mxu0 %v4020
      %5272 = vmatmul.mubr.bf16.gmra.mrb[0].mxu0 %v3956
      %v5273 = vpop.f32.mrb[0].mxu0
      %v5274 = vadd.f32 %v5113, %v5273
      %v5275 = vpop.f32.mrb[0].mxu0
      %v5276 = vpop.f32.mrb[0].mxu0
      %v5277 = vadd.f32 %v5116, %v5276
      %v5278 = vpop.f32.mrb[0].mxu0
      %5279 = vmatprep.mubr.bf16.mxu0 %v4021
      %5280 = vmatmul.mubr.bf16.gmra.mrb[0].mxu0 %v3957
      %v5281 = vpop.f32.mrb[0].mxu0
      %v5282 = vadd.f32 %v5121, %v5281
      %v5283 = vpop.f32.mrb[0].mxu0
      %v5284 = vpop.f32.mrb[0].mxu0
      %v5285 = vadd.f32 %v5124, %v5284
      %v5286 = vpop.f32.mrb[0].mxu0
      %5287 = vmatprep.mubr.bf16.mxu0 %v4022
      %5288 = vmatmul.mubr.bf16.gmra.mrb[0].mxu0 %v3958
      %v5289 = vpop.f32.mrb[0].mxu0
      %v5290 = vadd.f32 %v5129, %v5289
      %v5291 = vpop.f32.mrb[0].mxu0
      %v5292 = vpop.f32.mrb[0].mxu0
      %v5293 = vadd.f32 %v5132, %v5292
      %v5294 = vpop.f32.mrb[0].mxu0
      %5295 = vmatprep.mubr.bf16.mxu0 %v4023
      %5296 = vmatmul.mubr.bf16.gmra.mrb[0].mxu0 %v3959
      %v5297 = vpop.f32.mrb[0].mxu0
      %v5298 = vadd.f32 %v5137, %v5297
      %v5299 = vpop.f32.mrb[0].mxu0
      %v5300 = vpop.f32.mrb[0].mxu0
      %v5301 = vadd.f32 %v5140, %v5300
      %v5302 = vpop.f32.mrb[0].mxu0
      %5303 = vmatprep.mubr.bf16.mxu0 %v4024
      %5304 = vmatmul.mubr.bf16.gmra.mrb[0].mxu0 %v3960
      %v5305 = vpop.f32.mrb[0].mxu0
      %v5306 = vadd.f32 %v5145, %v5305
      %v5307 = vpop.f32.mrb[0].mxu0
      %v5308 = vpop.f32.mrb[0].mxu0
      %v5309 = vadd.f32 %v5148, %v5308
      %v5310 = vpop.f32.mrb[0].mxu0
      %5311 = vmatprep.mubr.bf16.mxu0 %v4025
      %5312 = vmatmul.mubr.bf16.gmra.mrb[0].mxu0 %v3961
      %v5313 = vpop.f32.mrb[0].mxu0
      %v5314 = vadd.f32 %v5153, %v5313
      %v5315 = vpop.f32.mrb[0].mxu0
      %v5316 = vpop.f32.mrb[0].mxu0
      %v5317 = vadd.f32 %v5156, %v5316
      %v5318 = vpop.f32.mrb[0].mxu0
      %5319 = vmatprep.mubr.bf16.mxu0 %v4026
      %5320 = vmatmul.mubr.bf16.gmra.mrb[0].mxu0 %v3962
      %v5321 = vpop.f32.mrb[0].mxu0
      %v5322 = vadd.f32 %v5161, %v5321
      %v5323 = vpop.f32.mrb[0].mxu0
      %v5324 = vpop.f32.mrb[0].mxu0
      %v5325 = vadd.f32 %v5164, %v5324
      %v5326 = vpop.f32.mrb[0].mxu0
      %5327 = vmatprep.mubr.bf16.mxu0 %v4027
      %5328 = vmatmul.mubr.bf16.gmra.mrb[0].mxu0 %v3963
      %v5329 = vpop.f32.mrb[0].mxu0
      %v5330 = vadd.f32 %v5169, %v5329
      %v5331 = vpop.f32.mrb[0].mxu0
      %v5332 = vpop.f32.mrb[0].mxu0
      %v5333 = vadd.f32 %v5172, %v5332
      %v5334 = vpop.f32.mrb[0].mxu0
      %5335 = vmatprep.mubr.bf16.mxu0 %v4114
      %5336 = vmatmul.mubr.bf16.gmra.mrb[0].mxu0 %v4110
      %v5337 = vpop.f32.mrb[0].mxu0
      %v5338 = vadd.f32 %v5177, %v5337
      %v5339 = vpop.f32.mrb[0].mxu0
      %v5340 = vpop.f32.mrb[0].mxu0
      %v5341 = vadd.f32 %v5180, %v5340
      %v5342 = vpop.f32.mrb[0].mxu0
      %5343 = vmatprep.mubr.bf16.mxu0 %v4126
      %5344 = vmatmul.mubr.bf16.gmra.mrb[0].mxu0 %v4122
      %v5345 = vpop.f32.mrb[0].mxu0
      %v5346 = vadd.f32 %v5185, %v5345
      %v5347 = vpop.f32.mrb[0].mxu0
      %v5348 = vpop.f32.mrb[0].mxu0
      %v5349 = vadd.f32 %v5188, %v5348
      %v5350 = vpop.f32.mrb[0].mxu0
      %5351 = vdwg.mxu0
      %5352 = vmatprep.subr.bf16.mxu0 0
      %5353 = vmatpush1.bf16.msra.mxu0 %v4628
      %5354 = vmatprep.subr.bf16.mxu0 0
      %5355 = vmatpush1.bf16.msra.mxu0 %v4629
      %5356 = vmatprep.subr.bf16.mxu0 0
      %5357 = vmatpush1.bf16.msra.mxu0 %v4630
      %5358 = vmatprep.subr.bf16.mxu0 0
      %5359 = vmatpush1.bf16.msra.mxu0 %v4631
      %5360 = vmatprep.subr.bf16.mxu0 0
      %5361 = vmatpush1.bf16.msra.mxu0 %v4632
      %5362 = vmatprep.subr.bf16.mxu0 0
      %5363 = vmatpush1.bf16.msra.mxu0 %v4633
      %5364 = vmatprep.subr.bf16.mxu0 0
      %5365 = vmatpush1.bf16.msra.mxu0 %v4634
      %5366 = vmatprep.subr.bf16.mxu0 0
      %5367 = vmatpush1.bf16.msra.mxu0 %v4635
      %5368 = vmatprep.subr.bf16.mxu0 0
      %5369 = vmatpush1.bf16.msra.mxu0 0
      %5370 = vmatprep.subr.bf16.mxu0 0
      %5371 = vmatpush1.bf16.msra.mxu0 0
      %5372 = vmatprep.subr.bf16.mxu0 0
      %5373 = vmatpush1.bf16.msra.mxu0 0
      %5374 = vmatprep.subr.bf16.mxu0 0
      %5375 = vmatpush1.bf16.msra.mxu0 0
      %5376 = vmatprep.subr.bf16.mxu0 0
      %5377 = vmatpush1.bf16.msra.mxu0 0
      %5378 = vmatprep.subr.bf16.mxu0 0
      %5379 = vmatpush1.bf16.msra.mxu0 0
      %5380 = vmatprep.subr.bf16.mxu0 0
      %5381 = vmatpush1.bf16.msra.mxu0 0
      %5382 = vmatprep.subr.bf16.mxu0 0
      %5383 = vmatpush1.bf16.msra.mxu0 0
      %5384 = vmatprep.mubr.bf16.mxu0 0
      %5385 = vmatmul.mubr.bf16.gmra.mrb[0].mxu0 %v4078
      %v5386 = vpop.f32.mrb[0].mxu0
      %v5387 = vadd.f32 %v5226, %v5386
      %v5388 = vpop.f32.mrb[0].mxu0
      %v5389 = vpop.f32.mrb[0].mxu0
      %v5390 = vadd.f32 %v5229, %v5389
      %v5391 = vpop.f32.mrb[0].mxu0
      %5392 = vmatprep.mubr.bf16.mxu0 0
      %5393 = vmatmul.mubr.bf16.gmra.mrb[0].mxu0 %v4079
      %v5394 = vpop.f32.mrb[0].mxu0
      %v5395 = vadd.f32 %v5234, %v5394
      %v5396 = vpop.f32.mrb[0].mxu0
      %v5397 = vpop.f32.mrb[0].mxu0
      %v5398 = vadd.f32 %v5237, %v5397
      %v5399 = vpop.f32.mrb[0].mxu0
      %5400 = vmatprep.mubr.bf16.mxu0 0
      %5401 = vmatmul.mubr.bf16.gmra.mrb[0].mxu0 %v4080
      %v5402 = vpop.f32.mrb[0].mxu0
      %v5403 = vadd.f32 %v5242, %v5402
      %v5404 = vpop.f32.mrb[0].mxu0
      %v5405 = vpop.f32.mrb[0].mxu0
      %v5406 = vadd.f32 %v5245, %v5405
      %v5407 = vpop.f32.mrb[0].mxu0
      %5408 = vmatprep.mubr.bf16.mxu0 0
      %5409 = vmatmul.mubr.bf16.gmra.mrb[0].mxu0 %v4081
      %v5410 = vpop.f32.mrb[0].mxu0
      %v5411 = vadd.f32 %v5250, %v5410
      %v5412 = vpop.f32.mrb[0].mxu0
      %v5413 = vpop.f32.mrb[0].mxu0
      %v5414 = vadd.f32 %v5253, %v5413
      %v5415 = vpop.f32.mrb[0].mxu0
      %5416 = vmatprep.mubr.bf16.mxu0 0
      %5417 = vmatmul.mubr.bf16.gmra.mrb[0].mxu0 %v4082
      %v5418 = vpop.f32.mrb[0].mxu0
      %v5419 = vadd.f32 %v5258, %v5418
      %v5420 = vpop.f32.mrb[0].mxu0
      %v5421 = vpop.f32.mrb[0].mxu0
      %v5422 = vadd.f32 %v5261, %v5421
      %v5423 = vpop.f32.mrb[0].mxu0
      %5424 = vmatprep.mubr.bf16.mxu0 0
      %5425 = vmatmul.mubr.bf16.gmra.mrb[0].mxu0 %v4083
      %v5426 = vpop.f32.mrb[0].mxu0
      %v5427 = vadd.f32 %v5266, %v5426
      %v5428 = vpop.f32.mrb[0].mxu0
      %v5429 = vpop.f32.mrb[0].mxu0
      %v5430 = vadd.f32 %v5269, %v5429
      %v5431 = vpop.f32.mrb[0].mxu0
      %5432 = vmatprep.mubr.bf16.mxu0 0
      %5433 = vmatmul.mubr.bf16.gmra.mrb[0].mxu0 %v4084
      %v5434 = vpop.f32.mrb[0].mxu0
      %v5435 = vadd.f32 %v5274, %v5434
      %v5436 = vpop.f32.mrb[0].mxu0
      %v5437 = vpop.f32.mrb[0].mxu0
      %v5438 = vadd.f32 %v5277, %v5437
      %v5439 = vpop.f32.mrb[0].mxu0
      %5440 = vmatprep.mubr.bf16.mxu0 0
      %5441 = vmatmul.mubr.bf16.gmra.mrb[0].mxu0 %v4085
      %v5442 = vpop.f32.mrb[0].mxu0
      %v5443 = vadd.f32 %v5282, %v5442
      %v5444 = vpop.f32.mrb[0].mxu0
      %v5445 = vpop.f32.mrb[0].mxu0
      %v5446 = vadd.f32 %v5285, %v5445
      %v5447 = vpop.f32.mrb[0].mxu0
      %5448 = vmatprep.mubr.bf16.mxu0 0
      %5449 = vmatmul.mubr.bf16.gmra.mrb[0].mxu0 %v4086
      %v5450 = vpop.f32.mrb[0].mxu0
      %v5451 = vadd.f32 %v5290, %v5450
      %v5452 = vpop.f32.mrb[0].mxu0
      %v5453 = vpop.f32.mrb[0].mxu0
      %v5454 = vadd.f32 %v5293, %v5453
      %v5455 = vpop.f32.mrb[0].mxu0
      %5456 = vmatprep.mubr.bf16.mxu0 0
      %5457 = vmatmul.mubr.bf16.gmra.mrb[0].mxu0 %v4087
      %v5458 = vpop.f32.mrb[0].mxu0
      %v5459 = vadd.f32 %v5298, %v5458
      %v5460 = vpop.f32.mrb[0].mxu0
      %v5461 = vpop.f32.mrb[0].mxu0
      %v5462 = vadd.f32 %v5301, %v5461
      %v5463 = vpop.f32.mrb[0].mxu0
      %5464 = vmatprep.mubr.bf16.mxu0 0
      %5465 = vmatmul.mubr.bf16.gmra.mrb[0].mxu0 %v4088
      %v5466 = vpop.f32.mrb[0].mxu0
      %v5467 = vadd.f32 %v5306, %v5466
      %v5468 = vpop.f32.mrb[0].mxu0
      %v5469 = vpop.f32.mrb[0].mxu0
      %v5470 = vadd.f32 %v5309, %v5469
      %v5471 = vpop.f32.mrb[0].mxu0
      %5472 = vmatprep.mubr.bf16.mxu0 0
      %5473 = vmatmul.mubr.bf16.gmra.mrb[0].mxu0 %v4089
      %v5474 = vpop.f32.mrb[0].mxu0
      %v5475 = vadd.f32 %v5314, %v5474
      %v5476 = vpop.f32.mrb[0].mxu0
      %v5477 = vpop.f32.mrb[0].mxu0
      %v5478 = vadd.f32 %v5317, %v5477
      %v5479 = vpop.f32.mrb[0].mxu0
      %5480 = vmatprep.mubr.bf16.mxu0 0
      %5481 = vmatmul.mubr.bf16.gmra.mrb[0].mxu0 %v4090
      %v5482 = vpop.f32.mrb[0].mxu0
      %v5483 = vadd.f32 %v5322, %v5482
      %v5484 = vpop.f32.mrb[0].mxu0
      %v5485 = vpop.f32.mrb[0].mxu0
      %v5486 = vadd.f32 %v5325, %v5485
      %v5487 = vpop.f32.mrb[0].mxu0
      %5488 = vmatprep.mubr.bf16.mxu0 0
      %5489 = vmatmul.mubr.bf16.gmra.mrb[0].mxu0 %v4091
      %v5490 = vpop.f32.mrb[0].mxu0
      %v5491 = vadd.f32 %v5330, %v5490
      %v5492 = vpop.f32.mrb[0].mxu0
      %v5493 = vpop.f32.mrb[0].mxu0
      %v5494 = vadd.f32 %v5333, %v5493
      %v5495 = vpop.f32.mrb[0].mxu0
      %5496 = vmatprep.mubr.bf16.mxu0 0
      %5497 = vmatmul.mubr.bf16.gmra.mrb[0].mxu0 %v4118
      %v5498 = vpop.f32.mrb[0].mxu0
      %v5499 = vadd.f32 %v5338, %v5498
      %v5500 = vpop.f32.mrb[0].mxu0
      %v5501 = vpop.f32.mrb[0].mxu0
      %v5502 = vadd.f32 %v5341, %v5501
      %v5503 = vpop.f32.mrb[0].mxu0
      %5504 = vmatprep.mubr.bf16.mxu0 0
      %5505 = vmatmul.mubr.bf16.gmra.mrb[0].mxu0 %v4130
      %v5506 = vpop.f32.mrb[0].mxu0
      %v5507 = vadd.f32 %v5346, %v5506
      %v5508 = vpop.f32.mrb[0].mxu0
      %v5509 = vpop.f32.mrb[0].mxu0
      %v5510 = vadd.f32 %v5349, %v5509
      %v5511 = vpop.f32.mrb[0].mxu0
      %5512 = vdwg.mxu0
      %v5513 = vld [vmem:[%s5] sm:$0x1]
      %v5515 = vlaneseq
      %v5516 = vshrl.u32 %v5515, 7
      %v5517 = vsub.s32 0, %v5516
      %v5518 = vrot.slane %v5513, %v5517
      %v5520 = vmul.f32 %v5387, %v5518
      %v5521 = vmul.f32 %v5390, %v5518
      %v5522 = vmul.f32 %v5395, %v5518
      %v5523 = vmul.f32 %v5398, %v5518
      %v5524 = vmul.f32 %v5403, %v5518
      %v5525 = vmul.f32 %v5406, %v5518
      %v5526 = vmul.f32 %v5411, %v5518
      %v5527 = vmul.f32 %v5414, %v5518
      %v5528 = vmul.f32 %v5419, %v5518
      %v5529 = vmul.f32 %v5422, %v5518
      %v5530 = vmul.f32 %v5427, %v5518
      %v5531 = vmul.f32 %v5430, %v5518
      %v5532 = vmul.f32 %v5435, %v5518
      %v5533 = vmul.f32 %v5438, %v5518
      %v5534 = vmul.f32 %v5443, %v5518
      %v5535 = vmul.f32 %v5446, %v5518
      %v5536 = vmul.f32 %v5451, %v5518
      %v5537 = vmul.f32 %v5454, %v5518
      %v5538 = vmul.f32 %v5459, %v5518
      %v5539 = vmul.f32 %v5462, %v5518
      %v5540 = vmul.f32 %v5467, %v5518
      %v5541 = vmul.f32 %v5470, %v5518
      %v5542 = vmul.f32 %v5475, %v5518
      %v5543 = vmul.f32 %v5478, %v5518
      %v5544 = vmul.f32 %v5483, %v5518
      %v5545 = vmul.f32 %v5486, %v5518
      %v5546 = vmul.f32 %v5491, %v5518
      %v5547 = vmul.f32 %v5494, %v5518
      %v5548 = vmul.f32 %v5499, %v5518
      %v5549 = vmul.f32 %v5502, %v5518
      %v5550 = vmul.f32 %v5507, %v5518
      %v5551 = vmul.f32 %v5510, %v5518
      %v5552 = vld [vmem:[%s6] sm:$0x1]
      %v5554 = vlaneseq
      %v5555 = vshrl.u32 %v5554, 7
      %v5556 = vsub.s32 0, %v5555
      %v5557 = vrot.slane %v5552, %v5556
      %v5559 = vadd.f32 %v5520, %v5557
      %v5560 = vadd.f32 %v5521, %v5557
      %v5561 = vadd.f32 %v5522, %v5557
      %v5562 = vadd.f32 %v5523, %v5557
      %v5563 = vadd.f32 %v5524, %v5557
      %v5564 = vadd.f32 %v5525, %v5557
      %v5565 = vadd.f32 %v5526, %v5557
      %v5566 = vadd.f32 %v5527, %v5557
      %v5567 = vadd.f32 %v5528, %v5557
      %v5568 = vadd.f32 %v5529, %v5557
      %v5569 = vadd.f32 %v5530, %v5557
      %v5570 = vadd.f32 %v5531, %v5557
      %v5571 = vadd.f32 %v5532, %v5557
      %v5572 = vadd.f32 %v5533, %v5557
      %v5573 = vadd.f32 %v5534, %v5557
      %v5574 = vadd.f32 %v5535, %v5557
      %v5575 = vadd.f32 %v5536, %v5557
      %v5576 = vadd.f32 %v5537, %v5557
      %v5577 = vadd.f32 %v5538, %v5557
      %v5578 = vadd.f32 %v5539, %v5557
      %v5579 = vadd.f32 %v5540, %v5557
      %v5580 = vadd.f32 %v5541, %v5557
      %v5581 = vadd.f32 %v5542, %v5557
      %v5582 = vadd.f32 %v5543, %v5557
      %v5583 = vadd.f32 %v5544, %v5557
      %v5584 = vadd.f32 %v5545, %v5557
      %v5585 = vadd.f32 %v5546, %v5557
      %v5586 = vadd.f32 %v5547, %v5557
      %v5587 = vadd.f32 %v5548, %v5557
      %v5588 = vadd.f32 %v5549, %v5557
      %v5589 = vadd.f32 %v5550, %v5557
      %v5590 = vadd.f32 %v5551, %v5557
      %v5591 = vmax.f32 %v5559, 0.0
      %v5592 = vmax.f32 %v5560, 0.0
      %v5593 = vmax.f32 %v5561, 0.0
      %v5594 = vmax.f32 %v5562, 0.0
      %v5595 = vmax.f32 %v5563, 0.0
      %v5596 = vmax.f32 %v5564, 0.0
      %v5597 = vmax.f32 %v5565, 0.0
      %v5598 = vmax.f32 %v5566, 0.0
      %v5599 = vmax.f32 %v5567, 0.0
      %v5600 = vmax.f32 %v5568, 0.0
      %v5601 = vmax.f32 %v5569, 0.0
      %v5602 = vmax.f32 %v5570, 0.0
      %v5603 = vmax.f32 %v5571, 0.0
      %v5604 = vmax.f32 %v5572, 0.0
      %v5605 = vmax.f32 %v5573, 0.0
      %v5606 = vmax.f32 %v5574, 0.0
      %v5607 = vmax.f32 %v5575, 0.0
      %v5608 = vmax.f32 %v5576, 0.0
      %v5609 = vmax.f32 %v5577, 0.0
      %v5610 = vmax.f32 %v5578, 0.0
      %v5611 = vmax.f32 %v5579, 0.0
      %v5612 = vmax.f32 %v5580, 0.0
      %v5613 = vmax.f32 %v5581, 0.0
      %v5614 = vmax.f32 %v5582, 0.0
      %v5615 = vmax.f32 %v5583, 0.0
      %v5616 = vmax.f32 %v5584, 0.0
      %v5617 = vmax.f32 %v5585, 0.0
      %v5618 = vmax.f32 %v5586, 0.0
      %v5619 = vmax.f32 %v5587, 0.0
      %v5620 = vmax.f32 %v5588, 0.0
      %v5621 = vmax.f32 %v5589, 0.0
      %v5622 = vmax.f32 %v5590, 0.0
      %5623 = vst [vmem:[%s278] sm:$0xff] %v5591
      %5624 = vst [vmem:[%s278 + $0x8] sm:$0xff] %v5592
      %5625 = vst [vmem:[%s278 + $0x10] sm:$0xff] %v5593
      %5626 = vst [vmem:[%s278 + $0x18] sm:$0xff] %v5594
      %5627 = vst [vmem:[%s278 + $0x20] sm:$0xff] %v5595
      %5628 = vst [vmem:[%s278 + $0x28] sm:$0xff] %v5596
      %5629 = vst [vmem:[%s278 + $0x30] sm:$0xff] %v5597
      %5630 = vst [vmem:[%s278 + $0x38] sm:$0xff] %v5598
      %5631 = vst [vmem:[%s278 + $0x40] sm:$0xff] %v5599
      %5632 = vst [vmem:[%s278 + $0x48] sm:$0xff] %v5600
      %5633 = vst [vmem:[%s278 + $0x50] sm:$0xff] %v5601
      %5634 = vst [vmem:[%s278 + $0x58] sm:$0xff] %v5602
      %5635 = vst [vmem:[%s278 + $0x60] sm:$0xff] %v5603
      %5636 = vst [vmem:[%s278 + $0x68] sm:$0xff] %v5604
      %5637 = vst [vmem:[%s278 + $0x70] sm:$0xff] %v5605
      %5638 = vst [vmem:[%s278 + $0x78] sm:$0xff] %v5606
      %5639 = vst [vmem:[%s278 + $0x80] sm:$0xff] %v5607
      %5640 = vst [vmem:[%s278 + $0x88] sm:$0xff] %v5608
      %5641 = vst [vmem:[%s278 + $0x90] sm:$0xff] %v5609
      %5642 = vst [vmem:[%s278 + $0x98] sm:$0xff] %v5610
      %5643 = vst [vmem:[%s278 + $0xa0] sm:$0xff] %v5611
      %5644 = vst [vmem:[%s278 + $0xa8] sm:$0xff] %v5612
      %5645 = vst [vmem:[%s278 + $0xb0] sm:$0xff] %v5613
      %5646 = vst [vmem:[%s278 + $0xb8] sm:$0xff] %v5614
      %5647 = vst [vmem:[%s278 + $0xc0] sm:$0xff] %v5615
      %5648 = vst [vmem:[%s278 + $0xc8] sm:$0xff] %v5616
      %5649 = vst [vmem:[%s278 + $0xd0] sm:$0xff] %v5617
      %5650 = vst [vmem:[%s278 + $0xd8] sm:$0xff] %v5618
      %5651 = vst [vmem:[%s278 + $0xe0] sm:$0xff] %v5619
      %5652 = vst [vmem:[%s278 + $0xe8] sm:$0xff] %v5620
      %5653 = vst [vmem:[%s278 + $0xf0] sm:$0xff] %v5621
      %5654 = vst [vmem:[%s278 + $0xf8] sm:$0xff] %v5622
      %p5655 = scmp.lt.s32.totalorder %s18, 1
      %s5656 = scalar_select %p5655, %s18, 1
      %s5657 = smul.addr %s5656, 32
      %s5658 = smul.addr %s5657, 8
      %s5659 = scalar_lea.vmem %s7, %s5658
      // Predicated region
      $region49: #{up_forward.1} parent=47 // pred_check
        %p5660 = pneg %p188
      $region50: #{up_forward.1} parent=47 // pred_check_branch
        %5662 = sbr.rel (%p5660) target = $region52
      $region51: #{up_forward.1} parent=47 // pred_region
        _
      $region52: #{up_forward.1} parent=47 // pred_fallthru
        _
    $region48: #{up_forward.1} parent=5 // pred_fallthru
      _
    %p5663 = scmp.le.s32.totalorder 2, %s13
    // Predicated region
    $region53: #{up_forward.1} parent=5 // pred_check
      %p5664 = pneg %p5663
    $region54: #{up_forward.1} parent=5 // pred_check_branch
      %5666 = sbr.rel (%p5664) target = $region56
    $region55: #{up_forward.1} parent=5 // pred_region
      %s5667 = ssub.s32 %s13, 2
      // Predicated region
      $region57: #{up_forward.1} parent=55 // pred_check
        %p5668 = pneg %p194
      $region58: #{up_forward.1} parent=55 // pred_check_branch
        %5670 = sbr.rel (%p5668) target = $region60
      $region59: #{up_forward.1} parent=55 // pred_region
        %p5671 = scmp.lt.s32.totalorder %s19, 1
        %s5672 = scalar_select %p5671, %s19, 1
        %s5673 = smul.addr %s5672, 32
        %s5674 = smul.addr %s5673, 8
        %s5675 = scalar_lea.vmem %s7, %s5674
      $region60: #{up_forward.1} parent=55 // pred_fallthru
        _
    $region56: #{up_forward.1} parent=5 // pred_fallthru
      _
  $region6: #{up_forward.1} parent=0 // loop_footer
    %s17 = sadd.s32 1, %s13
  $region7: #{up_forward.1} parent=0 // loop_footer_branch
    %12 = sbr.rel target = $region3
  $region8: #{up_forward.1} parent=0 // loop_exit
    _

</llo_original>
